<compile_context>
chip_gen: v7x
topology: tpu7x:2x2x1
jax: 0.10.0
libtpu: 0.0.40
codegen_flags: <defaults>
</compile_context>

<pallas_src>
import jax
import jax.numpy as jnp
from jax.experimental import pallas as pl
from jax.experimental.pallas import tpu as pltpu


# ------------------------------ fused kernel --------------------------------

def _generator_fused_kernel(x_ref, w1_ref, b1_ref, w2_ref, b2_ref,
                            w3_ref, b3_ref, w4_ref, b4_ref, w5_ref, b5_ref,
                            o_ref, a1_ref, a2_ref, a3_ref):
    bt = x_ref.shape[0]                      # batch tile (static)

    def mm_bias_relu(x, w_ref, bias_ref):
        acc = jnp.dot(x.astype(jnp.bfloat16), w_ref[...],
                      preferred_element_type=jnp.float32)
        return jnp.maximum(acc + bias_ref[...], 0.0)

    # fc1: (Bt, 512) @ (512, 512) + b -> ReLU
    h0 = mm_bias_relu(x_ref[...], w1_ref, b1_ref)                  # (Bt, 512)

    # deconv1 (k=2): (Bt,512) @ (512, 4*256); scatter p1 blocks -> a1 rows (p1, b)
    y1 = mm_bias_relu(h0, w2_ref, b2_ref)                          # (Bt, 1024)
    for p in range(4):
        a1_ref[p * bt:(p + 1) * bt, :] = y1[:, p * 256:(p + 1) * 256]

    # deconv2 (k=2): (4Bt,256) @ (256, 4*128); scatter -> a2 rows (p2, p1, b)
    y2 = mm_bias_relu(a1_ref[...], w3_ref, b3_ref)                 # (4Bt, 512)
    for p in range(4):
        a2_ref[p * 4 * bt:(p + 1) * 4 * bt, :] = y2[:, p * 128:(p + 1) * 128]

    # deconv3 (k=4, Cout padded 64->128): (16Bt,128) @ (128, 16*128)
    # scatter -> a3 rows (p3, p2, p1, b), stored bf16.
    y3 = mm_bias_relu(a2_ref[...], w4_ref, b4_ref)                 # (16Bt, 2048)
    for p in range(16):
        a3_ref[p * 16 * bt:(p + 1) * 16 * bt, :] = (
            y3[:, p * 128:(p + 1) * 128].astype(jnp.bfloat16))

    # deconv4 (k=4, K padded 64->128, N padded 48->128): (256Bt,128) @ (128,128)
    o_ref[...] = mm_bias_relu(a3_ref[...], w5_ref, b5_ref).astype(o_ref.dtype)


# ------------------------------ wrapper --------------------------------------

def _pick_batch_tile(batch, max_tile=32):
    """Batch tile: whole batch for small B, else a multiple of 16 dividing B."""
    if batch <= max_tile:
        return batch
    for bt in range(max_tile, 15, -16):
        if batch % bt == 0:
            return bt
    return batch  # fall back to a single big step


def generator_forward(packed, x, batch_tile=None):
    """x: (B, 512) latent -> (B, 3, 64, 64)."""
    B = x.shape[0]
    bt = batch_tile if batch_tile is not None else _pick_batch_tile(B)
    assert B % bt == 0, (B, bt)
    nsteps = B // bt

    out_slab = pl.pallas_call(
        _generator_fused_kernel,
        out_shape=jax.ShapeDtypeStruct((B * 256, 128), jnp.bfloat16),
        grid=(nsteps,),
        in_specs=[
            pl.BlockSpec((bt, 512), lambda i: (i, 0)),     # x (batch tile)
            pl.BlockSpec((512, 512), lambda i: (0, 0)),    # fc1  W
            pl.BlockSpec((1, 512), lambda i: (0, 0)),      # fc1  b
            pl.BlockSpec((512, 1024), lambda i: (0, 0)),   # d1   W
            pl.BlockSpec((1, 1024), lambda i: (0, 0)),     # d1   b
            pl.BlockSpec((256, 512), lambda i: (0, 0)),    # d2   W
            pl.BlockSpec((1, 512), lambda i: (0, 0)),      # d2   b
            pl.BlockSpec((128, 2048), lambda i: (0, 0)),   # d3   W (Cout pad->128)
            pl.BlockSpec((1, 2048), lambda i: (0, 0)),     # d3   b
            pl.BlockSpec((128, 128), lambda i: (0, 0)),    # d4   W (K,N pad->128)
            pl.BlockSpec((1, 128), lambda i: (0, 0)),      # d4   b
        ],
        out_specs=pl.BlockSpec((bt * 256, 128), lambda i: (i, 0)),
        scratch_shapes=[
            pltpu.VMEM((bt * 4, 256), jnp.float32),      # a1: rows (p1, b)
            pltpu.VMEM((bt * 16, 128), jnp.float32),     # a2: rows (p2, p1, b)
            pltpu.VMEM((bt * 256, 128), jnp.bfloat16),   # a3: rows (p3, p2, p1, b)
        ],
        compiler_params=pltpu.CompilerParams(
            dimension_semantics=("parallel",)),
    )(x.astype(jnp.bfloat16),
      packed["w1"], packed["b1"], packed["w2"], packed["b2"],
      packed["w3"], packed["b3"], packed["w4"], packed["b4"],
      packed["w5"], packed["b5"])

    # Unscramble: global row = (step, i3, j3, i2, j2, i1, j1, b_in_tile),
    # columns (first 48) = (i4, j4, c);  h = i1*32+i2*16+i3*4+i4, same for w.
    y = out_slab[:, :48].astype(jnp.float32)
    y = y.reshape(nsteps, 4, 4, 2, 2, 2, 2, bt, 4, 4, 3)
    #                i  i3 j3 i2 j2 i1 j1  b i4 j4  c
    y = jnp.transpose(y, (0, 7, 10, 5, 3, 1, 8, 6, 4, 2, 9))
    return y.reshape(B, 3, 64, 64)


# -------------------- parameter packing (done once) --------------------------

def pack_params(params):
    bf = jnp.bfloat16
    f32 = jnp.float32

    def deconv_mat(w, bias, cout_pad=None, cin_pad=None, n_pad=None):
        cin, cout, k, _ = w.shape
        wt = jnp.transpose(w, (0, 2, 3, 1))            # (cin, i, j, cout)
        bv = bias
        if cout_pad is not None and cout_pad > cout:   # per-position channel pad
            wt = jnp.pad(wt, ((0, 0), (0, 0), (0, 0), (0, cout_pad - cout)))
            bv = jnp.pad(bias, (0, cout_pad - cout))
            cout = cout_pad
        wm = wt.reshape(cin, k * k * cout)             # cols ordered (i, j, co)
        bm = jnp.tile(bv, k * k)
        if cin_pad is not None and cin_pad > cin:      # pad contraction rows
            wm = jnp.pad(wm, ((0, cin_pad - cin), (0, 0)))
        if n_pad is not None and n_pad > wm.shape[1]:  # pad total output cols
            wm = jnp.pad(wm, ((0, 0), (0, n_pad - wm.shape[1])))
            bm = jnp.pad(bm, (0, n_pad - bm.shape[0]))
        return wm.astype(bf), bm.reshape(1, -1).astype(f32)

    packed = {
        "w1": params["fc1_w"].T.astype(bf),
        "b1": params["fc1_b"].reshape(1, -1).astype(f32),
    }
    packed["w2"], packed["b2"] = deconv_mat(params["d1_w"], params["d1_b"])
    packed["w3"], packed["b3"] = deconv_mat(params["d2_w"], params["d2_b"])
    packed["w4"], packed["b4"] = deconv_mat(params["d3_w"], params["d3_b"],
                                            cout_pad=128)
    packed["w5"], packed["b5"] = deconv_mat(params["d4_w"], params["d4_b"],
                                            cin_pad=128, n_pad=128)
    return packed


# ------------------------- deterministic params ------------------------------

def init_params(key):
    def uni(k, shape, fan_in):
        bound = 1.0 / (fan_in ** 0.5)
        return jax.random.uniform(k, shape, jnp.float32, -bound, bound)

    ks = jax.random.split(key, 10)
    p = {}
    # nn.Linear(512, 512): weight (out, in)
    p["fc1_w"] = uni(ks[0], (512, 512), 512)
    p["fc1_b"] = uni(ks[1], (512,), 512)
    # nn.ConvTranspose2d weight layout: (Cin, Cout, kH, kW)
    p["d1_w"] = uni(ks[2], (512, 256, 2, 2), 512 * 4)
    p["d1_b"] = uni(ks[3], (256,), 512 * 4)
    p["d2_w"] = uni(ks[4], (256, 128, 2, 2), 256 * 4)
    p["d2_b"] = uni(ks[5], (128,), 256 * 4)
    p["d3_w"] = uni(ks[6], (128, 64, 4, 4), 128 * 16)
    p["d3_b"] = uni(ks[7], (64,), 128 * 16)
    p["d4_w"] = uni(ks[8], (64, 3, 4, 4), 64 * 16)
    p["d4_b"] = uni(ks[9], (3,), 64 * 16)
    return p


# ------------------------------ reference ------------------------------------

def reference_forward(params, x):
    """Pure-jnp f32 reference with the same semantics as the PyTorch module."""
    h = jnp.maximum(x @ params["fc1_w"].T + params["fc1_b"], 0.0)
    h = h.reshape(x.shape[0], 512, 1, 1)
    for name, k in (("d1", 2), ("d2", 2), ("d3", 4), ("d4", 4)):
        w, b = params[name + "_w"], params[name + "_b"]
        y = jnp.einsum("bchw,cdij->bdhiwj", h, w)
        y = y + b[None, :, None, None, None, None]
        B, Cout, H, _, W, _ = y.shape
        y = y.reshape(B, Cout, H * k, W * k)
        h = jnp.maximum(y, 0.0)
    return h


# --------------------------------- main ---------------------------------------

if __name__ == "__main__":
    key = jax.random.PRNGKey(0)
    pkey, xkey = jax.random.split(key)
    params = init_params(pkey)
    packed = pack_params(params)

    B = 2
    x = jax.random.normal(xkey, (B, 512), dtype=jnp.float32)  # latent_dim = 512

    fwd = jax.jit(generator_forward)
    out = jax.block_until_ready(fwd(packed, x))

    assert out.shape == (B, 3, 64, 64), out.shape
    ref = reference_forward(params, x)
    max_err = float(jnp.max(jnp.abs(out - ref)))
    # bf16 MXU operands + bf16 activation/output storage, f32 accumulation.
    assert jnp.allclose(out, ref, atol=1e-2, rtol=1e-2), max_err

    print("KERNEL_OK")
</pallas_src>

<mosaic_0001>
module attributes {stable_mosaic.version = 11 : i64} {
  func.func @_generator_fused_kernel(%arg0: i32, %arg1: memref<2x512xbf16, #tpu.memory_space<vmem>>, %arg2: memref<512x512xbf16, #tpu.memory_space<vmem>>, %arg3: memref<1x512xf32, #tpu.memory_space<vmem>>, %arg4: memref<512x1024xbf16, #tpu.memory_space<vmem>>, %arg5: memref<1x1024xf32, #tpu.memory_space<vmem>>, %arg6: memref<256x512xbf16, #tpu.memory_space<vmem>>, %arg7: memref<1x512xf32, #tpu.memory_space<vmem>>, %arg8: memref<128x2048xbf16, #tpu.memory_space<vmem>>, %arg9: memref<1x2048xf32, #tpu.memory_space<vmem>>, %arg10: memref<128x128xbf16, #tpu.memory_space<vmem>>, %arg11: memref<1x128xf32, #tpu.memory_space<vmem>>, %arg12: memref<512x128xbf16, #tpu.memory_space<vmem>>, %arg13: memref<8x256xf32, #tpu.memory_space<vmem>>, %arg14: memref<32x128xf32, #tpu.memory_space<vmem>>, %arg15: memref<512x128xbf16, #tpu.memory_space<vmem>>) attributes {dimension_semantics = [#tpu.dimension_semantics<parallel>], iteration_bounds = array<i64: 1>, scalar_prefetch = 0 : i64, scratch_operands = 3 : i64, tpu.core_type = #tpu.core_type<tc>, window_params = [{transform_indices = @transform_0, window_bounds = array<i64: 2, 512>}, {pipeline_mode = #tpu.pipeline_mode<synchronous>, transform_indices = @transform_1, window_bounds = array<i64: 512, 512>}, {pipeline_mode = #tpu.pipeline_mode<synchronous>, transform_indices = @transform_2, window_bounds = array<i64: 1, 512>}, {pipeline_mode = #tpu.pipeline_mode<synchronous>, transform_indices = @transform_3, window_bounds = array<i64: 512, 1024>}, {pipeline_mode = #tpu.pipeline_mode<synchronous>, transform_indices = @transform_4, window_bounds = array<i64: 1, 1024>}, {pipeline_mode = #tpu.pipeline_mode<synchronous>, transform_indices = @transform_5, window_bounds = array<i64: 256, 512>}, {pipeline_mode = #tpu.pipeline_mode<synchronous>, transform_indices = @transform_6, window_bounds = array<i64: 1, 512>}, {pipeline_mode = #tpu.pipeline_mode<synchronous>, transform_indices = @transform_7, window_bounds = array<i64: 128, 2048>}, {pipeline_mode = #tpu.pipeline_mode<synchronous>, transform_indices = @transform_8, window_bounds = array<i64: 1, 2048>}, {pipeline_mode = #tpu.pipeline_mode<synchronous>, transform_indices = @transform_9, window_bounds = array<i64: 128, 128>}, {pipeline_mode = #tpu.pipeline_mode<synchronous>, transform_indices = @transform_10, window_bounds = array<i64: 1, 128>}, {transform_indices = @transform_11, window_bounds = array<i64: 512, 128>}]} {
    %c0 = arith.constant 0 : index
    %c0_0 = arith.constant 0 : index
    %0 = vector.load %arg1[%c0, %c0_0] : memref<2x512xbf16, #tpu.memory_space<vmem>>, vector<2x512xbf16>
    %c0_1 = arith.constant 0 : index
    %c0_2 = arith.constant 0 : index
    %1 = vector.load %arg2[%c0_1, %c0_2] : memref<512x512xbf16, #tpu.memory_space<vmem>>, vector<512x512xbf16>
    %cst = arith.constant dense<0.000000e+00> : vector<2x512xf32>
    %2 = tpu.matmul %0, %1, %cst {dimension_numbers = #tpu.dot_dimension_numbers<[1], [0], [0], [1], [0, 0, 1, 1], [], []>} : vector<2x512xbf16>, vector<512x512xbf16>, vector<2x512xf32> -> vector<2x512xf32>
    %c0_3 = arith.constant 0 : index
    %c0_4 = arith.constant 0 : index
    %3 = vector.load %arg3[%c0_3, %c0_4] : memref<1x512xf32, #tpu.memory_space<vmem>>, vector<1x512xf32>
    %4 = vector.broadcast %3 : vector<1x512xf32> to vector<2x512xf32>
    %5 = arith.addf %2, %4 : vector<2x512xf32>
    %cst_5 = arith.constant 0.000000e+00 : f32
    %6 = vector.broadcast %cst_5 : f32 to vector<2x512xf32>
    %7 = arith.maximumf %5, %6 : vector<2x512xf32>
    %8 = arith.truncf %7 : vector<2x512xf32> to vector<2x512xbf16>
    %c0_6 = arith.constant 0 : index
    %c0_7 = arith.constant 0 : index
    %9 = vector.load %arg4[%c0_6, %c0_7] : memref<512x1024xbf16, #tpu.memory_space<vmem>>, vector<512x1024xbf16>
    %cst_8 = arith.constant dense<0.000000e+00> : vector<2x1024xf32>
    %10 = tpu.matmul %8, %9, %cst_8 {dimension_numbers = #tpu.dot_dimension_numbers<[1], [0], [0], [1], [0, 0, 1, 1], [], []>} : vector<2x512xbf16>, vector<512x1024xbf16>, vector<2x1024xf32> -> vector<2x1024xf32>
    %c0_9 = arith.constant 0 : index
    %c0_10 = arith.constant 0 : index
    %11 = vector.load %arg5[%c0_9, %c0_10] : memref<1x1024xf32, #tpu.memory_space<vmem>>, vector<1x1024xf32>
    %12 = vector.broadcast %11 : vector<1x1024xf32> to vector<2x1024xf32>
    %13 = arith.addf %10, %12 : vector<2x1024xf32>
    %cst_11 = arith.constant 0.000000e+00 : f32
    %14 = vector.broadcast %cst_11 : f32 to vector<2x1024xf32>
    %15 = arith.maximumf %13, %14 : vector<2x1024xf32>
    %16 = vector.extract_strided_slice %15 {offsets = [0, 0], sizes = [2, 256], strides = [1, 1]} : vector<2x1024xf32> to vector<2x256xf32>
    %c0_12 = arith.constant 0 : index
    %c0_13 = arith.constant 0 : index
    %17 = vector.load %arg13[%c0_12, %c0_13] : memref<8x256xf32, #tpu.memory_space<vmem>>, vector<2x256xf32>
    tpu.vector_store %arg13[%c0_12, %c0_13], %16 {strides = array<i32>} : memref<8x256xf32, #tpu.memory_space<vmem>>, vector<2x256xf32>,
    %18 = vector.extract_strided_slice %15 {offsets = [0, 256], sizes = [2, 256], strides = [1, 1]} : vector<2x1024xf32> to vector<2x256xf32>
    %c2 = arith.constant 2 : index
    %c0_14 = arith.constant 0 : index
    %19 = vector.load %arg13[%c2, %c0_14] : memref<8x256xf32, #tpu.memory_space<vmem>>, vector<2x256xf32>
    tpu.vector_store %arg13[%c2, %c0_14], %18 {strides = array<i32>} : memref<8x256xf32, #tpu.memory_space<vmem>>, vector<2x256xf32>,
    %20 = vector.extract_strided_slice %15 {offsets = [0, 512], sizes = [2, 256], strides = [1, 1]} : vector<2x1024xf32> to vector<2x256xf32>
    %c4 = arith.constant 4 : index
    %c0_15 = arith.constant 0 : index
    %21 = vector.load %arg13[%c4, %c0_15] : memref<8x256xf32, #tpu.memory_space<vmem>>, vector<2x256xf32>
    tpu.vector_store %arg13[%c4, %c0_15], %20 {strides = array<i32>} : memref<8x256xf32, #tpu.memory_space<vmem>>, vector<2x256xf32>,
    %22 = vector.extract_strided_slice %15 {offsets = [0, 768], sizes = [2, 256], strides = [1, 1]} : vector<2x1024xf32> to vector<2x256xf32>
    %c6 = arith.constant 6 : index
    %c0_16 = arith.constant 0 : index
    %23 = vector.load %arg13[%c6, %c0_16] : memref<8x256xf32, #tpu.memory_space<vmem>>, vector<2x256xf32>
    tpu.vector_store %arg13[%c6, %c0_16], %22 {strides = array<i32>} : memref<8x256xf32, #tpu.memory_space<vmem>>, vector<2x256xf32>,
    %c0_17 = arith.constant 0 : index
    %c0_18 = arith.constant 0 : index
    %24 = vector.load %arg13[%c0_17, %c0_18] : memref<8x256xf32, #tpu.memory_space<vmem>>, vector<8x256xf32>
    %25 = arith.truncf %24 : vector<8x256xf32> to vector<8x256xbf16>
    %c0_19 = arith.constant 0 : index
    %c0_20 = arith.constant 0 : index
    %26 = vector.load %arg6[%c0_19, %c0_20] : memref<256x512xbf16, #tpu.memory_space<vmem>>, vector<256x512xbf16>
    %cst_21 = arith.constant dense<0.000000e+00> : vector<8x512xf32>
    %27 = tpu.matmul %25, %26, %cst_21 {dimension_numbers = #tpu.dot_dimension_numbers<[1], [0], [0], [1], [0, 0, 1, 1], [], []>} : vector<8x256xbf16>, vector<256x512xbf16>, vector<8x512xf32> -> vector<8x512xf32>
    %c0_22 = arith.constant 0 : index
    %c0_23 = arith.constant 0 : index
    %28 = vector.load %arg7[%c0_22, %c0_23] : memref<1x512xf32, #tpu.memory_space<vmem>>, vector<1x512xf32>
    %29 = vector.broadcast %28 : vector<1x512xf32> to vector<8x512xf32>
    %30 = arith.addf %27, %29 : vector<8x512xf32>
    %cst_24 = arith.constant 0.000000e+00 : f32
    %31 = vector.broadcast %cst_24 : f32 to vector<8x512xf32>
    %32 = arith.maximumf %30, %31 : vector<8x512xf32>
    %33 = vector.extract_strided_slice %32 {offsets = [0, 0], sizes = [8, 128], strides = [1, 1]} : vector<8x512xf32> to vector<8x128xf32>
    %c0_25 = arith.constant 0 : index
    %c0_26 = arith.constant 0 : index
    %34 = vector.load %arg14[%c0_25, %c0_26] : memref<32x128xf32, #tpu.memory_space<vmem>>, vector<8x128xf32>
    tpu.vector_store %arg14[%c0_25, %c0_26], %33 {strides = array<i32>} : memref<32x128xf32, #tpu.memory_space<vmem>>, vector<8x128xf32>,
    %35 = vector.extract_strided_slice %32 {offsets = [0, 128], sizes = [8, 128], strides = [1, 1]} : vector<8x512xf32> to vector<8x128xf32>
    %c8 = arith.constant 8 : index
    %c0_27 = arith.constant 0 : index
    %36 = vector.load %arg14[%c8, %c0_27] : memref<32x128xf32, #tpu.memory_space<vmem>>, vector<8x128xf32>
    tpu.vector_store %arg14[%c8, %c0_27], %35 {strides = array<i32>} : memref<32x128xf32, #tpu.memory_space<vmem>>, vector<8x128xf32>,
    %37 = vector.extract_strided_slice %32 {offsets = [0, 256], sizes = [8, 128], strides = [1, 1]} : vector<8x512xf32> to vector<8x128xf32>
    %c16 = arith.constant 16 : index
    %c0_28 = arith.constant 0 : index
    %38 = vector.load %arg14[%c16, %c0_28] : memref<32x128xf32, #tpu.memory_space<vmem>>, vector<8x128xf32>
    tpu.vector_store %arg14[%c16, %c0_28], %37 {strides = array<i32>} : memref<32x128xf32, #tpu.memory_space<vmem>>, vector<8x128xf32>,
    %39 = vector.extract_strided_slice %32 {offsets = [0, 384], sizes = [8, 128], strides = [1, 1]} : vector<8x512xf32> to vector<8x128xf32>
    %c24 = arith.constant 24 : index
    %c0_29 = arith.constant 0 : index
    %40 = vector.load %arg14[%c24, %c0_29] : memref<32x128xf32, #tpu.memory_space<vmem>>, vector<8x128xf32>
    tpu.vector_store %arg14[%c24, %c0_29], %39 {strides = array<i32>} : memref<32x128xf32, #tpu.memory_space<vmem>>, vector<8x128xf32>,
    %c0_30 = arith.constant 0 : index
    %c0_31 = arith.constant 0 : index
    %41 = vector.load %arg14[%c0_30, %c0_31] : memref<32x128xf32, #tpu.memory_space<vmem>>, vector<32x128xf32>
    %42 = arith.truncf %41 : vector<32x128xf32> to vector<32x128xbf16>
    %c0_32 = arith.constant 0 : index
    %c0_33 = arith.constant 0 : index
    %43 = vector.load %arg8[%c0_32, %c0_33] : memref<128x2048xbf16, #tpu.memory_space<vmem>>, vector<128x2048xbf16>
    %cst_34 = arith.constant dense<0.000000e+00> : vector<32x2048xf32>
    %44 = tpu.matmul %42, %43, %cst_34 {dimension_numbers = #tpu.dot_dimension_numbers<[1], [0], [0], [1], [0, 0, 1, 1], [], []>} : vector<32x128xbf16>, vector<128x2048xbf16>, vector<32x2048xf32> -> vector<32x2048xf32>
    %c0_35 = arith.constant 0 : index
    %c0_36 = arith.constant 0 : index
    %45 = vector.load %arg9[%c0_35, %c0_36] : memref<1x2048xf32, #tpu.memory_space<vmem>>, vector<1x2048xf32>
    %46 = vector.broadcast %45 : vector<1x2048xf32> to vector<32x2048xf32>
    %47 = arith.addf %44, %46 : vector<32x2048xf32>
    %cst_37 = arith.constant 0.000000e+00 : f32
    %48 = vector.broadcast %cst_37 : f32 to vector<32x2048xf32>
    %49 = arith.maximumf %47, %48 : vector<32x2048xf32>
    %50 = vector.extract_strided_slice %49 {offsets = [0, 0], sizes = [32, 128], strides = [1, 1]} : vector<32x2048xf32> to vector<32x128xf32>
    %51 = arith.truncf %50 : vector<32x128xf32> to vector<32x128xbf16>
    %c0_38 = arith.constant 0 : index
    %c0_39 = arith.constant 0 : index
    %52 = vector.load %arg15[%c0_38, %c0_39] : memref<512x128xbf16, #tpu.memory_space<vmem>>, vector<32x128xbf16>
    tpu.vector_store %arg15[%c0_38, %c0_39], %51 {strides = array<i32>} : memref<512x128xbf16, #tpu.memory_space<vmem>>, vector<32x128xbf16>,
    %53 = vector.extract_strided_slice %49 {offsets = [0, 128], sizes = [32, 128], strides = [1, 1]} : vector<32x2048xf32> to vector<32x128xf32>
    %54 = arith.truncf %53 : vector<32x128xf32> to vector<32x128xbf16>
    %c32 = arith.constant 32 : index
    %c0_40 = arith.constant 0 : index
    %55 = vector.load %arg15[%c32, %c0_40] : memref<512x128xbf16, #tpu.memory_space<vmem>>, vector<32x128xbf16>
    tpu.vector_store %arg15[%c32, %c0_40], %54 {strides = array<i32>} : memref<512x128xbf16, #tpu.memory_space<vmem>>, vector<32x128xbf16>,
    %56 = vector.extract_strided_slice %49 {offsets = [0, 256], sizes = [32, 128], strides = [1, 1]} : vector<32x2048xf32> to vector<32x128xf32>
    %57 = arith.truncf %56 : vector<32x128xf32> to vector<32x128xbf16>
    %c64 = arith.constant 64 : index
    %c0_41 = arith.constant 0 : index
    %58 = vector.load %arg15[%c64, %c0_41] : memref<512x128xbf16, #tpu.memory_space<vmem>>, vector<32x128xbf16>
    tpu.vector_store %arg15[%c64, %c0_41], %57 {strides = array<i32>} : memref<512x128xbf16, #tpu.memory_space<vmem>>, vector<32x128xbf16>,
    %59 = vector.extract_strided_slice %49 {offsets = [0, 384], sizes = [32, 128], strides = [1, 1]} : vector<32x2048xf32> to vector<32x128xf32>
    %60 = arith.truncf %59 : vector<32x128xf32> to vector<32x128xbf16>
    %c96 = arith.constant 96 : index
    %c0_42 = arith.constant 0 : index
    %61 = vector.load %arg15[%c96, %c0_42] : memref<512x128xbf16, #tpu.memory_space<vmem>>, vector<32x128xbf16>
    tpu.vector_store %arg15[%c96, %c0_42], %60 {strides = array<i32>} : memref<512x128xbf16, #tpu.memory_space<vmem>>, vector<32x128xbf16>,
    %62 = vector.extract_strided_slice %49 {offsets = [0, 512], sizes = [32, 128], strides = [1, 1]} : vector<32x2048xf32> to vector<32x128xf32>
    %63 = arith.truncf %62 : vector<32x128xf32> to vector<32x128xbf16>
    %c128 = arith.constant 128 : index
    %c0_43 = arith.constant 0 : index
    %64 = vector.load %arg15[%c128, %c0_43] : memref<512x128xbf16, #tpu.memory_space<vmem>>, vector<32x128xbf16>
    tpu.vector_store %arg15[%c128, %c0_43], %63 {strides = array<i32>} : memref<512x128xbf16, #tpu.memory_space<vmem>>, vector<32x128xbf16>,
    %65 = vector.extract_strided_slice %49 {offsets = [0, 640], sizes = [32, 128], strides = [1, 1]} : vector<32x2048xf32> to vector<32x128xf32>
    %66 = arith.truncf %65 : vector<32x128xf32> to vector<32x128xbf16>
    %c160 = arith.constant 160 : index
    %c0_44 = arith.constant 0 : index
    %67 = vector.load %arg15[%c160, %c0_44] : memref<512x128xbf16, #tpu.memory_space<vmem>>, vector<32x128xbf16>
    tpu.vector_store %arg15[%c160, %c0_44], %66 {strides = array<i32>} : memref<512x128xbf16, #tpu.memory_space<vmem>>, vector<32x128xbf16>,
    %68 = vector.extract_strided_slice %49 {offsets = [0, 768], sizes = [32, 128], strides = [1, 1]} : vector<32x2048xf32> to vector<32x128xf32>
    %69 = arith.truncf %68 : vector<32x128xf32> to vector<32x128xbf16>
    %c192 = arith.constant 192 : index
    %c0_45 = arith.constant 0 : index
    %70 = vector.load %arg15[%c192, %c0_45] : memref<512x128xbf16, #tpu.memory_space<vmem>>, vector<32x128xbf16>
    tpu.vector_store %arg15[%c192, %c0_45], %69 {strides = array<i32>} : memref<512x128xbf16, #tpu.memory_space<vmem>>, vector<32x128xbf16>,
    %71 = vector.extract_strided_slice %49 {offsets = [0, 896], sizes = [32, 128], strides = [1, 1]} : vector<32x2048xf32> to vector<32x128xf32>
    %72 = arith.truncf %71 : vector<32x128xf32> to vector<32x128xbf16>
    %c224 = arith.constant 224 : index
    %c0_46 = arith.constant 0 : index
    %73 = vector.load %arg15[%c224, %c0_46] : memref<512x128xbf16, #tpu.memory_space<vmem>>, vector<32x128xbf16>
    tpu.vector_store %arg15[%c224, %c0_46], %72 {strides = array<i32>} : memref<512x128xbf16, #tpu.memory_space<vmem>>, vector<32x128xbf16>,
    %74 = vector.extract_strided_slice %49 {offsets = [0, 1024], sizes = [32, 128], strides = [1, 1]} : vector<32x2048xf32> to vector<32x128xf32>
    %75 = arith.truncf %74 : vector<32x128xf32> to vector<32x128xbf16>
    %c256 = arith.constant 256 : index
    %c0_47 = arith.constant 0 : index
    %76 = vector.load %arg15[%c256, %c0_47] : memref<512x128xbf16, #tpu.memory_space<vmem>>, vector<32x128xbf16>
    tpu.vector_store %arg15[%c256, %c0_47], %75 {strides = array<i32>} : memref<512x128xbf16, #tpu.memory_space<vmem>>, vector<32x128xbf16>,
    %77 = vector.extract_strided_slice %49 {offsets = [0, 1152], sizes = [32, 128], strides = [1, 1]} : vector<32x2048xf32> to vector<32x128xf32>
    %78 = arith.truncf %77 : vector<32x128xf32> to vector<32x128xbf16>
    %c288 = arith.constant 288 : index
    %c0_48 = arith.constant 0 : index
    %79 = vector.load %arg15[%c288, %c0_48] : memref<512x128xbf16, #tpu.memory_space<vmem>>, vector<32x128xbf16>
    tpu.vector_store %arg15[%c288, %c0_48], %78 {strides = array<i32>} : memref<512x128xbf16, #tpu.memory_space<vmem>>, vector<32x128xbf16>,
    %80 = vector.extract_strided_slice %49 {offsets = [0, 1280], sizes = [32, 128], strides = [1, 1]} : vector<32x2048xf32> to vector<32x128xf32>
    %81 = arith.truncf %80 : vector<32x128xf32> to vector<32x128xbf16>
    %c320 = arith.constant 320 : index
    %c0_49 = arith.constant 0 : index
    %82 = vector.load %arg15[%c320, %c0_49] : memref<512x128xbf16, #tpu.memory_space<vmem>>, vector<32x128xbf16>
    tpu.vector_store %arg15[%c320, %c0_49], %81 {strides = array<i32>} : memref<512x128xbf16, #tpu.memory_space<vmem>>, vector<32x128xbf16>,
    %83 = vector.extract_strided_slice %49 {offsets = [0, 1408], sizes = [32, 128], strides = [1, 1]} : vector<32x2048xf32> to vector<32x128xf32>
    %84 = arith.truncf %83 : vector<32x128xf32> to vector<32x128xbf16>
    %c352 = arith.constant 352 : index
    %c0_50 = arith.constant 0 : index
    %85 = vector.load %arg15[%c352, %c0_50] : memref<512x128xbf16, #tpu.memory_space<vmem>>, vector<32x128xbf16>
    tpu.vector_store %arg15[%c352, %c0_50], %84 {strides = array<i32>} : memref<512x128xbf16, #tpu.memory_space<vmem>>, vector<32x128xbf16>,
    %86 = vector.extract_strided_slice %49 {offsets = [0, 1536], sizes = [32, 128], strides = [1, 1]} : vector<32x2048xf32> to vector<32x128xf32>
    %87 = arith.truncf %86 : vector<32x128xf32> to vector<32x128xbf16>
    %c384 = arith.constant 384 : index
    %c0_51 = arith.constant 0 : index
    %88 = vector.load %arg15[%c384, %c0_51] : memref<512x128xbf16, #tpu.memory_space<vmem>>, vector<32x128xbf16>
    tpu.vector_store %arg15[%c384, %c0_51], %87 {strides = array<i32>} : memref<512x128xbf16, #tpu.memory_space<vmem>>, vector<32x128xbf16>,
    %89 = vector.extract_strided_slice %49 {offsets = [0, 1664], sizes = [32, 128], strides = [1, 1]} : vector<32x2048xf32> to vector<32x128xf32>
    %90 = arith.truncf %89 : vector<32x128xf32> to vector<32x128xbf16>
    %c416 = arith.constant 416 : index
    %c0_52 = arith.constant 0 : index
    %91 = vector.load %arg15[%c416, %c0_52] : memref<512x128xbf16, #tpu.memory_space<vmem>>, vector<32x128xbf16>
    tpu.vector_store %arg15[%c416, %c0_52], %90 {strides = array<i32>} : memref<512x128xbf16, #tpu.memory_space<vmem>>, vector<32x128xbf16>,
    %92 = vector.extract_strided_slice %49 {offsets = [0, 1792], sizes = [32, 128], strides = [1, 1]} : vector<32x2048xf32> to vector<32x128xf32>
    %93 = arith.truncf %92 : vector<32x128xf32> to vector<32x128xbf16>
    %c448 = arith.constant 448 : index
    %c0_53 = arith.constant 0 : index
    %94 = vector.load %arg15[%c448, %c0_53] : memref<512x128xbf16, #tpu.memory_space<vmem>>, vector<32x128xbf16>
    tpu.vector_store %arg15[%c448, %c0_53], %93 {strides = array<i32>} : memref<512x128xbf16, #tpu.memory_space<vmem>>, vector<32x128xbf16>,
    %95 = vector.extract_strided_slice %49 {offsets = [0, 1920], sizes = [32, 128], strides = [1, 1]} : vector<32x2048xf32> to vector<32x128xf32>
    %96 = arith.truncf %95 : vector<32x128xf32> to vector<32x128xbf16>
    %c480 = arith.constant 480 : index
    %c0_54 = arith.constant 0 : index
    %97 = vector.load %arg15[%c480, %c0_54] : memref<512x128xbf16, #tpu.memory_space<vmem>>, vector<32x128xbf16>
    tpu.vector_store %arg15[%c480, %c0_54], %96 {strides = array<i32>} : memref<512x128xbf16, #tpu.memory_space<vmem>>, vector<32x128xbf16>,
    %c0_55 = arith.constant 0 : index
    %c0_56 = arith.constant 0 : index
    %98 = vector.load %arg15[%c0_55, %c0_56] : memref<512x128xbf16, #tpu.memory_space<vmem>>, vector<512x128xbf16>
    %c0_57 = arith.constant 0 : index
    %c0_58 = arith.constant 0 : index
    %99 = vector.load %arg10[%c0_57, %c0_58] : memref<128x128xbf16, #tpu.memory_space<vmem>>, vector<128x128xbf16>
    %cst_59 = arith.constant dense<0.000000e+00> : vector<512x128xf32>
    %100 = tpu.matmul %98, %99, %cst_59 {dimension_numbers = #tpu.dot_dimension_numbers<[1], [0], [0], [1], [0, 0, 1, 1], [], []>} : vector<512x128xbf16>, vector<128x128xbf16>, vector<512x128xf32> -> vector<512x128xf32>
    %c0_60 = arith.constant 0 : index
    %c0_61 = arith.constant 0 : index
    %101 = vector.load %arg11[%c0_60, %c0_61] : memref<1x128xf32, #tpu.memory_space<vmem>>, vector<1x128xf32>
    %102 = vector.broadcast %101 : vector<1x128xf32> to vector<512x128xf32>
    %103 = arith.addf %100, %102 : vector<512x128xf32>
    %cst_62 = arith.constant 0.000000e+00 : f32
    %104 = vector.broadcast %cst_62 : f32 to vector<512x128xf32>
    %105 = arith.maximumf %103, %104 : vector<512x128xf32>
    %106 = arith.truncf %105 : vector<512x128xf32> to vector<512x128xbf16>
    %c0_63 = arith.constant 0 : index
    %c0_64 = arith.constant 0 : index
    %107 = vector.load %arg12[%c0_63, %c0_64] : memref<512x128xbf16, #tpu.memory_space<vmem>>, vector<512x128xbf16>
    tpu.vector_store %arg12[%c0_63, %c0_64], %106 {strides = array<i32>} : memref<512x128xbf16, #tpu.memory_space<vmem>>, vector<512x128xbf16>,
    return
  }
  func.func @transform_0(%arg0: i32) -> (i32, i32) {
    %c0_i32 = arith.constant 0 : i32
    %c0_i32_0 = arith.constant 0 : i32
    return %arg0, %c0_i32 : i32, i32
  }
  func.func @transform_1(%arg0: i32) -> (i32, i32) {
    %c0_i32 = arith.constant 0 : i32
    %c0_i32_0 = arith.constant 0 : i32
    %c0_i32_1 = arith.constant 0 : i32
    return %c0_i32, %c0_i32_0 : i32, i32
  }
  func.func @transform_2(%arg0: i32) -> (i32, i32) {
    %c0_i32 = arith.constant 0 : i32
    %c0_i32_0 = arith.constant 0 : i32
    %c0_i32_1 = arith.constant 0 : i32
    return %c0_i32, %c0_i32_0 : i32, i32
  }
  func.func @transform_3(%arg0: i32) -> (i32, i32) {
    %c0_i32 = arith.constant 0 : i32
    %c0_i32_0 = arith.constant 0 : i32
    %c0_i32_1 = arith.constant 0 : i32
    return %c0_i32, %c0_i32_0 : i32, i32
  }
  func.func @transform_4(%arg0: i32) -> (i32, i32) {
    %c0_i32 = arith.constant 0 : i32
    %c0_i32_0 = arith.constant 0 : i32
    %c0_i32_1 = arith.constant 0 : i32
    return %c0_i32, %c0_i32_0 : i32, i32
  }
  func.func @transform_5(%arg0: i32) -> (i32, i32) {
    %c0_i32 = arith.constant 0 : i32
    %c0_i32_0 = arith.constant 0 : i32
    %c0_i32_1 = arith.constant 0 : i32
    return %c0_i32, %c0_i32_0 : i32, i32
  }
  func.func @transform_6(%arg0: i32) -> (i32, i32) {
    %c0_i32 = arith.constant 0 : i32
    %c0_i32_0 = arith.constant 0 : i32
    %c0_i32_1 = arith.constant 0 : i32
    return %c0_i32, %c0_i32_0 : i32, i32
  }
  func.func @transform_7(%arg0: i32) -> (i32, i32) {
    %c0_i32 = arith.constant 0 : i32
    %c0_i32_0 = arith.constant 0 : i32
    %c0_i32_1 = arith.constant 0 : i32
    return %c0_i32, %c0_i32_0 : i32, i32
  }
  func.func @transform_8(%arg0: i32) -> (i32, i32) {
    %c0_i32 = arith.constant 0 : i32
    %c0_i32_0 = arith.constant 0 : i32
    %c0_i32_1 = arith.constant 0 : i32
    return %c0_i32, %c0_i32_0 : i32, i32
  }
  func.func @transform_9(%arg0: i32) -> (i32, i32) {
    %c0_i32 = arith.constant 0 : i32
    %c0_i32_0 = arith.constant 0 : i32
    %c0_i32_1 = arith.constant 0 : i32
    return %c0_i32, %c0_i32_0 : i32, i32
  }
  func.func @transform_10(%arg0: i32) -> (i32, i32) {
    %c0_i32 = arith.constant 0 : i32
    %c0_i32_0 = arith.constant 0 : i32
    %c0_i32_1 = arith.constant 0 : i32
    return %c0_i32, %c0_i32_0 : i32, i32
  }
  func.func @transform_11(%arg0: i32) -> (i32, i32) {
    %c0_i32 = arith.constant 0 : i32
    %c0_i32_0 = arith.constant 0 : i32
    return %arg0, %c0_i32 : i32, i32
  }
}

</mosaic_0001>

<llo_original>
// kernel: generator_forward.1
$region0: #{generator_forward.1}
  #allocation0 [shape = 'u32[]', space=smem, size = 0x4, offset = 0x4, fixed_abs, tag = 'smem constant byte address 0x4 - core index']
  #allocation1 [shape = 'u32[144,128]{1,0:T(1,128)}', space=vmem, size = 0x12000, scoped, tag = 'internal scratch']
  #allocation2 [shape = 'f32[8,256]{1,0:T(8,128)}', space=vmem, size = 0x2000, scoped, tag = 'scratch operand']
  #allocation3 [shape = 'f32[32,128]{1,0:T(8,128)}', space=vmem, size = 0x4000, scoped, tag = 'scratch operand']
  #allocation4 [shape = 'bf16[512,128]{1,0:T(16,128)(2,1)}', space=vmem, size = 0x20000, scoped, tag = 'scratch operand']
  %s0 = inlined_call_operand.vmem [shape: bf16[2,512], index: 0, kind: input, shape index: {}]
  %s1 = inlined_call_operand.hbm [shape: bf16[512,512], index: 1, kind: input, shape index: {}]
  %s2 = inlined_call_operand.hbm [shape: f32[1,512], index: 2, kind: input, shape index: {}]
  %s3 = inlined_call_operand.hbm [shape: bf16[512,1024], index: 3, kind: input, shape index: {}]
  %s4 = inlined_call_operand.hbm [shape: f32[1,1024], index: 4, kind: input, shape index: {}]
  %s5 = inlined_call_operand.hbm [shape: bf16[256,512], index: 5, kind: input, shape index: {}]
  %s6 = inlined_call_operand.hbm [shape: f32[1,512], index: 6, kind: input, shape index: {}]
  %s7 = inlined_call_operand.hbm [shape: bf16[128,2048], index: 7, kind: input, shape index: {}]
  %s8 = inlined_call_operand.hbm [shape: f32[1,2048], index: 8, kind: input, shape index: {}]
  %s9 = inlined_call_operand.hbm [shape: bf16[128,128], index: 9, kind: input, shape index: {}]
  %s10 = inlined_call_operand.hbm [shape: f32[1,128], index: 10, kind: input, shape index: {}]
  %s11 = inlined_call_operand.vmem [shape: bf16[512,128], index: 11, kind: output, shape index: {}]
  %s12 = sld [smem:[#allocation0]]
  $region94: #{generator_forward.1} parent=0
    _
  %s14 = ssub.s32 1, %s12
  %s15 = scalar_select 0, %s14, %s12
  $region1: #{generator_forward.1} parent=0
    #allocation5 [shape = 'u8[524288]{0}', space=vmem, size = 0x80000, scoped, tag = 'input window, operand 1, single buffered']
    #allocation6 [shape = 's32[1]{0}', space=sflag, size = 0x4, scoped, tag = 'scoped memory for generator_forward.1']
    #allocation7 [shape = 'u8[2048]{0}', space=vmem, size = 0x800, scoped, tag = 'input window, operand 2, single buffered']
    #allocation8 [shape = 's32[1]{0}', space=sflag, size = 0x4, scoped, tag = 'scoped memory for generator_forward.1']
    #allocation9 [shape = 'u8[1048576]{0}', space=vmem, size = 0x100000, scoped, tag = 'input window, operand 3, single buffered']
    #allocation10 [shape = 'u8[4096]{0}', space=vmem, size = 0x1000, scoped, tag = 'input window, operand 4, single buffered']
    #allocation11 [shape = 's32[1]{0}', space=sflag, size = 0x4, scoped, tag = 'scoped memory for generator_forward.1']
    #allocation12 [shape = 'u8[262144]{0}', space=vmem, size = 0x40000, scoped, tag = 'input window, operand 5, single buffered']
    #allocation13 [shape = 'u8[2048]{0}', space=vmem, size = 0x800, scoped, tag = 'input window, operand 6, single buffered']
    #allocation14 [shape = 's32[1]{0}', space=sflag, size = 0x4, scoped, tag = 'scoped memory for generator_forward.1']
    #allocation15 [shape = 'u8[524288]{0}', space=vmem, size = 0x80000, scoped, tag = 'input window, operand 7, single buffered']
    #allocation16 [shape = 'u8[8192]{0}', space=vmem, size = 0x2000, scoped, tag = 'input window, operand 8, single buffered']
    #allocation17 [shape = 's32[1]{0}', space=sflag, size = 0x4, scoped, tag = 'scoped memory for generator_forward.1']
    #allocation18 [shape = 'u8[32768]{0}', space=vmem, size = 0x8000, scoped, tag = 'input window, operand 9, single buffered']
    #allocation19 [shape = 'u8[512]{0}', space=vmem, size = 0x400, scoped, tag = 'input window, operand 10, single buffered']
    #allocation20 [shape = 's32[1]{0}', space=sflag, size = 0x4, scoped, tag = 'scoped memory for generator_forward.1']
    %16 = vsyncpa [#allocation6], 0
    %17 = vsyncpa [#allocation8], 0
    %18 = vsyncpa [#allocation11], 0
    %19 = vsyncpa [#allocation14], 0
    %20 = vsyncpa [#allocation17], 0
    %21 = vsyncpa [#allocation20], 0
    // Predicated region
    $region2: #{generator_forward.1} parent=1 // pred_check
      _
    $region3: #{generator_forward.1} parent=1 // pred_check_branch
      %23 = sbr.rel (0) target = $region5
    $region4: #{generator_forward.1} parent=1 // pred_region
      _
    $region5: #{generator_forward.1} parent=1 // pred_fallthru
      _
    // Predicated region
    $region6: #{generator_forward.1} parent=1 // pred_check
      _
    $region7: #{generator_forward.1} parent=1 // pred_check_branch
      %25 = sbr.rel (0) target = $region9
    $region8: #{generator_forward.1} parent=1 // pred_region
      %s27 = ssub.s32 16384, 16384
      %28 = vsyncadd [#allocation6], %s27
      %s29 = sshll.u32 [#allocation5], 4
      %s30 = int_to_ptr.vmem [resolvable:$true] %s29
      %35 = dma.hbm_to_vmem [thread:$0]  %s1, 16384, %s30, [#allocation6], 256, 256, 16
    $region9: #{generator_forward.1} parent=1 // pred_fallthru
      _
    // Predicated region
    $region10: #{generator_forward.1} parent=1 // pred_check
      _
    $region11: #{generator_forward.1} parent=1 // pred_check_branch
      %37 = sbr.rel (0) target = $region13
    $region12: #{generator_forward.1} parent=1 // pred_region
      %s39 = ssub.s32 64, 64
      %40 = vsyncadd [#allocation8], %s39
      %s42 = sshll.u32 [#allocation7], 4
      %s43 = int_to_ptr.vmem [resolvable:$true] %s42
      %45 = dma.hbm_to_vmem [thread:$0]  %s2, 64, %s43, [#allocation8]
    $region13: #{generator_forward.1} parent=1 // pred_fallthru
      _
    // Predicated region
    $region14: #{generator_forward.1} parent=1 // pred_check
      _
    $region15: #{generator_forward.1} parent=1 // pred_check_branch
      %47 = sbr.rel (0) target = $region17
    $region16: #{generator_forward.1} parent=1 // pred_region
      %s49 = ssub.s32 32768, 32768
      %50 = vsyncadd [#allocation8], %s49
      %s51 = sshll.u32 [#allocation9], 4
      %s52 = int_to_ptr.vmem [resolvable:$true] %s51
      %57 = dma.hbm_to_vmem [thread:$0]  %s3, 32768, %s52, [#allocation8], 512, 512, 32
    $region17: #{generator_forward.1} parent=1 // pred_fallthru
      _
    // Predicated region
    $region18: #{generator_forward.1} parent=1 // pred_check
      _
    $region19: #{generator_forward.1} parent=1 // pred_check_branch
      %59 = sbr.rel (0) target = $region21
    $region20: #{generator_forward.1} parent=1 // pred_region
      %s61 = ssub.s32 128, 128
      %62 = vsyncadd [#allocation11], %s61
      %s64 = sshll.u32 [#allocation10], 4
      %s65 = int_to_ptr.vmem [resolvable:$true] %s64
      %67 = dma.hbm_to_vmem [thread:$0]  %s4, 128, %s65, [#allocation11]
    $region21: #{generator_forward.1} parent=1 // pred_fallthru
      _
    // Predicated region
    $region22: #{generator_forward.1} parent=1 // pred_check
      _
    $region23: #{generator_forward.1} parent=1 // pred_check_branch
      %69 = sbr.rel (0) target = $region25
    $region24: #{generator_forward.1} parent=1 // pred_region
      %s71 = ssub.s32 8192, 8192
      %72 = vsyncadd [#allocation11], %s71
      %s73 = sshll.u32 [#allocation12], 4
      %s74 = int_to_ptr.vmem [resolvable:$true] %s73
      %79 = dma.hbm_to_vmem [thread:$0]  %s5, 8192, %s74, [#allocation11], 256, 256, 16
    $region25: #{generator_forward.1} parent=1 // pred_fallthru
      _
    // Predicated region
    $region26: #{generator_forward.1} parent=1 // pred_check
      _
    $region27: #{generator_forward.1} parent=1 // pred_check_branch
      %81 = sbr.rel (0) target = $region29
    $region28: #{generator_forward.1} parent=1 // pred_region
      %s83 = ssub.s32 64, 64
      %84 = vsyncadd [#allocation14], %s83
      %s86 = sshll.u32 [#allocation13], 4
      %s87 = int_to_ptr.vmem [resolvable:$true] %s86
      %89 = dma.hbm_to_vmem [thread:$0]  %s6, 64, %s87, [#allocation14]
    $region29: #{generator_forward.1} parent=1 // pred_fallthru
      _
    // Predicated region
    $region30: #{generator_forward.1} parent=1 // pred_check
      _
    $region31: #{generator_forward.1} parent=1 // pred_check_branch
      %91 = sbr.rel (0) target = $region33
    $region32: #{generator_forward.1} parent=1 // pred_region
      %s93 = ssub.s32 16384, 16384
      %94 = vsyncadd [#allocation14], %s93
      %s95 = sshll.u32 [#allocation15], 4
      %s96 = int_to_ptr.vmem [resolvable:$true] %s95
      %101 = dma.hbm_to_vmem [thread:$0]  %s7, 16384, %s96, [#allocation14], 1024, 1024, 64
    $region33: #{generator_forward.1} parent=1 // pred_fallthru
      _
    // Predicated region
    $region34: #{generator_forward.1} parent=1 // pred_check
      _
    $region35: #{generator_forward.1} parent=1 // pred_check_branch
      %103 = sbr.rel (0) target = $region37
    $region36: #{generator_forward.1} parent=1 // pred_region
      %s105 = ssub.s32 256, 256
      %106 = vsyncadd [#allocation17], %s105
      %s108 = sshll.u32 [#allocation16], 4
      %s109 = int_to_ptr.vmem [resolvable:$true] %s108
      %111 = dma.hbm_to_vmem [thread:$0]  %s8, 256, %s109, [#allocation17]
    $region37: #{generator_forward.1} parent=1 // pred_fallthru
      _
    // Predicated region
    $region38: #{generator_forward.1} parent=1 // pred_check
      _
    $region39: #{generator_forward.1} parent=1 // pred_check_branch
      %113 = sbr.rel (0) target = $region41
    $region40: #{generator_forward.1} parent=1 // pred_region
      %s115 = ssub.s32 1024, 1024
      %116 = vsyncadd [#allocation17], %s115
      %s117 = sshll.u32 [#allocation18], 4
      %s118 = int_to_ptr.vmem [resolvable:$true] %s117
      %123 = dma.hbm_to_vmem [thread:$0]  %s9, 1024, %s118, [#allocation17], 64, 64, 4
    $region41: #{generator_forward.1} parent=1 // pred_fallthru
      _
    // Predicated region
    $region42: #{generator_forward.1} parent=1 // pred_check
      _
    $region43: #{generator_forward.1} parent=1 // pred_check_branch
      %125 = sbr.rel (0) target = $region45
    $region44: #{generator_forward.1} parent=1 // pred_region
      %s127 = ssub.s32 16, 16
      %128 = vsyncadd [#allocation20], %s127
      %s130 = sshll.u32 [#allocation19], 4
      %s131 = int_to_ptr.vmem [resolvable:$true] %s130
      %133 = dma.hbm_to_vmem [thread:$0]  %s10, 16, %s131, [#allocation20]
    $region45: #{generator_forward.1} parent=1 // pred_fallthru
      _
    // Predicated region
    $region46: #{generator_forward.1} parent=1 // pred_check
      _
    $region47: #{generator_forward.1} parent=1 // pred_check_branch
      %135 = sbr.rel (0) target = $region49
    $region48: #{generator_forward.1} parent=1 // pred_region
      %136 = dma.done [#allocation6], 16384
    $region49: #{generator_forward.1} parent=1 // pred_fallthru
      _
    // Predicated region
    $region50: #{generator_forward.1} parent=1 // pred_check
      _
    $region51: #{generator_forward.1} parent=1 // pred_check_branch
      %138 = sbr.rel (0) target = $region53
    $region52: #{generator_forward.1} parent=1 // pred_region
      %139 = dma.done [#allocation8], 64
    $region53: #{generator_forward.1} parent=1 // pred_fallthru
      _
    // Predicated region
    $region54: #{generator_forward.1} parent=1 // pred_check
      _
    $region55: #{generator_forward.1} parent=1 // pred_check_branch
      %141 = sbr.rel (0) target = $region57
    $region56: #{generator_forward.1} parent=1 // pred_region
      %142 = dma.done [#allocation8], 32768
    $region57: #{generator_forward.1} parent=1 // pred_fallthru
      _
    // Predicated region
    $region58: #{generator_forward.1} parent=1 // pred_check
      _
    $region59: #{generator_forward.1} parent=1 // pred_check_branch
      %144 = sbr.rel (0) target = $region61
    $region60: #{generator_forward.1} parent=1 // pred_region
      %145 = dma.done [#allocation11], 128
    $region61: #{generator_forward.1} parent=1 // pred_fallthru
      _
    // Predicated region
    $region62: #{generator_forward.1} parent=1 // pred_check
      _
    $region63: #{generator_forward.1} parent=1 // pred_check_branch
      %147 = sbr.rel (0) target = $region65
    $region64: #{generator_forward.1} parent=1 // pred_region
      %148 = dma.done [#allocation11], 8192
    $region65: #{generator_forward.1} parent=1 // pred_fallthru
      _
    // Predicated region
    $region66: #{generator_forward.1} parent=1 // pred_check
      _
    $region67: #{generator_forward.1} parent=1 // pred_check_branch
      %150 = sbr.rel (0) target = $region69
    $region68: #{generator_forward.1} parent=1 // pred_region
      %151 = dma.done [#allocation14], 64
    $region69: #{generator_forward.1} parent=1 // pred_fallthru
      _
    // Predicated region
    $region70: #{generator_forward.1} parent=1 // pred_check
      _
    $region71: #{generator_forward.1} parent=1 // pred_check_branch
      %153 = sbr.rel (0) target = $region73
    $region72: #{generator_forward.1} parent=1 // pred_region
      %154 = dma.done [#allocation14], 16384
    $region73: #{generator_forward.1} parent=1 // pred_fallthru
      _
    // Predicated region
    $region74: #{generator_forward.1} parent=1 // pred_check
      _
    $region75: #{generator_forward.1} parent=1 // pred_check_branch
      %156 = sbr.rel (0) target = $region77
    $region76: #{generator_forward.1} parent=1 // pred_region
      %157 = dma.done [#allocation17], 256
    $region77: #{generator_forward.1} parent=1 // pred_fallthru
      _
    // Predicated region
    $region78: #{generator_forward.1} parent=1 // pred_check
      _
    $region79: #{generator_forward.1} parent=1 // pred_check_branch
      %159 = sbr.rel (0) target = $region81
    $region80: #{generator_forward.1} parent=1 // pred_region
      %160 = dma.done [#allocation17], 1024
    $region81: #{generator_forward.1} parent=1 // pred_fallthru
      _
    // Predicated region
    $region82: #{generator_forward.1} parent=1 // pred_check
      _
    $region83: #{generator_forward.1} parent=1 // pred_check_branch
      %162 = sbr.rel (0) target = $region85
    $region84: #{generator_forward.1} parent=1 // pred_region
      %163 = dma.done [#allocation20], 16
    $region85: #{generator_forward.1} parent=1 // pred_fallthru
      _
    %v165 = vld [vmem:[%s0] sm:$0xf]
    %v166 = vld [vmem:[#allocation5] sm:$0xff]
    %v167 = vld [vmem:[#allocation5 + $0x8] sm:$0xff]
    %v168 = vld [vmem:[#allocation5 + $0x10] sm:$0xff]
    %v169 = vld [vmem:[#allocation5 + $0x18] sm:$0xff]
    %v170 = vld [vmem:[#allocation5 + $0x20] sm:$0xff]
    %v171 = vld [vmem:[#allocation5 + $0x28] sm:$0xff]
    %v172 = vld [vmem:[#allocation5 + $0x30] sm:$0xff]
    %v173 = vld [vmem:[#allocation5 + $0x38] sm:$0xff]
    %v174 = vld [vmem:[#allocation5 + $0x40] sm:$0xff]
    %v175 = vld [vmem:[#allocation5 + $0x48] sm:$0xff]
    %v176 = vld [vmem:[#allocation5 + $0x50] sm:$0xff]
    %v177 = vld [vmem:[#allocation5 + $0x58] sm:$0xff]
    %v178 = vld [vmem:[#allocation5 + $0x60] sm:$0xff]
    %v179 = vld [vmem:[#allocation5 + $0x68] sm:$0xff]
    %v180 = vld [vmem:[#allocation5 + $0x70] sm:$0xff]
    %v181 = vld [vmem:[#allocation5 + $0x78] sm:$0xff]
    %v182 = vld [vmem:[#allocation5 + $0x80] sm:$0xff]
    %v183 = vld [vmem:[#allocation5 + $0x88] sm:$0xff]
    %v184 = vld [vmem:[#allocation5 + $0x90] sm:$0xff]
    %v185 = vld [vmem:[#allocation5 + $0x98] sm:$0xff]
    %v186 = vld [vmem:[#allocation5 + $0xa0] sm:$0xff]
    %v187 = vld [vmem:[#allocation5 + $0xa8] sm:$0xff]
    %v188 = vld [vmem:[#allocation5 + $0xb0] sm:$0xff]
    %v189 = vld [vmem:[#allocation5 + $0xb8] sm:$0xff]
    %v190 = vld [vmem:[#allocation5 + $0xc0] sm:$0xff]
    %v191 = vld [vmem:[#allocation5 + $0xc8] sm:$0xff]
    %v192 = vld [vmem:[#allocation5 + $0xd0] sm:$0xff]
    %v193 = vld [vmem:[#allocation5 + $0xd8] sm:$0xff]
    %v194 = vld [vmem:[#allocation5 + $0xe0] sm:$0xff]
    %v195 = vld [vmem:[#allocation5 + $0xe8] sm:$0xff]
    %v196 = vld [vmem:[#allocation5 + $0xf0] sm:$0xff]
    %v197 = vld [vmem:[#allocation5 + $0xf8] sm:$0xff]
    %v198 = vld [vmem:[#allocation5 + $0x100] sm:$0xff]
    %v199 = vld [vmem:[#allocation5 + $0x108] sm:$0xff]
    %v200 = vld [vmem:[#allocation5 + $0x110] sm:$0xff]
    %v201 = vld [vmem:[#allocation5 + $0x118] sm:$0xff]
    %v202 = vld [vmem:[#allocation5 + $0x120] sm:$0xff]
    %v203 = vld [vmem:[#allocation5 + $0x128] sm:$0xff]
    %v204 = vld [vmem:[#allocation5 + $0x130] sm:$0xff]
    %v205 = vld [vmem:[#allocation5 + $0x138] sm:$0xff]
    %v206 = vld [vmem:[#allocation5 + $0x140] sm:$0xff]
    %v207 = vld [vmem:[#allocation5 + $0x148] sm:$0xff]
    %v208 = vld [vmem:[#allocation5 + $0x150] sm:$0xff]
    %v209 = vld [vmem:[#allocation5 + $0x158] sm:$0xff]
    %v210 = vld [vmem:[#allocation5 + $0x160] sm:$0xff]
    %v211 = vld [vmem:[#allocation5 + $0x168] sm:$0xff]
    %v212 = vld [vmem:[#allocation5 + $0x170] sm:$0xff]
    %v213 = vld [vmem:[#allocation5 + $0x178] sm:$0xff]
    %v214 = vld [vmem:[#allocation5 + $0x180] sm:$0xff]
    %v215 = vld [vmem:[#allocation5 + $0x188] sm:$0xff]
    %v216 = vld [vmem:[#allocation5 + $0x190] sm:$0xff]
    %v217 = vld [vmem:[#allocation5 + $0x198] sm:$0xff]
    %v218 = vld [vmem:[#allocation5 + $0x1a0] sm:$0xff]
    %v219 = vld [vmem:[#allocation5 + $0x1a8] sm:$0xff]
    %v220 = vld [vmem:[#allocation5 + $0x1b0] sm:$0xff]
    %v221 = vld [vmem:[#allocation5 + $0x1b8] sm:$0xff]
    %v222 = vld [vmem:[#allocation5 + $0x1c0] sm:$0xff]
    %v223 = vld [vmem:[#allocation5 + $0x1c8] sm:$0xff]
    %v224 = vld [vmem:[#allocation5 + $0x1d0] sm:$0xff]
    %v225 = vld [vmem:[#allocation5 + $0x1d8] sm:$0xff]
    %v226 = vld [vmem:[#allocation5 + $0x1e0] sm:$0xff]
    %v227 = vld [vmem:[#allocation5 + $0x1e8] sm:$0xff]
    %v228 = vld [vmem:[#allocation5 + $0x1f0] sm:$0xff]
    %v229 = vld [vmem:[#allocation5 + $0x1f8] sm:$0xff]
    %v230 = vld [vmem:[#allocation5 + $0x200] sm:$0xff]
    %v231 = vld [vmem:[#allocation5 + $0x208] sm:$0xff]
    %v232 = vld [vmem:[#allocation5 + $0x210] sm:$0xff]
    %v233 = vld [vmem:[#allocation5 + $0x218] sm:$0xff]
    %v234 = vld [vmem:[#allocation5 + $0x220] sm:$0xff]
    %v235 = vld [vmem:[#allocation5 + $0x228] sm:$0xff]
    %v236 = vld [vmem:[#allocation5 + $0x230] sm:$0xff]
    %v237 = vld [vmem:[#allocation5 + $0x238] sm:$0xff]
    %v238 = vld [vmem:[#allocation5 + $0x240] sm:$0xff]
    %v239 = vld [vmem:[#allocation5 + $0x248] sm:$0xff]
    %v240 = vld [vmem:[#allocation5 + $0x250] sm:$0xff]
    %v241 = vld [vmem:[#allocation5 + $0x258] sm:$0xff]
    %v242 = vld [vmem:[#allocation5 + $0x260] sm:$0xff]
    %v243 = vld [vmem:[#allocation5 + $0x268] sm:$0xff]
    %v244 = vld [vmem:[#allocation5 + $0x270] sm:$0xff]
    %v245 = vld [vmem:[#allocation5 + $0x278] sm:$0xff]
    %v246 = vld [vmem:[#allocation5 + $0x280] sm:$0xff]
    %v247 = vld [vmem:[#allocation5 + $0x288] sm:$0xff]
    %v248 = vld [vmem:[#allocation5 + $0x290] sm:$0xff]
    %v249 = vld [vmem:[#allocation5 + $0x298] sm:$0xff]
    %v250 = vld [vmem:[#allocation5 + $0x2a0] sm:$0xff]
    %v251 = vld [vmem:[#allocation5 + $0x2a8] sm:$0xff]
    %v252 = vld [vmem:[#allocation5 + $0x2b0] sm:$0xff]
    %v253 = vld [vmem:[#allocation5 + $0x2b8] sm:$0xff]
    %v254 = vld [vmem:[#allocation5 + $0x2c0] sm:$0xff]
    %v255 = vld [vmem:[#allocation5 + $0x2c8] sm:$0xff]
    %v256 = vld [vmem:[#allocation5 + $0x2d0] sm:$0xff]
    %v257 = vld [vmem:[#allocation5 + $0x2d8] sm:$0xff]
    %v258 = vld [vmem:[#allocation5 + $0x2e0] sm:$0xff]
    %v259 = vld [vmem:[#allocation5 + $0x2e8] sm:$0xff]
    %v260 = vld [vmem:[#allocation5 + $0x2f0] sm:$0xff]
    %v261 = vld [vmem:[#allocation5 + $0x2f8] sm:$0xff]
    %v262 = vld [vmem:[#allocation5 + $0x300] sm:$0xff]
    %v263 = vld [vmem:[#allocation5 + $0x308] sm:$0xff]
    %v264 = vld [vmem:[#allocation5 + $0x310] sm:$0xff]
    %v265 = vld [vmem:[#allocation5 + $0x318] sm:$0xff]
    %v266 = vld [vmem:[#allocation5 + $0x320] sm:$0xff]
    %v267 = vld [vmem:[#allocation5 + $0x328] sm:$0xff]
    %v268 = vld [vmem:[#allocation5 + $0x330] sm:$0xff]
    %v269 = vld [vmem:[#allocation5 + $0x338] sm:$0xff]
    %v270 = vld [vmem:[#allocation5 + $0x340] sm:$0xff]
    %v271 = vld [vmem:[#allocation5 + $0x348] sm:$0xff]
    %v272 = vld [vmem:[#allocation5 + $0x350] sm:$0xff]
    %v273 = vld [vmem:[#allocation5 + $0x358] sm:$0xff]
    %v274 = vld [vmem:[#allocation5 + $0x360] sm:$0xff]
    %v275 = vld [vmem:[#allocation5 + $0x368] sm:$0xff]
    %v276 = vld [vmem:[#allocation5 + $0x370] sm:$0xff]
    %v277 = vld [vmem:[#allocation5 + $0x378] sm:$0xff]
    %v278 = vld [vmem:[#allocation5 + $0x380] sm:$0xff]
    %v279 = vld [vmem:[#allocation5 + $0x388] sm:$0xff]
    %v280 = vld [vmem:[#allocation5 + $0x390] sm:$0xff]
    %v281 = vld [vmem:[#allocation5 + $0x398] sm:$0xff]
    %v282 = vld [vmem:[#allocation5 + $0x3a0] sm:$0xff]
    %v283 = vld [vmem:[#allocation5 + $0x3a8] sm:$0xff]
    %v284 = vld [vmem:[#allocation5 + $0x3b0] sm:$0xff]
    %v285 = vld [vmem:[#allocation5 + $0x3b8] sm:$0xff]
    %v286 = vld [vmem:[#allocation5 + $0x3c0] sm:$0xff]
    %v287 = vld [vmem:[#allocation5 + $0x3c8] sm:$0xff]
    %v288 = vld [vmem:[#allocation5 + $0x3d0] sm:$0xff]
    %v289 = vld [vmem:[#allocation5 + $0x3d8] sm:$0xff]
    %v290 = vld [vmem:[#allocation5 + $0x3e0] sm:$0xff]
    %v291 = vld [vmem:[#allocation5 + $0x3e8] sm:$0xff]
    %v292 = vld [vmem:[#allocation5 + $0x3f0] sm:$0xff]
    %v293 = vld [vmem:[#allocation5 + $0x3f8] sm:$0xff]
    %v294 = vld [vmem:[#allocation7] sm:$0xf]
    %v296 = vlaneseq
    %v297 = vshrl.u32 %v296, 7
    %v298 = vsub.s32 0, %v297
    %v299 = vrot.slane %v294, %v298
    %v300 = vlaneseq
    %v301 = vshrl.u32 %v300, 7
    %v302 = vsub.s32 1, %v301
    %v303 = vrot.slane %v294, %v302
    %v304 = vlaneseq
    %v305 = vshrl.u32 %v304, 7
    %v306 = vsub.s32 2, %v305
    %v307 = vrot.slane %v294, %v306
    %v308 = vlaneseq
    %v309 = vshrl.u32 %v308, 7
    %v310 = vsub.s32 3, %v309
    %v311 = vrot.slane %v294, %v310
    %v318 = vunpack.c.l.s4 1966171168
    %v319 = vunpack.c.0.s8 %v318
    %v320 = vlaneseq
    %v321 = vshrl.u32 %v320, 7
    %v322 = vsub.s32 %v319, %v321
    %v323 = vrot.slane %v165, %v322
    %v324 = vcombine.high %v323, %v323
    %v326 = vunpack.c.l.s4 1966171168
    %v327 = vunpack.c.0.s8 %v326
    %v328 = vlaneseq
    %v329 = vshrl.u32 %v328, 7
    %v330 = vsub.s32 %v327, %v329
    %v331 = vrot.slane %v323, %v330
    %v333 = vunpack.c.l.s4 1966171168
    %v334 = vunpack.c.0.s8 %v333
    %v335 = vlaneseq
    %v336 = vshrl.u32 %v335, 7
    %v337 = vsub.s32 %v334, %v336
    %v338 = vrot.slane %v324, %v337
    %v339 = vcombine.high %v331, %v331
    %v340 = vcombine.high %v338, %v338
    %v473 = vunpack.c.l.b16 %v166
    %v474 = vunpack.c.h.b16 %v166
    %v475 = vunpack.c.l.b16 %v167
    %v476 = vunpack.c.h.b16 %v167
    %v477 = vunpack.c.l.b16 %v168
    %v478 = vunpack.c.h.b16 %v168
    %v479 = vunpack.c.l.b16 %v169
    %v480 = vunpack.c.h.b16 %v169
    %v481 = vunpack.c.l.b16 %v170
    %v482 = vunpack.c.h.b16 %v170
    %v483 = vunpack.c.l.b16 %v171
    %v484 = vunpack.c.h.b16 %v171
    %v485 = vunpack.c.l.b16 %v172
    %v486 = vunpack.c.h.b16 %v172
    %v487 = vunpack.c.l.b16 %v173
    %v488 = vunpack.c.h.b16 %v173
    %v489 = vunpack.c.l.b16 %v174
    %v490 = vunpack.c.h.b16 %v174
    %v491 = vunpack.c.l.b16 %v175
    %v492 = vunpack.c.h.b16 %v175
    %v493 = vunpack.c.l.b16 %v176
    %v494 = vunpack.c.h.b16 %v176
    %v495 = vunpack.c.l.b16 %v177
    %v496 = vunpack.c.h.b16 %v177
    %v497 = vunpack.c.l.b16 %v178
    %v498 = vunpack.c.h.b16 %v178
    %v499 = vunpack.c.l.b16 %v179
    %v500 = vunpack.c.h.b16 %v179
    %v501 = vunpack.c.l.b16 %v180
    %v502 = vunpack.c.h.b16 %v180
    %v503 = vunpack.c.l.b16 %v181
    %v504 = vunpack.c.h.b16 %v181
    %v505 = vunpack.c.l.b16 %v182
    %v506 = vunpack.c.h.b16 %v182
    %v507 = vunpack.c.l.b16 %v183
    %v508 = vunpack.c.h.b16 %v183
    %v509 = vunpack.c.l.b16 %v184
    %v510 = vunpack.c.h.b16 %v184
    %v511 = vunpack.c.l.b16 %v185
    %v512 = vunpack.c.h.b16 %v185
    %v513 = vunpack.c.l.b16 %v186
    %v514 = vunpack.c.h.b16 %v186
    %v515 = vunpack.c.l.b16 %v187
    %v516 = vunpack.c.h.b16 %v187
    %v517 = vunpack.c.l.b16 %v188
    %v518 = vunpack.c.h.b16 %v188
    %v519 = vunpack.c.l.b16 %v189
    %v520 = vunpack.c.h.b16 %v189
    %v521 = vunpack.c.l.b16 %v190
    %v522 = vunpack.c.h.b16 %v190
    %v523 = vunpack.c.l.b16 %v191
    %v524 = vunpack.c.h.b16 %v191
    %v525 = vunpack.c.l.b16 %v192
    %v526 = vunpack.c.h.b16 %v192
    %v527 = vunpack.c.l.b16 %v193
    %v528 = vunpack.c.h.b16 %v193
    %v529 = vunpack.c.l.b16 %v194
    %v530 = vunpack.c.h.b16 %v194
    %v531 = vunpack.c.l.b16 %v195
    %v532 = vunpack.c.h.b16 %v195
    %v533 = vunpack.c.l.b16 %v196
    %v534 = vunpack.c.h.b16 %v196
    %v535 = vunpack.c.l.b16 %v197
    %v536 = vunpack.c.h.b16 %v197
    %v537 = vunpack.c.l.b16 %v198
    %v538 = vunpack.c.h.b16 %v198
    %v539 = vunpack.c.l.b16 %v199
    %v540 = vunpack.c.h.b16 %v199
    %v541 = vunpack.c.l.b16 %v200
    %v542 = vunpack.c.h.b16 %v200
    %v543 = vunpack.c.l.b16 %v201
    %v544 = vunpack.c.h.b16 %v201
    %v545 = vunpack.c.l.b16 %v202
    %v546 = vunpack.c.h.b16 %v202
    %v547 = vunpack.c.l.b16 %v203
    %v548 = vunpack.c.h.b16 %v203
    %v549 = vunpack.c.l.b16 %v204
    %v550 = vunpack.c.h.b16 %v204
    %v551 = vunpack.c.l.b16 %v205
    %v552 = vunpack.c.h.b16 %v205
    %v553 = vunpack.c.l.b16 %v206
    %v554 = vunpack.c.h.b16 %v206
    %v555 = vunpack.c.l.b16 %v207
    %v556 = vunpack.c.h.b16 %v207
    %v557 = vunpack.c.l.b16 %v208
    %v558 = vunpack.c.h.b16 %v208
    %v559 = vunpack.c.l.b16 %v209
    %v560 = vunpack.c.h.b16 %v209
    %v561 = vunpack.c.l.b16 %v210
    %v562 = vunpack.c.h.b16 %v210
    %v563 = vunpack.c.l.b16 %v211
    %v564 = vunpack.c.h.b16 %v211
    %v565 = vunpack.c.l.b16 %v212
    %v566 = vunpack.c.h.b16 %v212
    %v567 = vunpack.c.l.b16 %v213
    %v568 = vunpack.c.h.b16 %v213
    %v569 = vunpack.c.l.b16 %v214
    %v570 = vunpack.c.h.b16 %v214
    %v571 = vunpack.c.l.b16 %v215
    %v572 = vunpack.c.h.b16 %v215
    %v573 = vunpack.c.l.b16 %v216
    %v574 = vunpack.c.h.b16 %v216
    %v575 = vunpack.c.l.b16 %v217
    %v576 = vunpack.c.h.b16 %v217
    %v577 = vunpack.c.l.b16 %v218
    %v578 = vunpack.c.h.b16 %v218
    %v579 = vunpack.c.l.b16 %v219
    %v580 = vunpack.c.h.b16 %v219
    %v581 = vunpack.c.l.b16 %v220
    %v582 = vunpack.c.h.b16 %v220
    %v583 = vunpack.c.l.b16 %v221
    %v584 = vunpack.c.h.b16 %v221
    %v585 = vunpack.c.l.b16 %v222
    %v586 = vunpack.c.h.b16 %v222
    %v587 = vunpack.c.l.b16 %v223
    %v588 = vunpack.c.h.b16 %v223
    %v589 = vunpack.c.l.b16 %v224
    %v590 = vunpack.c.h.b16 %v224
    %v591 = vunpack.c.l.b16 %v225
    %v592 = vunpack.c.h.b16 %v225
    %v593 = vunpack.c.l.b16 %v226
    %v594 = vunpack.c.h.b16 %v226
    %v595 = vunpack.c.l.b16 %v227
    %v596 = vunpack.c.h.b16 %v227
    %v597 = vunpack.c.l.b16 %v228
    %v598 = vunpack.c.h.b16 %v228
    %v599 = vunpack.c.l.b16 %v229
    %v600 = vunpack.c.h.b16 %v229
    %v601 = vunpack.c.l.b16 %v230
    %v602 = vunpack.c.h.b16 %v230
    %v603 = vunpack.c.l.b16 %v231
    %v604 = vunpack.c.h.b16 %v231
    %v605 = vunpack.c.l.b16 %v232
    %v606 = vunpack.c.h.b16 %v232
    %v607 = vunpack.c.l.b16 %v233
    %v608 = vunpack.c.h.b16 %v233
    %v609 = vunpack.c.l.b16 %v234
    %v610 = vunpack.c.h.b16 %v234
    %v611 = vunpack.c.l.b16 %v235
    %v612 = vunpack.c.h.b16 %v235
    %v613 = vunpack.c.l.b16 %v236
    %v614 = vunpack.c.h.b16 %v236
    %v615 = vunpack.c.l.b16 %v237
    %v616 = vunpack.c.h.b16 %v237
    %v617 = vunpack.c.l.b16 %v238
    %v618 = vunpack.c.h.b16 %v238
    %v619 = vunpack.c.l.b16 %v239
    %v620 = vunpack.c.h.b16 %v239
    %v621 = vunpack.c.l.b16 %v240
    %v622 = vunpack.c.h.b16 %v240
    %v623 = vunpack.c.l.b16 %v241
    %v624 = vunpack.c.h.b16 %v241
    %v625 = vunpack.c.l.b16 %v242
    %v626 = vunpack.c.h.b16 %v242
    %v627 = vunpack.c.l.b16 %v243
    %v628 = vunpack.c.h.b16 %v243
    %v629 = vunpack.c.l.b16 %v244
    %v630 = vunpack.c.h.b16 %v244
    %v631 = vunpack.c.l.b16 %v245
    %v632 = vunpack.c.h.b16 %v245
    %v633 = vunpack.c.l.b16 %v246
    %v634 = vunpack.c.h.b16 %v246
    %v635 = vunpack.c.l.b16 %v247
    %v636 = vunpack.c.h.b16 %v247
    %v637 = vunpack.c.l.b16 %v248
    %v638 = vunpack.c.h.b16 %v248
    %v639 = vunpack.c.l.b16 %v249
    %v640 = vunpack.c.h.b16 %v249
    %v641 = vunpack.c.l.b16 %v250
    %v642 = vunpack.c.h.b16 %v250
    %v643 = vunpack.c.l.b16 %v251
    %v644 = vunpack.c.h.b16 %v251
    %v645 = vunpack.c.l.b16 %v252
    %v646 = vunpack.c.h.b16 %v252
    %v647 = vunpack.c.l.b16 %v253
    %v648 = vunpack.c.h.b16 %v253
    %v649 = vunpack.c.l.b16 %v254
    %v650 = vunpack.c.h.b16 %v254
    %v651 = vunpack.c.l.b16 %v255
    %v652 = vunpack.c.h.b16 %v255
    %v653 = vunpack.c.l.b16 %v256
    %v654 = vunpack.c.h.b16 %v256
    %v655 = vunpack.c.l.b16 %v257
    %v656 = vunpack.c.h.b16 %v257
    %v657 = vunpack.c.l.b16 %v258
    %v658 = vunpack.c.h.b16 %v258
    %v659 = vunpack.c.l.b16 %v259
    %v660 = vunpack.c.h.b16 %v259
    %v661 = vunpack.c.l.b16 %v260
    %v662 = vunpack.c.h.b16 %v260
    %v663 = vunpack.c.l.b16 %v261
    %v664 = vunpack.c.h.b16 %v261
    %v665 = vunpack.c.l.b16 %v262
    %v666 = vunpack.c.h.b16 %v262
    %v667 = vunpack.c.l.b16 %v263
    %v668 = vunpack.c.h.b16 %v263
    %v669 = vunpack.c.l.b16 %v264
    %v670 = vunpack.c.h.b16 %v264
    %v671 = vunpack.c.l.b16 %v265
    %v672 = vunpack.c.h.b16 %v265
    %v673 = vunpack.c.l.b16 %v266
    %v674 = vunpack.c.h.b16 %v266
    %v675 = vunpack.c.l.b16 %v267
    %v676 = vunpack.c.h.b16 %v267
    %v677 = vunpack.c.l.b16 %v268
    %v678 = vunpack.c.h.b16 %v268
    %v679 = vunpack.c.l.b16 %v269
    %v680 = vunpack.c.h.b16 %v269
    %v681 = vunpack.c.l.b16 %v270
    %v682 = vunpack.c.h.b16 %v270
    %v683 = vunpack.c.l.b16 %v271
    %v684 = vunpack.c.h.b16 %v271
    %v685 = vunpack.c.l.b16 %v272
    %v686 = vunpack.c.h.b16 %v272
    %v687 = vunpack.c.l.b16 %v273
    %v688 = vunpack.c.h.b16 %v273
    %v689 = vunpack.c.l.b16 %v274
    %v690 = vunpack.c.h.b16 %v274
    %v691 = vunpack.c.l.b16 %v275
    %v692 = vunpack.c.h.b16 %v275
    %v693 = vunpack.c.l.b16 %v276
    %v694 = vunpack.c.h.b16 %v276
    %v695 = vunpack.c.l.b16 %v277
    %v696 = vunpack.c.h.b16 %v277
    %v697 = vunpack.c.l.b16 %v278
    %v698 = vunpack.c.h.b16 %v278
    %v699 = vunpack.c.l.b16 %v279
    %v700 = vunpack.c.h.b16 %v279
    %v701 = vunpack.c.l.b16 %v280
    %v702 = vunpack.c.h.b16 %v280
    %v703 = vunpack.c.l.b16 %v281
    %v704 = vunpack.c.h.b16 %v281
    %v705 = vunpack.c.l.b16 %v282
    %v706 = vunpack.c.h.b16 %v282
    %v707 = vunpack.c.l.b16 %v283
    %v708 = vunpack.c.h.b16 %v283
    %v709 = vunpack.c.l.b16 %v284
    %v710 = vunpack.c.h.b16 %v284
    %v711 = vunpack.c.l.b16 %v285
    %v712 = vunpack.c.h.b16 %v285
    %v713 = vunpack.c.l.b16 %v286
    %v714 = vunpack.c.h.b16 %v286
    %v715 = vunpack.c.l.b16 %v287
    %v716 = vunpack.c.h.b16 %v287
    %v717 = vunpack.c.l.b16 %v288
    %v718 = vunpack.c.h.b16 %v288
    %v719 = vunpack.c.l.b16 %v289
    %v720 = vunpack.c.h.b16 %v289
    %v721 = vunpack.c.l.b16 %v290
    %v722 = vunpack.c.h.b16 %v290
    %v723 = vunpack.c.l.b16 %v291
    %v724 = vunpack.c.h.b16 %v291
    %v725 = vunpack.c.l.b16 %v292
    %v726 = vunpack.c.h.b16 %v292
    %v727 = vunpack.c.l.b16 %v293
    %v728 = vunpack.c.h.b16 %v293
    %v729 = vpack.c.b16 %v477, %v473
    %v730 = vpack.c.b16 %v478, %v474
    %v731 = vpack.c.b16 %v479, %v475
    %v732 = vpack.c.b16 %v480, %v476
    %v733 = vpack.c.b16 %v485, %v481
    %v734 = vpack.c.b16 %v486, %v482
    %v735 = vpack.c.b16 %v487, %v483
    %v736 = vpack.c.b16 %v488, %v484
    %v737 = vpack.c.b16 %v493, %v489
    %v738 = vpack.c.b16 %v494, %v490
    %v739 = vpack.c.b16 %v495, %v491
    %v740 = vpack.c.b16 %v496, %v492
    %v741 = vpack.c.b16 %v501, %v497
    %v742 = vpack.c.b16 %v502, %v498
    %v743 = vpack.c.b16 %v503, %v499
    %v744 = vpack.c.b16 %v504, %v500
    %v745 = vpack.c.b16 %v509, %v505
    %v746 = vpack.c.b16 %v510, %v506
    %v747 = vpack.c.b16 %v511, %v507
    %v748 = vpack.c.b16 %v512, %v508
    %v749 = vpack.c.b16 %v517, %v513
    %v750 = vpack.c.b16 %v518, %v514
    %v751 = vpack.c.b16 %v519, %v515
    %v752 = vpack.c.b16 %v520, %v516
    %v753 = vpack.c.b16 %v525, %v521
    %v754 = vpack.c.b16 %v526, %v522
    %v755 = vpack.c.b16 %v527, %v523
    %v756 = vpack.c.b16 %v528, %v524
    %v757 = vpack.c.b16 %v533, %v529
    %v758 = vpack.c.b16 %v534, %v530
    %v759 = vpack.c.b16 %v535, %v531
    %v760 = vpack.c.b16 %v536, %v532
    %v761 = vpack.c.b16 %v541, %v537
    %v762 = vpack.c.b16 %v542, %v538
    %v763 = vpack.c.b16 %v543, %v539
    %v764 = vpack.c.b16 %v544, %v540
    %v765 = vpack.c.b16 %v549, %v545
    %v766 = vpack.c.b16 %v550, %v546
    %v767 = vpack.c.b16 %v551, %v547
    %v768 = vpack.c.b16 %v552, %v548
    %v769 = vpack.c.b16 %v557, %v553
    %v770 = vpack.c.b16 %v558, %v554
    %v771 = vpack.c.b16 %v559, %v555
    %v772 = vpack.c.b16 %v560, %v556
    %v773 = vpack.c.b16 %v565, %v561
    %v774 = vpack.c.b16 %v566, %v562
    %v775 = vpack.c.b16 %v567, %v563
    %v776 = vpack.c.b16 %v568, %v564
    %v777 = vpack.c.b16 %v573, %v569
    %v778 = vpack.c.b16 %v574, %v570
    %v779 = vpack.c.b16 %v575, %v571
    %v780 = vpack.c.b16 %v576, %v572
    %v781 = vpack.c.b16 %v581, %v577
    %v782 = vpack.c.b16 %v582, %v578
    %v783 = vpack.c.b16 %v583, %v579
    %v784 = vpack.c.b16 %v584, %v580
    %v785 = vpack.c.b16 %v589, %v585
    %v786 = vpack.c.b16 %v590, %v586
    %v787 = vpack.c.b16 %v591, %v587
    %v788 = vpack.c.b16 %v592, %v588
    %v789 = vpack.c.b16 %v597, %v593
    %v790 = vpack.c.b16 %v598, %v594
    %v791 = vpack.c.b16 %v599, %v595
    %v792 = vpack.c.b16 %v600, %v596
    %v793 = vpack.c.b16 %v605, %v601
    %v794 = vpack.c.b16 %v606, %v602
    %v795 = vpack.c.b16 %v607, %v603
    %v796 = vpack.c.b16 %v608, %v604
    %v797 = vpack.c.b16 %v613, %v609
    %v798 = vpack.c.b16 %v614, %v610
    %v799 = vpack.c.b16 %v615, %v611
    %v800 = vpack.c.b16 %v616, %v612
    %v801 = vpack.c.b16 %v621, %v617
    %v802 = vpack.c.b16 %v622, %v618
    %v803 = vpack.c.b16 %v623, %v619
    %v804 = vpack.c.b16 %v624, %v620
    %v805 = vpack.c.b16 %v629, %v625
    %v806 = vpack.c.b16 %v630, %v626
    %v807 = vpack.c.b16 %v631, %v627
    %v808 = vpack.c.b16 %v632, %v628
    %v809 = vpack.c.b16 %v637, %v633
    %v810 = vpack.c.b16 %v638, %v634
    %v811 = vpack.c.b16 %v639, %v635
    %v812 = vpack.c.b16 %v640, %v636
    %v813 = vpack.c.b16 %v645, %v641
    %v814 = vpack.c.b16 %v646, %v642
    %v815 = vpack.c.b16 %v647, %v643
    %v816 = vpack.c.b16 %v648, %v644
    %v817 = vpack.c.b16 %v653, %v649
    %v818 = vpack.c.b16 %v654, %v650
    %v819 = vpack.c.b16 %v655, %v651
    %v820 = vpack.c.b16 %v656, %v652
    %v821 = vpack.c.b16 %v661, %v657
    %v822 = vpack.c.b16 %v662, %v658
    %v823 = vpack.c.b16 %v663, %v659
    %v824 = vpack.c.b16 %v664, %v660
    %v825 = vpack.c.b16 %v669, %v665
    %v826 = vpack.c.b16 %v670, %v666
    %v827 = vpack.c.b16 %v671, %v667
    %v828 = vpack.c.b16 %v672, %v668
    %v829 = vpack.c.b16 %v677, %v673
    %v830 = vpack.c.b16 %v678, %v674
    %v831 = vpack.c.b16 %v679, %v675
    %v832 = vpack.c.b16 %v680, %v676
    %v833 = vpack.c.b16 %v685, %v681
    %v834 = vpack.c.b16 %v686, %v682
    %v835 = vpack.c.b16 %v687, %v683
    %v836 = vpack.c.b16 %v688, %v684
    %v837 = vpack.c.b16 %v693, %v689
    %v838 = vpack.c.b16 %v694, %v690
    %v839 = vpack.c.b16 %v695, %v691
    %v840 = vpack.c.b16 %v696, %v692
    %v841 = vpack.c.b16 %v701, %v697
    %v842 = vpack.c.b16 %v702, %v698
    %v843 = vpack.c.b16 %v703, %v699
    %v844 = vpack.c.b16 %v704, %v700
    %v845 = vpack.c.b16 %v709, %v705
    %v846 = vpack.c.b16 %v710, %v706
    %v847 = vpack.c.b16 %v711, %v707
    %v848 = vpack.c.b16 %v712, %v708
    %v849 = vpack.c.b16 %v717, %v713
    %v850 = vpack.c.b16 %v718, %v714
    %v851 = vpack.c.b16 %v719, %v715
    %v852 = vpack.c.b16 %v720, %v716
    %v853 = vpack.c.b16 %v725, %v721
    %v854 = vpack.c.b16 %v726, %v722
    %v855 = vpack.c.b16 %v727, %v723
    %v856 = vpack.c.b16 %v728, %v724
    %985 = vmatprep.subr.bf16.mxu0 %v730
    %986 = vmatpush1.bf16.msra.mxu0 %v729
    %987 = vmatprep.subr.bf16.mxu0 %v734
    %988 = vmatpush1.bf16.msra.mxu0 %v733
    %989 = vmatprep.subr.bf16.mxu0 %v738
    %990 = vmatpush1.bf16.msra.mxu0 %v737
    %991 = vmatprep.subr.bf16.mxu0 %v742
    %992 = vmatpush1.bf16.msra.mxu0 %v741
    %993 = vmatprep.subr.bf16.mxu0 %v746
    %994 = vmatpush1.bf16.msra.mxu0 %v745
    %995 = vmatprep.subr.bf16.mxu0 %v750
    %996 = vmatpush1.bf16.msra.mxu0 %v749
    %997 = vmatprep.subr.bf16.mxu0 %v754
    %998 = vmatpush1.bf16.msra.mxu0 %v753
    %999 = vmatprep.subr.bf16.mxu0 %v758
    %1000 = vmatpush1.bf16.msra.mxu0 %v757
    %1001 = vmatprep.subr.bf16.mxu0 %v762
    %1002 = vmatpush1.bf16.msra.mxu0 %v761
    %1003 = vmatprep.subr.bf16.mxu0 %v766
    %1004 = vmatpush1.bf16.msra.mxu0 %v765
    %1005 = vmatprep.subr.bf16.mxu0 %v770
    %1006 = vmatpush1.bf16.msra.mxu0 %v769
    %1007 = vmatprep.subr.bf16.mxu0 %v774
    %1008 = vmatpush1.bf16.msra.mxu0 %v773
    %1009 = vmatprep.subr.bf16.mxu0 %v778
    %1010 = vmatpush1.bf16.msra.mxu0 %v777
    %1011 = vmatprep.subr.bf16.mxu0 %v782
    %1012 = vmatpush1.bf16.msra.mxu0 %v781
    %1013 = vmatprep.subr.bf16.mxu0 %v786
    %1014 = vmatpush1.bf16.msra.mxu0 %v785
    %1015 = vmatprep.subr.bf16.mxu0 %v790
    %1016 = vmatpush1.bf16.msra.mxu0 %v789
    %1017 = vmatprep.mubr.bf16.mxu0 %v338
    %1018 = vmatmul.mubr.bf16.gmra.mrb[0].mxu0 %v331
    %v1019 = vpop.f32.mrb[0].mxu0
    %v1020 = vadd.f32 %v299, %v1019
    %v1021 = vpop.f32.mrb[0].mxu0
    %v1022 = vadd.f32 %v303, %v1021
    %v1023 = vpop.f32.mrb[0].mxu0
    %v1024 = vpop.f32.mrb[0].mxu0
    %1025 = vdwg.mxu0
    %1026 = vmatprep.subr.bf16.mxu0 %v794
    %1027 = vmatpush1.bf16.msra.mxu0 %v793
    %1028 = vmatprep.subr.bf16.mxu0 %v798
    %1029 = vmatpush1.bf16.msra.mxu0 %v797
    %1030 = vmatprep.subr.bf16.mxu0 %v802
    %1031 = vmatpush1.bf16.msra.mxu0 %v801
    %1032 = vmatprep.subr.bf16.mxu0 %v806
    %1033 = vmatpush1.bf16.msra.mxu0 %v805
    %1034 = vmatprep.subr.bf16.mxu0 %v810
    %1035 = vmatpush1.bf16.msra.mxu0 %v809
    %1036 = vmatprep.subr.bf16.mxu0 %v814
    %1037 = vmatpush1.bf16.msra.mxu0 %v813
    %1038 = vmatprep.subr.bf16.mxu0 %v818
    %1039 = vmatpush1.bf16.msra.mxu0 %v817
    %1040 = vmatprep.subr.bf16.mxu0 %v822
    %1041 = vmatpush1.bf16.msra.mxu0 %v821
    %1042 = vmatprep.subr.bf16.mxu0 %v826
    %1043 = vmatpush1.bf16.msra.mxu0 %v825
    %1044 = vmatprep.subr.bf16.mxu0 %v830
    %1045 = vmatpush1.bf16.msra.mxu0 %v829
    %1046 = vmatprep.subr.bf16.mxu0 %v834
    %1047 = vmatpush1.bf16.msra.mxu0 %v833
    %1048 = vmatprep.subr.bf16.mxu0 %v838
    %1049 = vmatpush1.bf16.msra.mxu0 %v837
    %1050 = vmatprep.subr.bf16.mxu0 %v842
    %1051 = vmatpush1.bf16.msra.mxu0 %v841
    %1052 = vmatprep.subr.bf16.mxu0 %v846
    %1053 = vmatpush1.bf16.msra.mxu0 %v845
    %1054 = vmatprep.subr.bf16.mxu0 %v850
    %1055 = vmatpush1.bf16.msra.mxu0 %v849
    %1056 = vmatprep.subr.bf16.mxu0 %v854
    %1057 = vmatpush1.bf16.msra.mxu0 %v853
    %1058 = vmatprep.mubr.bf16.mxu0 %v340
    %1059 = vmatmul.mubr.bf16.gmra.mrb[0].mxu0 %v339
    %v1060 = vpop.f32.mrb[0].mxu0
    %v1061 = vadd.f32 %v1020, %v1060
    %v1062 = vpop.f32.mrb[0].mxu0
    %v1063 = vadd.f32 %v1022, %v1062
    %v1064 = vpop.f32.mrb[0].mxu0
    %v1065 = vpop.f32.mrb[0].mxu0
    %1066 = vdwg.mxu0
    %1067 = vmatprep.subr.bf16.mxu0 %v732
    %1068 = vmatpush1.bf16.msra.mxu0 %v731
    %1069 = vmatprep.subr.bf16.mxu0 %v736
    %1070 = vmatpush1.bf16.msra.mxu0 %v735
    %1071 = vmatprep.subr.bf16.mxu0 %v740
    %1072 = vmatpush1.bf16.msra.mxu0 %v739
    %1073 = vmatprep.subr.bf16.mxu0 %v744
    %1074 = vmatpush1.bf16.msra.mxu0 %v743
    %1075 = vmatprep.subr.bf16.mxu0 %v748
    %1076 = vmatpush1.bf16.msra.mxu0 %v747
    %1077 = vmatprep.subr.bf16.mxu0 %v752
    %1078 = vmatpush1.bf16.msra.mxu0 %v751
    %1079 = vmatprep.subr.bf16.mxu0 %v756
    %1080 = vmatpush1.bf16.msra.mxu0 %v755
    %1081 = vmatprep.subr.bf16.mxu0 %v760
    %1082 = vmatpush1.bf16.msra.mxu0 %v759
    %1083 = vmatprep.subr.bf16.mxu0 %v764
    %1084 = vmatpush1.bf16.msra.mxu0 %v763
    %1085 = vmatprep.subr.bf16.mxu0 %v768
    %1086 = vmatpush1.bf16.msra.mxu0 %v767
    %1087 = vmatprep.subr.bf16.mxu0 %v772
    %1088 = vmatpush1.bf16.msra.mxu0 %v771
    %1089 = vmatprep.subr.bf16.mxu0 %v776
    %1090 = vmatpush1.bf16.msra.mxu0 %v775
    %1091 = vmatprep.subr.bf16.mxu0 %v780
    %1092 = vmatpush1.bf16.msra.mxu0 %v779
    %1093 = vmatprep.subr.bf16.mxu0 %v784
    %1094 = vmatpush1.bf16.msra.mxu0 %v783
    %1095 = vmatprep.subr.bf16.mxu0 %v788
    %1096 = vmatpush1.bf16.msra.mxu0 %v787
    %1097 = vmatprep.subr.bf16.mxu0 %v792
    %1098 = vmatpush1.bf16.msra.mxu0 %v791
    %1099 = vmatprep.mubr.bf16.mxu0 %v338
    %1100 = vmatmul.mubr.bf16.gmra.mrb[0].mxu0 %v331
    %v1101 = vpop.f32.mrb[0].mxu0
    %v1102 = vadd.f32 %v307, %v1101
    %v1103 = vpop.f32.mrb[0].mxu0
    %v1104 = vadd.f32 %v311, %v1103
    %v1105 = vpop.f32.mrb[0].mxu0
    %v1106 = vpop.f32.mrb[0].mxu0
    %1107 = vdwg.mxu0
    %1108 = vmatprep.subr.bf16.mxu0 %v796
    %1109 = vmatpush1.bf16.msra.mxu0 %v795
    %1110 = vmatprep.subr.bf16.mxu0 %v800
    %1111 = vmatpush1.bf16.msra.mxu0 %v799
    %1112 = vmatprep.subr.bf16.mxu0 %v804
    %1113 = vmatpush1.bf16.msra.mxu0 %v803
    %1114 = vmatprep.subr.bf16.mxu0 %v808
    %1115 = vmatpush1.bf16.msra.mxu0 %v807
    %1116 = vmatprep.subr.bf16.mxu0 %v812
    %1117 = vmatpush1.bf16.msra.mxu0 %v811
    %1118 = vmatprep.subr.bf16.mxu0 %v816
    %1119 = vmatpush1.bf16.msra.mxu0 %v815
    %1120 = vmatprep.subr.bf16.mxu0 %v820
    %1121 = vmatpush1.bf16.msra.mxu0 %v819
    %1122 = vmatprep.subr.bf16.mxu0 %v824
    %1123 = vmatpush1.bf16.msra.mxu0 %v823
    %1124 = vmatprep.subr.bf16.mxu0 %v828
    %1125 = vmatpush1.bf16.msra.mxu0 %v827
    %1126 = vmatprep.subr.bf16.mxu0 %v832
    %1127 = vmatpush1.bf16.msra.mxu0 %v831
    %1128 = vmatprep.subr.bf16.mxu0 %v836
    %1129 = vmatpush1.bf16.msra.mxu0 %v835
    %1130 = vmatprep.subr.bf16.mxu0 %v840
    %1131 = vmatpush1.bf16.msra.mxu0 %v839
    %1132 = vmatprep.subr.bf16.mxu0 %v844
    %1133 = vmatpush1.bf16.msra.mxu0 %v843
    %1134 = vmatprep.subr.bf16.mxu0 %v848
    %1135 = vmatpush1.bf16.msra.mxu0 %v847
    %1136 = vmatprep.subr.bf16.mxu0 %v852
    %1137 = vmatpush1.bf16.msra.mxu0 %v851
    %1138 = vmatprep.subr.bf16.mxu0 %v856
    %1139 = vmatpush1.bf16.msra.mxu0 %v855
    %1140 = vmatprep.mubr.bf16.mxu0 %v340
    %1141 = vmatmul.mubr.bf16.gmra.mrb[0].mxu0 %v339
    %v1142 = vpop.f32.mrb[0].mxu0
    %v1143 = vadd.f32 %v1102, %v1142
    %v1144 = vpop.f32.mrb[0].mxu0
    %v1145 = vadd.f32 %v1104, %v1144
    %v1146 = vpop.f32.mrb[0].mxu0
    %v1147 = vpop.f32.mrb[0].mxu0
    %1148 = vdwg.mxu0
    %v1149 = vmax.f32 %v1061, 0.0
    %v1150 = vmax.f32 %v1063, 0.0
    %v1151 = vmax.f32 %v1143, 0.0
    %v1152 = vmax.f32 %v1145, 0.0
    %v1153 = vpack.c.bf16 %v1149, %v1149
    %v1154 = vpack.c.bf16 %v1150, %v1150
    %v1155 = vpack.c.bf16 %v1151, %v1151
    %v1156 = vpack.c.bf16 %v1152, %v1152
    %v1157 = vld [vmem:[#allocation9] sm:$0xff]
    %v1158 = vld [vmem:[#allocation9 + $0x8] sm:$0xff]
    %v1159 = vld [vmem:[#allocation9 + $0x10] sm:$0xff]
    %v1160 = vld [vmem:[#allocation9 + $0x18] sm:$0xff]
    %v1161 = vld [vmem:[#allocation9 + $0x20] sm:$0xff]
    %v1162 = vld [vmem:[#allocation9 + $0x28] sm:$0xff]
    %v1163 = vld [vmem:[#allocation9 + $0x30] sm:$0xff]
    %v1164 = vld [vmem:[#allocation9 + $0x38] sm:$0xff]
    %v1165 = vld [vmem:[#allocation9 + $0x40] sm:$0xff]
    %v1166 = vld [vmem:[#allocation9 + $0x48] sm:$0xff]
    %v1167 = vld [vmem:[#allocation9 + $0x50] sm:$0xff]
    %v1168 = vld [vmem:[#allocation9 + $0x58] sm:$0xff]
    %v1169 = vld [vmem:[#allocation9 + $0x60] sm:$0xff]
    %v1170 = vld [vmem:[#allocation9 + $0x68] sm:$0xff]
    %v1171 = vld [vmem:[#allocation9 + $0x70] sm:$0xff]
    %v1172 = vld [vmem:[#allocation9 + $0x78] sm:$0xff]
    %v1173 = vld [vmem:[#allocation9 + $0x80] sm:$0xff]
    %v1174 = vld [vmem:[#allocation9 + $0x88] sm:$0xff]
    %v1175 = vld [vmem:[#allocation9 + $0x90] sm:$0xff]
    %v1176 = vld [vmem:[#allocation9 + $0x98] sm:$0xff]
    %v1177 = vld [vmem:[#allocation9 + $0xa0] sm:$0xff]
    %v1178 = vld [vmem:[#allocation9 + $0xa8] sm:$0xff]
    %v1179 = vld [vmem:[#allocation9 + $0xb0] sm:$0xff]
    %v1180 = vld [vmem:[#allocation9 + $0xb8] sm:$0xff]
    %v1181 = vld [vmem:[#allocation9 + $0xc0] sm:$0xff]
    %v1182 = vld [vmem:[#allocation9 + $0xc8] sm:$0xff]
    %v1183 = vld [vmem:[#allocation9 + $0xd0] sm:$0xff]
    %v1184 = vld [vmem:[#allocation9 + $0xd8] sm:$0xff]
    %v1185 = vld [vmem:[#allocation9 + $0xe0] sm:$0xff]
    %v1186 = vld [vmem:[#allocation9 + $0xe8] sm:$0xff]
    %v1187 = vld [vmem:[#allocation9 + $0xf0] sm:$0xff]
    %v1188 = vld [vmem:[#allocation9 + $0xf8] sm:$0xff]
    %v1189 = vld [vmem:[#allocation9 + $0x100] sm:$0xff]
    %v1190 = vld [vmem:[#allocation9 + $0x108] sm:$0xff]
    %v1191 = vld [vmem:[#allocation9 + $0x110] sm:$0xff]
    %v1192 = vld [vmem:[#allocation9 + $0x118] sm:$0xff]
    %v1193 = vld [vmem:[#allocation9 + $0x120] sm:$0xff]
    %v1194 = vld [vmem:[#allocation9 + $0x128] sm:$0xff]
    %v1195 = vld [vmem:[#allocation9 + $0x130] sm:$0xff]
    %v1196 = vld [vmem:[#allocation9 + $0x138] sm:$0xff]
    %v1197 = vld [vmem:[#allocation9 + $0x140] sm:$0xff]
    %v1198 = vld [vmem:[#allocation9 + $0x148] sm:$0xff]
    %v1199 = vld [vmem:[#allocation9 + $0x150] sm:$0xff]
    %v1200 = vld [vmem:[#allocation9 + $0x158] sm:$0xff]
    %v1201 = vld [vmem:[#allocation9 + $0x160] sm:$0xff]
    %v1202 = vld [vmem:[#allocation9 + $0x168] sm:$0xff]
    %v1203 = vld [vmem:[#allocation9 + $0x170] sm:$0xff]
    %v1204 = vld [vmem:[#allocation9 + $0x178] sm:$0xff]
    %v1205 = vld [vmem:[#allocation9 + $0x180] sm:$0xff]
    %v1206 = vld [vmem:[#allocation9 + $0x188] sm:$0xff]
    %v1207 = vld [vmem:[#allocation9 + $0x190] sm:$0xff]
    %v1208 = vld [vmem:[#allocation9 + $0x198] sm:$0xff]
    %v1209 = vld [vmem:[#allocation9 + $0x1a0] sm:$0xff]
    %v1210 = vld [vmem:[#allocation9 + $0x1a8] sm:$0xff]
    %v1211 = vld [vmem:[#allocation9 + $0x1b0] sm:$0xff]
    %v1212 = vld [vmem:[#allocation9 + $0x1b8] sm:$0xff]
    %v1213 = vld [vmem:[#allocation9 + $0x1c0] sm:$0xff]
    %v1214 = vld [vmem:[#allocation9 + $0x1c8] sm:$0xff]
    %v1215 = vld [vmem:[#allocation9 + $0x1d0] sm:$0xff]
    %v1216 = vld [vmem:[#allocation9 + $0x1d8] sm:$0xff]
    %v1217 = vld [vmem:[#allocation9 + $0x1e0] sm:$0xff]
    %v1218 = vld [vmem:[#allocation9 + $0x1e8] sm:$0xff]
    %v1219 = vld [vmem:[#allocation9 + $0x1f0] sm:$0xff]
    %v1220 = vld [vmem:[#allocation9 + $0x1f8] sm:$0xff]
    %v1221 = vld [vmem:[#allocation9 + $0x200] sm:$0xff]
    %v1222 = vld [vmem:[#allocation9 + $0x208] sm:$0xff]
    %v1223 = vld [vmem:[#allocation9 + $0x210] sm:$0xff]
    %v1224 = vld [vmem:[#allocation9 + $0x218] sm:$0xff]
    %v1225 = vld [vmem:[#allocation9 + $0x220] sm:$0xff]
    %v1226 = vld [vmem:[#allocation9 + $0x228] sm:$0xff]
    %v1227 = vld [vmem:[#allocation9 + $0x230] sm:$0xff]
    %v1228 = vld [vmem:[#allocation9 + $0x238] sm:$0xff]
    %v1229 = vld [vmem:[#allocation9 + $0x240] sm:$0xff]
    %v1230 = vld [vmem:[#allocation9 + $0x248] sm:$0xff]
    %v1231 = vld [vmem:[#allocation9 + $0x250] sm:$0xff]
    %v1232 = vld [vmem:[#allocation9 + $0x258] sm:$0xff]
    %v1233 = vld [vmem:[#allocation9 + $0x260] sm:$0xff]
    %v1234 = vld [vmem:[#allocation9 + $0x268] sm:$0xff]
    %v1235 = vld [vmem:[#allocation9 + $0x270] sm:$0xff]
    %v1236 = vld [vmem:[#allocation9 + $0x278] sm:$0xff]
    %v1237 = vld [vmem:[#allocation9 + $0x280] sm:$0xff]
    %v1238 = vld [vmem:[#allocation9 + $0x288] sm:$0xff]
    %v1239 = vld [vmem:[#allocation9 + $0x290] sm:$0xff]
    %v1240 = vld [vmem:[#allocation9 + $0x298] sm:$0xff]
    %v1241 = vld [vmem:[#allocation9 + $0x2a0] sm:$0xff]
    %v1242 = vld [vmem:[#allocation9 + $0x2a8] sm:$0xff]
    %v1243 = vld [vmem:[#allocation9 + $0x2b0] sm:$0xff]
    %v1244 = vld [vmem:[#allocation9 + $0x2b8] sm:$0xff]
    %v1245 = vld [vmem:[#allocation9 + $0x2c0] sm:$0xff]
    %v1246 = vld [vmem:[#allocation9 + $0x2c8] sm:$0xff]
    %v1247 = vld [vmem:[#allocation9 + $0x2d0] sm:$0xff]
    %v1248 = vld [vmem:[#allocation9 + $0x2d8] sm:$0xff]
    %v1249 = vld [vmem:[#allocation9 + $0x2e0] sm:$0xff]
    %v1250 = vld [vmem:[#allocation9 + $0x2e8] sm:$0xff]
    %v1251 = vld [vmem:[#allocation9 + $0x2f0] sm:$0xff]
    %v1252 = vld [vmem:[#allocation9 + $0x2f8] sm:$0xff]
    %v1253 = vld [vmem:[#allocation9 + $0x300] sm:$0xff]
    %v1254 = vld [vmem:[#allocation9 + $0x308] sm:$0xff]
    %v1255 = vld [vmem:[#allocation9 + $0x310] sm:$0xff]
    %v1256 = vld [vmem:[#allocation9 + $0x318] sm:$0xff]
    %v1257 = vld [vmem:[#allocation9 + $0x320] sm:$0xff]
    %v1258 = vld [vmem:[#allocation9 + $0x328] sm:$0xff]
    %v1259 = vld [vmem:[#allocation9 + $0x330] sm:$0xff]
    %v1260 = vld [vmem:[#allocation9 + $0x338] sm:$0xff]
    %v1261 = vld [vmem:[#allocation9 + $0x340] sm:$0xff]
    %v1262 = vld [vmem:[#allocation9 + $0x348] sm:$0xff]
    %v1263 = vld [vmem:[#allocation9 + $0x350] sm:$0xff]
    %v1264 = vld [vmem:[#allocation9 + $0x358] sm:$0xff]
    %v1265 = vld [vmem:[#allocation9 + $0x360] sm:$0xff]
    %v1266 = vld [vmem:[#allocation9 + $0x368] sm:$0xff]
    %v1267 = vld [vmem:[#allocation9 + $0x370] sm:$0xff]
    %v1268 = vld [vmem:[#allocation9 + $0x378] sm:$0xff]
    %v1269 = vld [vmem:[#allocation9 + $0x380] sm:$0xff]
    %v1270 = vld [vmem:[#allocation9 + $0x388] sm:$0xff]
    %v1271 = vld [vmem:[#allocation9 + $0x390] sm:$0xff]
    %v1272 = vld [vmem:[#allocation9 + $0x398] sm:$0xff]
    %v1273 = vld [vmem:[#allocation9 + $0x3a0] sm:$0xff]
    %v1274 = vld [vmem:[#allocation9 + $0x3a8] sm:$0xff]
    %v1275 = vld [vmem:[#allocation9 + $0x3b0] sm:$0xff]
    %v1276 = vld [vmem:[#allocation9 + $0x3b8] sm:$0xff]
    %v1277 = vld [vmem:[#allocation9 + $0x3c0] sm:$0xff]
    %v1278 = vld [vmem:[#allocation9 + $0x3c8] sm:$0xff]
    %v1279 = vld [vmem:[#allocation9 + $0x3d0] sm:$0xff]
    %v1280 = vld [vmem:[#allocation9 + $0x3d8] sm:$0xff]
    %v1281 = vld [vmem:[#allocation9 + $0x3e0] sm:$0xff]
    %v1282 = vld [vmem:[#allocation9 + $0x3e8] sm:$0xff]
    %v1283 = vld [vmem:[#allocation9 + $0x3f0] sm:$0xff]
    %v1284 = vld [vmem:[#allocation9 + $0x3f8] sm:$0xff]
    %v1285 = vld [vmem:[#allocation9 + $0x400] sm:$0xff]
    %v1286 = vld [vmem:[#allocation9 + $0x408] sm:$0xff]
    %v1287 = vld [vmem:[#allocation9 + $0x410] sm:$0xff]
    %v1288 = vld [vmem:[#allocation9 + $0x418] sm:$0xff]
    %v1289 = vld [vmem:[#allocation9 + $0x420] sm:$0xff]
    %v1290 = vld [vmem:[#allocation9 + $0x428] sm:$0xff]
    %v1291 = vld [vmem:[#allocation9 + $0x430] sm:$0xff]
    %v1292 = vld [vmem:[#allocation9 + $0x438] sm:$0xff]
    %v1293 = vld [vmem:[#allocation9 + $0x440] sm:$0xff]
    %v1294 = vld [vmem:[#allocation9 + $0x448] sm:$0xff]
    %v1295 = vld [vmem:[#allocation9 + $0x450] sm:$0xff]
    %v1296 = vld [vmem:[#allocation9 + $0x458] sm:$0xff]
    %v1297 = vld [vmem:[#allocation9 + $0x460] sm:$0xff]
    %v1298 = vld [vmem:[#allocation9 + $0x468] sm:$0xff]
    %v1299 = vld [vmem:[#allocation9 + $0x470] sm:$0xff]
    %v1300 = vld [vmem:[#allocation9 + $0x478] sm:$0xff]
    %v1301 = vld [vmem:[#allocation9 + $0x480] sm:$0xff]
    %v1302 = vld [vmem:[#allocation9 + $0x488] sm:$0xff]
    %v1303 = vld [vmem:[#allocation9 + $0x490] sm:$0xff]
    %v1304 = vld [vmem:[#allocation9 + $0x498] sm:$0xff]
    %v1305 = vld [vmem:[#allocation9 + $0x4a0] sm:$0xff]
    %v1306 = vld [vmem:[#allocation9 + $0x4a8] sm:$0xff]
    %v1307 = vld [vmem:[#allocation9 + $0x4b0] sm:$0xff]
    %v1308 = vld [vmem:[#allocation9 + $0x4b8] sm:$0xff]
    %v1309 = vld [vmem:[#allocation9 + $0x4c0] sm:$0xff]
    %v1310 = vld [vmem:[#allocation9 + $0x4c8] sm:$0xff]
    %v1311 = vld [vmem:[#allocation9 + $0x4d0] sm:$0xff]
    %v1312 = vld [vmem:[#allocation9 + $0x4d8] sm:$0xff]
    %v1313 = vld [vmem:[#allocation9 + $0x4e0] sm:$0xff]
    %v1314 = vld [vmem:[#allocation9 + $0x4e8] sm:$0xff]
    %v1315 = vld [vmem:[#allocation9 + $0x4f0] sm:$0xff]
    %v1316 = vld [vmem:[#allocation9 + $0x4f8] sm:$0xff]
    %v1317 = vld [vmem:[#allocation9 + $0x500] sm:$0xff]
    %v1318 = vld [vmem:[#allocation9 + $0x508] sm:$0xff]
    %v1319 = vld [vmem:[#allocation9 + $0x510] sm:$0xff]
    %v1320 = vld [vmem:[#allocation9 + $0x518] sm:$0xff]
    %v1321 = vld [vmem:[#allocation9 + $0x520] sm:$0xff]
    %v1322 = vld [vmem:[#allocation9 + $0x528] sm:$0xff]
    %v1323 = vld [vmem:[#allocation9 + $0x530] sm:$0xff]
    %v1324 = vld [vmem:[#allocation9 + $0x538] sm:$0xff]
    %v1325 = vld [vmem:[#allocation9 + $0x540] sm:$0xff]
    %v1326 = vld [vmem:[#allocation9 + $0x548] sm:$0xff]
    %v1327 = vld [vmem:[#allocation9 + $0x550] sm:$0xff]
    %v1328 = vld [vmem:[#allocation9 + $0x558] sm:$0xff]
    %v1329 = vld [vmem:[#allocation9 + $0x560] sm:$0xff]
    %v1330 = vld [vmem:[#allocation9 + $0x568] sm:$0xff]
    %v1331 = vld [vmem:[#allocation9 + $0x570] sm:$0xff]
    %v1332 = vld [vmem:[#allocation9 + $0x578] sm:$0xff]
    %v1333 = vld [vmem:[#allocation9 + $0x580] sm:$0xff]
    %v1334 = vld [vmem:[#allocation9 + $0x588] sm:$0xff]
    %v1335 = vld [vmem:[#allocation9 + $0x590] sm:$0xff]
    %v1336 = vld [vmem:[#allocation9 + $0x598] sm:$0xff]
    %v1337 = vld [vmem:[#allocation9 + $0x5a0] sm:$0xff]
    %v1338 = vld [vmem:[#allocation9 + $0x5a8] sm:$0xff]
    %v1339 = vld [vmem:[#allocation9 + $0x5b0] sm:$0xff]
    %v1340 = vld [vmem:[#allocation9 + $0x5b8] sm:$0xff]
    %v1341 = vld [vmem:[#allocation9 + $0x5c0] sm:$0xff]
    %v1342 = vld [vmem:[#allocation9 + $0x5c8] sm:$0xff]
    %v1343 = vld [vmem:[#allocation9 + $0x5d0] sm:$0xff]
    %v1344 = vld [vmem:[#allocation9 + $0x5d8] sm:$0xff]
    %v1345 = vld [vmem:[#allocation9 + $0x5e0] sm:$0xff]
    %v1346 = vld [vmem:[#allocation9 + $0x5e8] sm:$0xff]
    %v1347 = vld [vmem:[#allocation9 + $0x5f0] sm:$0xff]
    %v1348 = vld [vmem:[#allocation9 + $0x5f8] sm:$0xff]
    %v1349 = vld [vmem:[#allocation9 + $0x600] sm:$0xff]
    %v1350 = vld [vmem:[#allocation9 + $0x608] sm:$0xff]
    %v1351 = vld [vmem:[#allocation9 + $0x610] sm:$0xff]
    %v1352 = vld [vmem:[#allocation9 + $0x618] sm:$0xff]
    %v1353 = vld [vmem:[#allocation9 + $0x620] sm:$0xff]
    %v1354 = vld [vmem:[#allocation9 + $0x628] sm:$0xff]
    %v1355 = vld [vmem:[#allocation9 + $0x630] sm:$0xff]
    %v1356 = vld [vmem:[#allocation9 + $0x638] sm:$0xff]
    %v1357 = vld [vmem:[#allocation9 + $0x640] sm:$0xff]
    %v1358 = vld [vmem:[#allocation9 + $0x648] sm:$0xff]
    %v1359 = vld [vmem:[#allocation9 + $0x650] sm:$0xff]
    %v1360 = vld [vmem:[#allocation9 + $0x658] sm:$0xff]
    %v1361 = vld [vmem:[#allocation9 + $0x660] sm:$0xff]
    %v1362 = vld [vmem:[#allocation9 + $0x668] sm:$0xff]
    %v1363 = vld [vmem:[#allocation9 + $0x670] sm:$0xff]
    %v1364 = vld [vmem:[#allocation9 + $0x678] sm:$0xff]
    %v1365 = vld [vmem:[#allocation9 + $0x680] sm:$0xff]
    %v1366 = vld [vmem:[#allocation9 + $0x688] sm:$0xff]
    %v1367 = vld [vmem:[#allocation9 + $0x690] sm:$0xff]
    %v1368 = vld [vmem:[#allocation9 + $0x698] sm:$0xff]
    %v1369 = vld [vmem:[#allocation9 + $0x6a0] sm:$0xff]
    %v1370 = vld [vmem:[#allocation9 + $0x6a8] sm:$0xff]
    %v1371 = vld [vmem:[#allocation9 + $0x6b0] sm:$0xff]
    %v1372 = vld [vmem:[#allocation9 + $0x6b8] sm:$0xff]
    %v1373 = vld [vmem:[#allocation9 + $0x6c0] sm:$0xff]
    %v1374 = vld [vmem:[#allocation9 + $0x6c8] sm:$0xff]
    %v1375 = vld [vmem:[#allocation9 + $0x6d0] sm:$0xff]
    %v1376 = vld [vmem:[#allocation9 + $0x6d8] sm:$0xff]
    %v1377 = vld [vmem:[#allocation9 + $0x6e0] sm:$0xff]
    %v1378 = vld [vmem:[#allocation9 + $0x6e8] sm:$0xff]
    %v1379 = vld [vmem:[#allocation9 + $0x6f0] sm:$0xff]
    %v1380 = vld [vmem:[#allocation9 + $0x6f8] sm:$0xff]
    %v1381 = vld [vmem:[#allocation9 + $0x700] sm:$0xff]
    %v1382 = vld [vmem:[#allocation9 + $0x708] sm:$0xff]
    %v1383 = vld [vmem:[#allocation9 + $0x710] sm:$0xff]
    %v1384 = vld [vmem:[#allocation9 + $0x718] sm:$0xff]
    %v1385 = vld [vmem:[#allocation9 + $0x720] sm:$0xff]
    %v1386 = vld [vmem:[#allocation9 + $0x728] sm:$0xff]
    %v1387 = vld [vmem:[#allocation9 + $0x730] sm:$0xff]
    %v1388 = vld [vmem:[#allocation9 + $0x738] sm:$0xff]
    %v1389 = vld [vmem:[#allocation9 + $0x740] sm:$0xff]
    %v1390 = vld [vmem:[#allocation9 + $0x748] sm:$0xff]
    %v1391 = vld [vmem:[#allocation9 + $0x750] sm:$0xff]
    %v1392 = vld [vmem:[#allocation9 + $0x758] sm:$0xff]
    %v1393 = vld [vmem:[#allocation9 + $0x760] sm:$0xff]
    %v1394 = vld [vmem:[#allocation9 + $0x768] sm:$0xff]
    %v1395 = vld [vmem:[#allocation9 + $0x770] sm:$0xff]
    %v1396 = vld [vmem:[#allocation9 + $0x778] sm:$0xff]
    %v1397 = vld [vmem:[#allocation9 + $0x780] sm:$0xff]
    %v1398 = vld [vmem:[#allocation9 + $0x788] sm:$0xff]
    %v1399 = vld [vmem:[#allocation9 + $0x790] sm:$0xff]
    %v1400 = vld [vmem:[#allocation9 + $0x798] sm:$0xff]
    %v1401 = vld [vmem:[#allocation9 + $0x7a0] sm:$0xff]
    %v1402 = vld [vmem:[#allocation9 + $0x7a8] sm:$0xff]
    %v1403 = vld [vmem:[#allocation9 + $0x7b0] sm:$0xff]
    %v1404 = vld [vmem:[#allocation9 + $0x7b8] sm:$0xff]
    %v1405 = vld [vmem:[#allocation9 + $0x7c0] sm:$0xff]
    %v1406 = vld [vmem:[#allocation9 + $0x7c8] sm:$0xff]
    %v1407 = vld [vmem:[#allocation9 + $0x7d0] sm:$0xff]
    %v1408 = vld [vmem:[#allocation9 + $0x7d8] sm:$0xff]
    %v1409 = vld [vmem:[#allocation9 + $0x7e0] sm:$0xff]
    %v1410 = vld [vmem:[#allocation9 + $0x7e8] sm:$0xff]
    %v1411 = vld [vmem:[#allocation9 + $0x7f0] sm:$0xff]
    %v1412 = vld [vmem:[#allocation9 + $0x7f8] sm:$0xff]
    %v1413 = vld [vmem:[#allocation10] sm:$0xff]
    %v1415 = vlaneseq
    %v1416 = vshrl.u32 %v1415, 7
    %v1417 = vsub.s32 0, %v1416
    %v1418 = vrot.slane %v1413, %v1417
    %v1419 = vlaneseq
    %v1420 = vshrl.u32 %v1419, 7
    %v1421 = vsub.s32 1, %v1420
    %v1422 = vrot.slane %v1413, %v1421
    %v1423 = vlaneseq
    %v1424 = vshrl.u32 %v1423, 7
    %v1425 = vsub.s32 2, %v1424
    %v1426 = vrot.slane %v1413, %v1425
    %v1427 = vlaneseq
    %v1428 = vshrl.u32 %v1427, 7
    %v1429 = vsub.s32 3, %v1428
    %v1430 = vrot.slane %v1413, %v1429
    %v1431 = vlaneseq
    %v1432 = vshrl.u32 %v1431, 7
    %v1433 = vsub.s32 4, %v1432
    %v1434 = vrot.slane %v1413, %v1433
    %v1435 = vlaneseq
    %v1436 = vshrl.u32 %v1435, 7
    %v1437 = vsub.s32 5, %v1436
    %v1438 = vrot.slane %v1413, %v1437
    %v1439 = vlaneseq
    %v1440 = vshrl.u32 %v1439, 7
    %v1441 = vsub.s32 6, %v1440
    %v1442 = vrot.slane %v1413, %v1441
    %v1443 = vlaneseq
    %v1444 = vshrl.u32 %v1443, 7
    %v1445 = vsub.s32 7, %v1444
    %v1446 = vrot.slane %v1413, %v1445
    %v1711 = vunpack.c.l.b16 %v1157
    %v1712 = vunpack.c.h.b16 %v1157
    %v1713 = vunpack.c.l.b16 %v1158
    %v1714 = vunpack.c.h.b16 %v1158
    %v1715 = vunpack.c.l.b16 %v1159
    %v1716 = vunpack.c.h.b16 %v1159
    %v1717 = vunpack.c.l.b16 %v1160
    %v1718 = vunpack.c.h.b16 %v1160
    %v1719 = vunpack.c.l.b16 %v1161
    %v1720 = vunpack.c.h.b16 %v1161
    %v1721 = vunpack.c.l.b16 %v1162
    %v1722 = vunpack.c.h.b16 %v1162
    %v1723 = vunpack.c.l.b16 %v1163
    %v1724 = vunpack.c.h.b16 %v1163
    %v1725 = vunpack.c.l.b16 %v1164
    %v1726 = vunpack.c.h.b16 %v1164
    %v1727 = vunpack.c.l.b16 %v1165
    %v1728 = vunpack.c.h.b16 %v1165
    %v1729 = vunpack.c.l.b16 %v1166
    %v1730 = vunpack.c.h.b16 %v1166
    %v1731 = vunpack.c.l.b16 %v1167
    %v1732 = vunpack.c.h.b16 %v1167
    %v1733 = vunpack.c.l.b16 %v1168
    %v1734 = vunpack.c.h.b16 %v1168
    %v1735 = vunpack.c.l.b16 %v1169
    %v1736 = vunpack.c.h.b16 %v1169
    %v1737 = vunpack.c.l.b16 %v1170
    %v1738 = vunpack.c.h.b16 %v1170
    %v1739 = vunpack.c.l.b16 %v1171
    %v1740 = vunpack.c.h.b16 %v1171
    %v1741 = vunpack.c.l.b16 %v1172
    %v1742 = vunpack.c.h.b16 %v1172
    %v1743 = vunpack.c.l.b16 %v1173
    %v1744 = vunpack.c.h.b16 %v1173
    %v1745 = vunpack.c.l.b16 %v1174
    %v1746 = vunpack.c.h.b16 %v1174
    %v1747 = vunpack.c.l.b16 %v1175
    %v1748 = vunpack.c.h.b16 %v1175
    %v1749 = vunpack.c.l.b16 %v1176
    %v1750 = vunpack.c.h.b16 %v1176
    %v1751 = vunpack.c.l.b16 %v1177
    %v1752 = vunpack.c.h.b16 %v1177
    %v1753 = vunpack.c.l.b16 %v1178
    %v1754 = vunpack.c.h.b16 %v1178
    %v1755 = vunpack.c.l.b16 %v1179
    %v1756 = vunpack.c.h.b16 %v1179
    %v1757 = vunpack.c.l.b16 %v1180
    %v1758 = vunpack.c.h.b16 %v1180
    %v1759 = vunpack.c.l.b16 %v1181
    %v1760 = vunpack.c.h.b16 %v1181
    %v1761 = vunpack.c.l.b16 %v1182
    %v1762 = vunpack.c.h.b16 %v1182
    %v1763 = vunpack.c.l.b16 %v1183
    %v1764 = vunpack.c.h.b16 %v1183
    %v1765 = vunpack.c.l.b16 %v1184
    %v1766 = vunpack.c.h.b16 %v1184
    %v1767 = vunpack.c.l.b16 %v1185
    %v1768 = vunpack.c.h.b16 %v1185
    %v1769 = vunpack.c.l.b16 %v1186
    %v1770 = vunpack.c.h.b16 %v1186
    %v1771 = vunpack.c.l.b16 %v1187
    %v1772 = vunpack.c.h.b16 %v1187
    %v1773 = vunpack.c.l.b16 %v1188
    %v1774 = vunpack.c.h.b16 %v1188
    %v1775 = vunpack.c.l.b16 %v1189
    %v1776 = vunpack.c.h.b16 %v1189
    %v1777 = vunpack.c.l.b16 %v1190
    %v1778 = vunpack.c.h.b16 %v1190
    %v1779 = vunpack.c.l.b16 %v1191
    %v1780 = vunpack.c.h.b16 %v1191
    %v1781 = vunpack.c.l.b16 %v1192
    %v1782 = vunpack.c.h.b16 %v1192
    %v1783 = vunpack.c.l.b16 %v1193
    %v1784 = vunpack.c.h.b16 %v1193
    %v1785 = vunpack.c.l.b16 %v1194
    %v1786 = vunpack.c.h.b16 %v1194
    %v1787 = vunpack.c.l.b16 %v1195
    %v1788 = vunpack.c.h.b16 %v1195
    %v1789 = vunpack.c.l.b16 %v1196
    %v1790 = vunpack.c.h.b16 %v1196
    %v1791 = vunpack.c.l.b16 %v1197
    %v1792 = vunpack.c.h.b16 %v1197
    %v1793 = vunpack.c.l.b16 %v1198
    %v1794 = vunpack.c.h.b16 %v1198
    %v1795 = vunpack.c.l.b16 %v1199
    %v1796 = vunpack.c.h.b16 %v1199
    %v1797 = vunpack.c.l.b16 %v1200
    %v1798 = vunpack.c.h.b16 %v1200
    %v1799 = vunpack.c.l.b16 %v1201
    %v1800 = vunpack.c.h.b16 %v1201
    %v1801 = vunpack.c.l.b16 %v1202
    %v1802 = vunpack.c.h.b16 %v1202
    %v1803 = vunpack.c.l.b16 %v1203
    %v1804 = vunpack.c.h.b16 %v1203
    %v1805 = vunpack.c.l.b16 %v1204
    %v1806 = vunpack.c.h.b16 %v1204
    %v1807 = vunpack.c.l.b16 %v1205
    %v1808 = vunpack.c.h.b16 %v1205
    %v1809 = vunpack.c.l.b16 %v1206
    %v1810 = vunpack.c.h.b16 %v1206
    %v1811 = vunpack.c.l.b16 %v1207
    %v1812 = vunpack.c.h.b16 %v1207
    %v1813 = vunpack.c.l.b16 %v1208
    %v1814 = vunpack.c.h.b16 %v1208
    %v1815 = vunpack.c.l.b16 %v1209
    %v1816 = vunpack.c.h.b16 %v1209
    %v1817 = vunpack.c.l.b16 %v1210
    %v1818 = vunpack.c.h.b16 %v1210
    %v1819 = vunpack.c.l.b16 %v1211
    %v1820 = vunpack.c.h.b16 %v1211
    %v1821 = vunpack.c.l.b16 %v1212
    %v1822 = vunpack.c.h.b16 %v1212
    %v1823 = vunpack.c.l.b16 %v1213
    %v1824 = vunpack.c.h.b16 %v1213
    %v1825 = vunpack.c.l.b16 %v1214
    %v1826 = vunpack.c.h.b16 %v1214
    %v1827 = vunpack.c.l.b16 %v1215
    %v1828 = vunpack.c.h.b16 %v1215
    %v1829 = vunpack.c.l.b16 %v1216
    %v1830 = vunpack.c.h.b16 %v1216
    %v1831 = vunpack.c.l.b16 %v1217
    %v1832 = vunpack.c.h.b16 %v1217
    %v1833 = vunpack.c.l.b16 %v1218
    %v1834 = vunpack.c.h.b16 %v1218
    %v1835 = vunpack.c.l.b16 %v1219
    %v1836 = vunpack.c.h.b16 %v1219
    %v1837 = vunpack.c.l.b16 %v1220
    %v1838 = vunpack.c.h.b16 %v1220
    %v1839 = vunpack.c.l.b16 %v1221
    %v1840 = vunpack.c.h.b16 %v1221
    %v1841 = vunpack.c.l.b16 %v1222
    %v1842 = vunpack.c.h.b16 %v1222
    %v1843 = vunpack.c.l.b16 %v1223
    %v1844 = vunpack.c.h.b16 %v1223
    %v1845 = vunpack.c.l.b16 %v1224
    %v1846 = vunpack.c.h.b16 %v1224
    %v1847 = vunpack.c.l.b16 %v1225
    %v1848 = vunpack.c.h.b16 %v1225
    %v1849 = vunpack.c.l.b16 %v1226
    %v1850 = vunpack.c.h.b16 %v1226
    %v1851 = vunpack.c.l.b16 %v1227
    %v1852 = vunpack.c.h.b16 %v1227
    %v1853 = vunpack.c.l.b16 %v1228
    %v1854 = vunpack.c.h.b16 %v1228
    %v1855 = vunpack.c.l.b16 %v1229
    %v1856 = vunpack.c.h.b16 %v1229
    %v1857 = vunpack.c.l.b16 %v1230
    %v1858 = vunpack.c.h.b16 %v1230
    %v1859 = vunpack.c.l.b16 %v1231
    %v1860 = vunpack.c.h.b16 %v1231
    %v1861 = vunpack.c.l.b16 %v1232
    %v1862 = vunpack.c.h.b16 %v1232
    %v1863 = vunpack.c.l.b16 %v1233
    %v1864 = vunpack.c.h.b16 %v1233
    %v1865 = vunpack.c.l.b16 %v1234
    %v1866 = vunpack.c.h.b16 %v1234
    %v1867 = vunpack.c.l.b16 %v1235
    %v1868 = vunpack.c.h.b16 %v1235
    %v1869 = vunpack.c.l.b16 %v1236
    %v1870 = vunpack.c.h.b16 %v1236
    %v1871 = vunpack.c.l.b16 %v1237
    %v1872 = vunpack.c.h.b16 %v1237
    %v1873 = vunpack.c.l.b16 %v1238
    %v1874 = vunpack.c.h.b16 %v1238
    %v1875 = vunpack.c.l.b16 %v1239
    %v1876 = vunpack.c.h.b16 %v1239
    %v1877 = vunpack.c.l.b16 %v1240
    %v1878 = vunpack.c.h.b16 %v1240
    %v1879 = vunpack.c.l.b16 %v1241
    %v1880 = vunpack.c.h.b16 %v1241
    %v1881 = vunpack.c.l.b16 %v1242
    %v1882 = vunpack.c.h.b16 %v1242
    %v1883 = vunpack.c.l.b16 %v1243
    %v1884 = vunpack.c.h.b16 %v1243
    %v1885 = vunpack.c.l.b16 %v1244
    %v1886 = vunpack.c.h.b16 %v1244
    %v1887 = vunpack.c.l.b16 %v1245
    %v1888 = vunpack.c.h.b16 %v1245
    %v1889 = vunpack.c.l.b16 %v1246
    %v1890 = vunpack.c.h.b16 %v1246
    %v1891 = vunpack.c.l.b16 %v1247
    %v1892 = vunpack.c.h.b16 %v1247
    %v1893 = vunpack.c.l.b16 %v1248
    %v1894 = vunpack.c.h.b16 %v1248
    %v1895 = vunpack.c.l.b16 %v1249
    %v1896 = vunpack.c.h.b16 %v1249
    %v1897 = vunpack.c.l.b16 %v1250
    %v1898 = vunpack.c.h.b16 %v1250
    %v1899 = vunpack.c.l.b16 %v1251
    %v1900 = vunpack.c.h.b16 %v1251
    %v1901 = vunpack.c.l.b16 %v1252
    %v1902 = vunpack.c.h.b16 %v1252
    %v1903 = vunpack.c.l.b16 %v1253
    %v1904 = vunpack.c.h.b16 %v1253
    %v1905 = vunpack.c.l.b16 %v1254
    %v1906 = vunpack.c.h.b16 %v1254
    %v1907 = vunpack.c.l.b16 %v1255
    %v1908 = vunpack.c.h.b16 %v1255
    %v1909 = vunpack.c.l.b16 %v1256
    %v1910 = vunpack.c.h.b16 %v1256
    %v1911 = vunpack.c.l.b16 %v1257
    %v1912 = vunpack.c.h.b16 %v1257
    %v1913 = vunpack.c.l.b16 %v1258
    %v1914 = vunpack.c.h.b16 %v1258
    %v1915 = vunpack.c.l.b16 %v1259
    %v1916 = vunpack.c.h.b16 %v1259
    %v1917 = vunpack.c.l.b16 %v1260
    %v1918 = vunpack.c.h.b16 %v1260
    %v1919 = vunpack.c.l.b16 %v1261
    %v1920 = vunpack.c.h.b16 %v1261
    %v1921 = vunpack.c.l.b16 %v1262
    %v1922 = vunpack.c.h.b16 %v1262
    %v1923 = vunpack.c.l.b16 %v1263
    %v1924 = vunpack.c.h.b16 %v1263
    %v1925 = vunpack.c.l.b16 %v1264
    %v1926 = vunpack.c.h.b16 %v1264
    %v1927 = vunpack.c.l.b16 %v1265
    %v1928 = vunpack.c.h.b16 %v1265
    %v1929 = vunpack.c.l.b16 %v1266
    %v1930 = vunpack.c.h.b16 %v1266
    %v1931 = vunpack.c.l.b16 %v1267
    %v1932 = vunpack.c.h.b16 %v1267
    %v1933 = vunpack.c.l.b16 %v1268
    %v1934 = vunpack.c.h.b16 %v1268
    %v1935 = vunpack.c.l.b16 %v1269
    %v1936 = vunpack.c.h.b16 %v1269
    %v1937 = vunpack.c.l.b16 %v1270
    %v1938 = vunpack.c.h.b16 %v1270
    %v1939 = vunpack.c.l.b16 %v1271
    %v1940 = vunpack.c.h.b16 %v1271
    %v1941 = vunpack.c.l.b16 %v1272
    %v1942 = vunpack.c.h.b16 %v1272
    %v1943 = vunpack.c.l.b16 %v1273
    %v1944 = vunpack.c.h.b16 %v1273
    %v1945 = vunpack.c.l.b16 %v1274
    %v1946 = vunpack.c.h.b16 %v1274
    %v1947 = vunpack.c.l.b16 %v1275
    %v1948 = vunpack.c.h.b16 %v1275
    %v1949 = vunpack.c.l.b16 %v1276
    %v1950 = vunpack.c.h.b16 %v1276
    %v1951 = vunpack.c.l.b16 %v1277
    %v1952 = vunpack.c.h.b16 %v1277
    %v1953 = vunpack.c.l.b16 %v1278
    %v1954 = vunpack.c.h.b16 %v1278
    %v1955 = vunpack.c.l.b16 %v1279
    %v1956 = vunpack.c.h.b16 %v1279
    %v1957 = vunpack.c.l.b16 %v1280
    %v1958 = vunpack.c.h.b16 %v1280
    %v1959 = vunpack.c.l.b16 %v1281
    %v1960 = vunpack.c.h.b16 %v1281
    %v1961 = vunpack.c.l.b16 %v1282
    %v1962 = vunpack.c.h.b16 %v1282
    %v1963 = vunpack.c.l.b16 %v1283
    %v1964 = vunpack.c.h.b16 %v1283
    %v1965 = vunpack.c.l.b16 %v1284
    %v1966 = vunpack.c.h.b16 %v1284
    %v1967 = vunpack.c.l.b16 %v1285
    %v1968 = vunpack.c.h.b16 %v1285
    %v1969 = vunpack.c.l.b16 %v1286
    %v1970 = vunpack.c.h.b16 %v1286
    %v1971 = vunpack.c.l.b16 %v1287
    %v1972 = vunpack.c.h.b16 %v1287
    %v1973 = vunpack.c.l.b16 %v1288
    %v1974 = vunpack.c.h.b16 %v1288
    %v1975 = vunpack.c.l.b16 %v1289
    %v1976 = vunpack.c.h.b16 %v1289
    %v1977 = vunpack.c.l.b16 %v1290
    %v1978 = vunpack.c.h.b16 %v1290
    %v1979 = vunpack.c.l.b16 %v1291
    %v1980 = vunpack.c.h.b16 %v1291
    %v1981 = vunpack.c.l.b16 %v1292
    %v1982 = vunpack.c.h.b16 %v1292
    %v1983 = vunpack.c.l.b16 %v1293
    %v1984 = vunpack.c.h.b16 %v1293
    %v1985 = vunpack.c.l.b16 %v1294
    %v1986 = vunpack.c.h.b16 %v1294
    %v1987 = vunpack.c.l.b16 %v1295
    %v1988 = vunpack.c.h.b16 %v1295
    %v1989 = vunpack.c.l.b16 %v1296
    %v1990 = vunpack.c.h.b16 %v1296
    %v1991 = vunpack.c.l.b16 %v1297
    %v1992 = vunpack.c.h.b16 %v1297
    %v1993 = vunpack.c.l.b16 %v1298
    %v1994 = vunpack.c.h.b16 %v1298
    %v1995 = vunpack.c.l.b16 %v1299
    %v1996 = vunpack.c.h.b16 %v1299
    %v1997 = vunpack.c.l.b16 %v1300
    %v1998 = vunpack.c.h.b16 %v1300
    %v1999 = vunpack.c.l.b16 %v1301
    %v2000 = vunpack.c.h.b16 %v1301
    %v2001 = vunpack.c.l.b16 %v1302
    %v2002 = vunpack.c.h.b16 %v1302
    %v2003 = vunpack.c.l.b16 %v1303
    %v2004 = vunpack.c.h.b16 %v1303
    %v2005 = vunpack.c.l.b16 %v1304
    %v2006 = vunpack.c.h.b16 %v1304
    %v2007 = vunpack.c.l.b16 %v1305
    %v2008 = vunpack.c.h.b16 %v1305
    %v2009 = vunpack.c.l.b16 %v1306
    %v2010 = vunpack.c.h.b16 %v1306
    %v2011 = vunpack.c.l.b16 %v1307
    %v2012 = vunpack.c.h.b16 %v1307
    %v2013 = vunpack.c.l.b16 %v1308
    %v2014 = vunpack.c.h.b16 %v1308
    %v2015 = vunpack.c.l.b16 %v1309
    %v2016 = vunpack.c.h.b16 %v1309
    %v2017 = vunpack.c.l.b16 %v1310
    %v2018 = vunpack.c.h.b16 %v1310
    %v2019 = vunpack.c.l.b16 %v1311
    %v2020 = vunpack.c.h.b16 %v1311
    %v2021 = vunpack.c.l.b16 %v1312
    %v2022 = vunpack.c.h.b16 %v1312
    %v2023 = vunpack.c.l.b16 %v1313
    %v2024 = vunpack.c.h.b16 %v1313
    %v2025 = vunpack.c.l.b16 %v1314
    %v2026 = vunpack.c.h.b16 %v1314
    %v2027 = vunpack.c.l.b16 %v1315
    %v2028 = vunpack.c.h.b16 %v1315
    %v2029 = vunpack.c.l.b16 %v1316
    %v2030 = vunpack.c.h.b16 %v1316
    %v2031 = vunpack.c.l.b16 %v1317
    %v2032 = vunpack.c.h.b16 %v1317
    %v2033 = vunpack.c.l.b16 %v1318
    %v2034 = vunpack.c.h.b16 %v1318
    %v2035 = vunpack.c.l.b16 %v1319
    %v2036 = vunpack.c.h.b16 %v1319
    %v2037 = vunpack.c.l.b16 %v1320
    %v2038 = vunpack.c.h.b16 %v1320
    %v2039 = vunpack.c.l.b16 %v1321
    %v2040 = vunpack.c.h.b16 %v1321
    %v2041 = vunpack.c.l.b16 %v1322
    %v2042 = vunpack.c.h.b16 %v1322
    %v2043 = vunpack.c.l.b16 %v1323
    %v2044 = vunpack.c.h.b16 %v1323
    %v2045 = vunpack.c.l.b16 %v1324
    %v2046 = vunpack.c.h.b16 %v1324
    %v2047 = vunpack.c.l.b16 %v1325
    %v2048 = vunpack.c.h.b16 %v1325
    %v2049 = vunpack.c.l.b16 %v1326
    %v2050 = vunpack.c.h.b16 %v1326
    %v2051 = vunpack.c.l.b16 %v1327
    %v2052 = vunpack.c.h.b16 %v1327
    %v2053 = vunpack.c.l.b16 %v1328
    %v2054 = vunpack.c.h.b16 %v1328
    %v2055 = vunpack.c.l.b16 %v1329
    %v2056 = vunpack.c.h.b16 %v1329
    %v2057 = vunpack.c.l.b16 %v1330
    %v2058 = vunpack.c.h.b16 %v1330
    %v2059 = vunpack.c.l.b16 %v1331
    %v2060 = vunpack.c.h.b16 %v1331
    %v2061 = vunpack.c.l.b16 %v1332
    %v2062 = vunpack.c.h.b16 %v1332
    %v2063 = vunpack.c.l.b16 %v1333
    %v2064 = vunpack.c.h.b16 %v1333
    %v2065 = vunpack.c.l.b16 %v1334
    %v2066 = vunpack.c.h.b16 %v1334
    %v2067 = vunpack.c.l.b16 %v1335
    %v2068 = vunpack.c.h.b16 %v1335
    %v2069 = vunpack.c.l.b16 %v1336
    %v2070 = vunpack.c.h.b16 %v1336
    %v2071 = vunpack.c.l.b16 %v1337
    %v2072 = vunpack.c.h.b16 %v1337
    %v2073 = vunpack.c.l.b16 %v1338
    %v2074 = vunpack.c.h.b16 %v1338
    %v2075 = vunpack.c.l.b16 %v1339
    %v2076 = vunpack.c.h.b16 %v1339
    %v2077 = vunpack.c.l.b16 %v1340
    %v2078 = vunpack.c.h.b16 %v1340
    %v2079 = vunpack.c.l.b16 %v1341
    %v2080 = vunpack.c.h.b16 %v1341
    %v2081 = vunpack.c.l.b16 %v1342
    %v2082 = vunpack.c.h.b16 %v1342
    %v2083 = vunpack.c.l.b16 %v1343
    %v2084 = vunpack.c.h.b16 %v1343
    %v2085 = vunpack.c.l.b16 %v1344
    %v2086 = vunpack.c.h.b16 %v1344
    %v2087 = vunpack.c.l.b16 %v1345
    %v2088 = vunpack.c.h.b16 %v1345
    %v2089 = vunpack.c.l.b16 %v1346
    %v2090 = vunpack.c.h.b16 %v1346
    %v2091 = vunpack.c.l.b16 %v1347
    %v2092 = vunpack.c.h.b16 %v1347
    %v2093 = vunpack.c.l.b16 %v1348
    %v2094 = vunpack.c.h.b16 %v1348
    %v2095 = vunpack.c.l.b16 %v1349
    %v2096 = vunpack.c.h.b16 %v1349
    %v2097 = vunpack.c.l.b16 %v1350
    %v2098 = vunpack.c.h.b16 %v1350
    %v2099 = vunpack.c.l.b16 %v1351
    %v2100 = vunpack.c.h.b16 %v1351
    %v2101 = vunpack.c.l.b16 %v1352
    %v2102 = vunpack.c.h.b16 %v1352
    %v2103 = vunpack.c.l.b16 %v1353
    %v2104 = vunpack.c.h.b16 %v1353
    %v2105 = vunpack.c.l.b16 %v1354
    %v2106 = vunpack.c.h.b16 %v1354
    %v2107 = vunpack.c.l.b16 %v1355
    %v2108 = vunpack.c.h.b16 %v1355
    %v2109 = vunpack.c.l.b16 %v1356
    %v2110 = vunpack.c.h.b16 %v1356
    %v2111 = vunpack.c.l.b16 %v1357
    %v2112 = vunpack.c.h.b16 %v1357
    %v2113 = vunpack.c.l.b16 %v1358
    %v2114 = vunpack.c.h.b16 %v1358
    %v2115 = vunpack.c.l.b16 %v1359
    %v2116 = vunpack.c.h.b16 %v1359
    %v2117 = vunpack.c.l.b16 %v1360
    %v2118 = vunpack.c.h.b16 %v1360
    %v2119 = vunpack.c.l.b16 %v1361
    %v2120 = vunpack.c.h.b16 %v1361
    %v2121 = vunpack.c.l.b16 %v1362
    %v2122 = vunpack.c.h.b16 %v1362
    %v2123 = vunpack.c.l.b16 %v1363
    %v2124 = vunpack.c.h.b16 %v1363
    %v2125 = vunpack.c.l.b16 %v1364
    %v2126 = vunpack.c.h.b16 %v1364
    %v2127 = vunpack.c.l.b16 %v1365
    %v2128 = vunpack.c.h.b16 %v1365
    %v2129 = vunpack.c.l.b16 %v1366
    %v2130 = vunpack.c.h.b16 %v1366
    %v2131 = vunpack.c.l.b16 %v1367
    %v2132 = vunpack.c.h.b16 %v1367
    %v2133 = vunpack.c.l.b16 %v1368
    %v2134 = vunpack.c.h.b16 %v1368
    %v2135 = vunpack.c.l.b16 %v1369
    %v2136 = vunpack.c.h.b16 %v1369
    %v2137 = vunpack.c.l.b16 %v1370
    %v2138 = vunpack.c.h.b16 %v1370
    %v2139 = vunpack.c.l.b16 %v1371
    %v2140 = vunpack.c.h.b16 %v1371
    %v2141 = vunpack.c.l.b16 %v1372
    %v2142 = vunpack.c.h.b16 %v1372
    %v2143 = vunpack.c.l.b16 %v1373
    %v2144 = vunpack.c.h.b16 %v1373
    %v2145 = vunpack.c.l.b16 %v1374
    %v2146 = vunpack.c.h.b16 %v1374
    %v2147 = vunpack.c.l.b16 %v1375
    %v2148 = vunpack.c.h.b16 %v1375
    %v2149 = vunpack.c.l.b16 %v1376
    %v2150 = vunpack.c.h.b16 %v1376
    %v2151 = vunpack.c.l.b16 %v1377
    %v2152 = vunpack.c.h.b16 %v1377
    %v2153 = vunpack.c.l.b16 %v1378
    %v2154 = vunpack.c.h.b16 %v1378
    %v2155 = vunpack.c.l.b16 %v1379
    %v2156 = vunpack.c.h.b16 %v1379
    %v2157 = vunpack.c.l.b16 %v1380
    %v2158 = vunpack.c.h.b16 %v1380
    %v2159 = vunpack.c.l.b16 %v1381
    %v2160 = vunpack.c.h.b16 %v1381
    %v2161 = vunpack.c.l.b16 %v1382
    %v2162 = vunpack.c.h.b16 %v1382
    %v2163 = vunpack.c.l.b16 %v1383
    %v2164 = vunpack.c.h.b16 %v1383
    %v2165 = vunpack.c.l.b16 %v1384
    %v2166 = vunpack.c.h.b16 %v1384
    %v2167 = vunpack.c.l.b16 %v1385
    %v2168 = vunpack.c.h.b16 %v1385
    %v2169 = vunpack.c.l.b16 %v1386
    %v2170 = vunpack.c.h.b16 %v1386
    %v2171 = vunpack.c.l.b16 %v1387
    %v2172 = vunpack.c.h.b16 %v1387
    %v2173 = vunpack.c.l.b16 %v1388
    %v2174 = vunpack.c.h.b16 %v1388
    %v2175 = vunpack.c.l.b16 %v1389
    %v2176 = vunpack.c.h.b16 %v1389
    %v2177 = vunpack.c.l.b16 %v1390
    %v2178 = vunpack.c.h.b16 %v1390
    %v2179 = vunpack.c.l.b16 %v1391
    %v2180 = vunpack.c.h.b16 %v1391
    %v2181 = vunpack.c.l.b16 %v1392
    %v2182 = vunpack.c.h.b16 %v1392
    %v2183 = vunpack.c.l.b16 %v1393
    %v2184 = vunpack.c.h.b16 %v1393
    %v2185 = vunpack.c.l.b16 %v1394
    %v2186 = vunpack.c.h.b16 %v1394
    %v2187 = vunpack.c.l.b16 %v1395
    %v2188 = vunpack.c.h.b16 %v1395
    %v2189 = vunpack.c.l.b16 %v1396
    %v2190 = vunpack.c.h.b16 %v1396
    %v2191 = vunpack.c.l.b16 %v1397
    %v2192 = vunpack.c.h.b16 %v1397
    %v2193 = vunpack.c.l.b16 %v1398
    %v2194 = vunpack.c.h.b16 %v1398
    %v2195 = vunpack.c.l.b16 %v1399
    %v2196 = vunpack.c.h.b16 %v1399
    %v2197 = vunpack.c.l.b16 %v1400
    %v2198 = vunpack.c.h.b16 %v1400
    %v2199 = vunpack.c.l.b16 %v1401
    %v2200 = vunpack.c.h.b16 %v1401
    %v2201 = vunpack.c.l.b16 %v1402
    %v2202 = vunpack.c.h.b16 %v1402
    %v2203 = vunpack.c.l.b16 %v1403
    %v2204 = vunpack.c.h.b16 %v1403
    %v2205 = vunpack.c.l.b16 %v1404
    %v2206 = vunpack.c.h.b16 %v1404
    %v2207 = vunpack.c.l.b16 %v1405
    %v2208 = vunpack.c.h.b16 %v1405
    %v2209 = vunpack.c.l.b16 %v1406
    %v2210 = vunpack.c.h.b16 %v1406
    %v2211 = vunpack.c.l.b16 %v1407
    %v2212 = vunpack.c.h.b16 %v1407
    %v2213 = vunpack.c.l.b16 %v1408
    %v2214 = vunpack.c.h.b16 %v1408
    %v2215 = vunpack.c.l.b16 %v1409
    %v2216 = vunpack.c.h.b16 %v1409
    %v2217 = vunpack.c.l.b16 %v1410
    %v2218 = vunpack.c.h.b16 %v1410
    %v2219 = vunpack.c.l.b16 %v1411
    %v2220 = vunpack.c.h.b16 %v1411
    %v2221 = vunpack.c.l.b16 %v1412
    %v2222 = vunpack.c.h.b16 %v1412
    %v2223 = vpack.c.b16 %v1719, %v1711
    %v2224 = vpack.c.b16 %v1720, %v1712
    %v2225 = vpack.c.b16 %v1721, %v1713
    %v2226 = vpack.c.b16 %v1722, %v1714
    %v2227 = vpack.c.b16 %v1723, %v1715
    %v2228 = vpack.c.b16 %v1724, %v1716
    %v2229 = vpack.c.b16 %v1725, %v1717
    %v2230 = vpack.c.b16 %v1726, %v1718
    %v2231 = vpack.c.b16 %v1735, %v1727
    %v2232 = vpack.c.b16 %v1736, %v1728
    %v2233 = vpack.c.b16 %v1737, %v1729
    %v2234 = vpack.c.b16 %v1738, %v1730
    %v2235 = vpack.c.b16 %v1739, %v1731
    %v2236 = vpack.c.b16 %v1740, %v1732
    %v2237 = vpack.c.b16 %v1741, %v1733
    %v2238 = vpack.c.b16 %v1742, %v1734
    %v2239 = vpack.c.b16 %v1751, %v1743
    %v2240 = vpack.c.b16 %v1752, %v1744
    %v2241 = vpack.c.b16 %v1753, %v1745
    %v2242 = vpack.c.b16 %v1754, %v1746
    %v2243 = vpack.c.b16 %v1755, %v1747
    %v2244 = vpack.c.b16 %v1756, %v1748
    %v2245 = vpack.c.b16 %v1757, %v1749
    %v2246 = vpack.c.b16 %v1758, %v1750
    %v2247 = vpack.c.b16 %v1767, %v1759
    %v2248 = vpack.c.b16 %v1768, %v1760
    %v2249 = vpack.c.b16 %v1769, %v1761
    %v2250 = vpack.c.b16 %v1770, %v1762
    %v2251 = vpack.c.b16 %v1771, %v1763
    %v2252 = vpack.c.b16 %v1772, %v1764
    %v2253 = vpack.c.b16 %v1773, %v1765
    %v2254 = vpack.c.b16 %v1774, %v1766
    %v2255 = vpack.c.b16 %v1783, %v1775
    %v2256 = vpack.c.b16 %v1784, %v1776
    %v2257 = vpack.c.b16 %v1785, %v1777
    %v2258 = vpack.c.b16 %v1786, %v1778
    %v2259 = vpack.c.b16 %v1787, %v1779
    %v2260 = vpack.c.b16 %v1788, %v1780
    %v2261 = vpack.c.b16 %v1789, %v1781
    %v2262 = vpack.c.b16 %v1790, %v1782
    %v2263 = vpack.c.b16 %v1799, %v1791
    %v2264 = vpack.c.b16 %v1800, %v1792
    %v2265 = vpack.c.b16 %v1801, %v1793
    %v2266 = vpack.c.b16 %v1802, %v1794
    %v2267 = vpack.c.b16 %v1803, %v1795
    %v2268 = vpack.c.b16 %v1804, %v1796
    %v2269 = vpack.c.b16 %v1805, %v1797
    %v2270 = vpack.c.b16 %v1806, %v1798
    %v2271 = vpack.c.b16 %v1815, %v1807
    %v2272 = vpack.c.b16 %v1816, %v1808
    %v2273 = vpack.c.b16 %v1817, %v1809
    %v2274 = vpack.c.b16 %v1818, %v1810
    %v2275 = vpack.c.b16 %v1819, %v1811
    %v2276 = vpack.c.b16 %v1820, %v1812
    %v2277 = vpack.c.b16 %v1821, %v1813
    %v2278 = vpack.c.b16 %v1822, %v1814
    %v2279 = vpack.c.b16 %v1831, %v1823
    %v2280 = vpack.c.b16 %v1832, %v1824
    %v2281 = vpack.c.b16 %v1833, %v1825
    %v2282 = vpack.c.b16 %v1834, %v1826
    %v2283 = vpack.c.b16 %v1835, %v1827
    %v2284 = vpack.c.b16 %v1836, %v1828
    %v2285 = vpack.c.b16 %v1837, %v1829
    %v2286 = vpack.c.b16 %v1838, %v1830
    %v2287 = vpack.c.b16 %v1847, %v1839
    %v2288 = vpack.c.b16 %v1848, %v1840
    %v2289 = vpack.c.b16 %v1849, %v1841
    %v2290 = vpack.c.b16 %v1850, %v1842
    %v2291 = vpack.c.b16 %v1851, %v1843
    %v2292 = vpack.c.b16 %v1852, %v1844
    %v2293 = vpack.c.b16 %v1853, %v1845
    %v2294 = vpack.c.b16 %v1854, %v1846
    %v2295 = vpack.c.b16 %v1863, %v1855
    %v2296 = vpack.c.b16 %v1864, %v1856
    %v2297 = vpack.c.b16 %v1865, %v1857
    %v2298 = vpack.c.b16 %v1866, %v1858
    %v2299 = vpack.c.b16 %v1867, %v1859
    %v2300 = vpack.c.b16 %v1868, %v1860
    %v2301 = vpack.c.b16 %v1869, %v1861
    %v2302 = vpack.c.b16 %v1870, %v1862
    %v2303 = vpack.c.b16 %v1879, %v1871
    %v2304 = vpack.c.b16 %v1880, %v1872
    %v2305 = vpack.c.b16 %v1881, %v1873
    %v2306 = vpack.c.b16 %v1882, %v1874
    %v2307 = vpack.c.b16 %v1883, %v1875
    %v2308 = vpack.c.b16 %v1884, %v1876
    %v2309 = vpack.c.b16 %v1885, %v1877
    %v2310 = vpack.c.b16 %v1886, %v1878
    %v2311 = vpack.c.b16 %v1895, %v1887
    %v2312 = vpack.c.b16 %v1896, %v1888
    %v2313 = vpack.c.b16 %v1897, %v1889
    %v2314 = vpack.c.b16 %v1898, %v1890
    %v2315 = vpack.c.b16 %v1899, %v1891
    %v2316 = vpack.c.b16 %v1900, %v1892
    %v2317 = vpack.c.b16 %v1901, %v1893
    %v2318 = vpack.c.b16 %v1902, %v1894
    %v2319 = vpack.c.b16 %v1911, %v1903
    %v2320 = vpack.c.b16 %v1912, %v1904
    %v2321 = vpack.c.b16 %v1913, %v1905
    %v2322 = vpack.c.b16 %v1914, %v1906
    %v2323 = vpack.c.b16 %v1915, %v1907
    %v2324 = vpack.c.b16 %v1916, %v1908
    %v2325 = vpack.c.b16 %v1917, %v1909
    %v2326 = vpack.c.b16 %v1918, %v1910
    %v2327 = vpack.c.b16 %v1927, %v1919
    %v2328 = vpack.c.b16 %v1928, %v1920
    %v2329 = vpack.c.b16 %v1929, %v1921
    %v2330 = vpack.c.b16 %v1930, %v1922
    %v2331 = vpack.c.b16 %v1931, %v1923
    %v2332 = vpack.c.b16 %v1932, %v1924
    %v2333 = vpack.c.b16 %v1933, %v1925
    %v2334 = vpack.c.b16 %v1934, %v1926
    %v2335 = vpack.c.b16 %v1943, %v1935
    %v2336 = vpack.c.b16 %v1944, %v1936
    %v2337 = vpack.c.b16 %v1945, %v1937
    %v2338 = vpack.c.b16 %v1946, %v1938
    %v2339 = vpack.c.b16 %v1947, %v1939
    %v2340 = vpack.c.b16 %v1948, %v1940
    %v2341 = vpack.c.b16 %v1949, %v1941
    %v2342 = vpack.c.b16 %v1950, %v1942
    %v2343 = vpack.c.b16 %v1959, %v1951
    %v2344 = vpack.c.b16 %v1960, %v1952
    %v2345 = vpack.c.b16 %v1961, %v1953
    %v2346 = vpack.c.b16 %v1962, %v1954
    %v2347 = vpack.c.b16 %v1963, %v1955
    %v2348 = vpack.c.b16 %v1964, %v1956
    %v2349 = vpack.c.b16 %v1965, %v1957
    %v2350 = vpack.c.b16 %v1966, %v1958
    %v2351 = vpack.c.b16 %v1975, %v1967
    %v2352 = vpack.c.b16 %v1976, %v1968
    %v2353 = vpack.c.b16 %v1977, %v1969
    %v2354 = vpack.c.b16 %v1978, %v1970
    %v2355 = vpack.c.b16 %v1979, %v1971
    %v2356 = vpack.c.b16 %v1980, %v1972
    %v2357 = vpack.c.b16 %v1981, %v1973
    %v2358 = vpack.c.b16 %v1982, %v1974
    %v2359 = vpack.c.b16 %v1991, %v1983
    %v2360 = vpack.c.b16 %v1992, %v1984
    %v2361 = vpack.c.b16 %v1993, %v1985
    %v2362 = vpack.c.b16 %v1994, %v1986
    %v2363 = vpack.c.b16 %v1995, %v1987
    %v2364 = vpack.c.b16 %v1996, %v1988
    %v2365 = vpack.c.b16 %v1997, %v1989
    %v2366 = vpack.c.b16 %v1998, %v1990
    %v2367 = vpack.c.b16 %v2007, %v1999
    %v2368 = vpack.c.b16 %v2008, %v2000
    %v2369 = vpack.c.b16 %v2009, %v2001
    %v2370 = vpack.c.b16 %v2010, %v2002
    %v2371 = vpack.c.b16 %v2011, %v2003
    %v2372 = vpack.c.b16 %v2012, %v2004
    %v2373 = vpack.c.b16 %v2013, %v2005
    %v2374 = vpack.c.b16 %v2014, %v2006
    %v2375 = vpack.c.b16 %v2023, %v2015
    %v2376 = vpack.c.b16 %v2024, %v2016
    %v2377 = vpack.c.b16 %v2025, %v2017
    %v2378 = vpack.c.b16 %v2026, %v2018
    %v2379 = vpack.c.b16 %v2027, %v2019
    %v2380 = vpack.c.b16 %v2028, %v2020
    %v2381 = vpack.c.b16 %v2029, %v2021
    %v2382 = vpack.c.b16 %v2030, %v2022
    %v2383 = vpack.c.b16 %v2039, %v2031
    %v2384 = vpack.c.b16 %v2040, %v2032
    %v2385 = vpack.c.b16 %v2041, %v2033
    %v2386 = vpack.c.b16 %v2042, %v2034
    %v2387 = vpack.c.b16 %v2043, %v2035
    %v2388 = vpack.c.b16 %v2044, %v2036
    %v2389 = vpack.c.b16 %v2045, %v2037
    %v2390 = vpack.c.b16 %v2046, %v2038
    %v2391 = vpack.c.b16 %v2055, %v2047
    %v2392 = vpack.c.b16 %v2056, %v2048
    %v2393 = vpack.c.b16 %v2057, %v2049
    %v2394 = vpack.c.b16 %v2058, %v2050
    %v2395 = vpack.c.b16 %v2059, %v2051
    %v2396 = vpack.c.b16 %v2060, %v2052
    %v2397 = vpack.c.b16 %v2061, %v2053
    %v2398 = vpack.c.b16 %v2062, %v2054
    %v2399 = vpack.c.b16 %v2071, %v2063
    %v2400 = vpack.c.b16 %v2072, %v2064
    %v2401 = vpack.c.b16 %v2073, %v2065
    %v2402 = vpack.c.b16 %v2074, %v2066
    %v2403 = vpack.c.b16 %v2075, %v2067
    %v2404 = vpack.c.b16 %v2076, %v2068
    %v2405 = vpack.c.b16 %v2077, %v2069
    %v2406 = vpack.c.b16 %v2078, %v2070
    %v2407 = vpack.c.b16 %v2087, %v2079
    %v2408 = vpack.c.b16 %v2088, %v2080
    %v2409 = vpack.c.b16 %v2089, %v2081
    %v2410 = vpack.c.b16 %v2090, %v2082
    %v2411 = vpack.c.b16 %v2091, %v2083
    %v2412 = vpack.c.b16 %v2092, %v2084
    %v2413 = vpack.c.b16 %v2093, %v2085
    %v2414 = vpack.c.b16 %v2094, %v2086
    %v2415 = vpack.c.b16 %v2103, %v2095
    %v2416 = vpack.c.b16 %v2104, %v2096
    %v2417 = vpack.c.b16 %v2105, %v2097
    %v2418 = vpack.c.b16 %v2106, %v2098
    %v2419 = vpack.c.b16 %v2107, %v2099
    %v2420 = vpack.c.b16 %v2108, %v2100
    %v2421 = vpack.c.b16 %v2109, %v2101
    %v2422 = vpack.c.b16 %v2110, %v2102
    %v2423 = vpack.c.b16 %v2119, %v2111
    %v2424 = vpack.c.b16 %v2120, %v2112
    %v2425 = vpack.c.b16 %v2121, %v2113
    %v2426 = vpack.c.b16 %v2122, %v2114
    %v2427 = vpack.c.b16 %v2123, %v2115
    %v2428 = vpack.c.b16 %v2124, %v2116
    %v2429 = vpack.c.b16 %v2125, %v2117
    %v2430 = vpack.c.b16 %v2126, %v2118
    %v2431 = vpack.c.b16 %v2135, %v2127
    %v2432 = vpack.c.b16 %v2136, %v2128
    %v2433 = vpack.c.b16 %v2137, %v2129
    %v2434 = vpack.c.b16 %v2138, %v2130
    %v2435 = vpack.c.b16 %v2139, %v2131
    %v2436 = vpack.c.b16 %v2140, %v2132
    %v2437 = vpack.c.b16 %v2141, %v2133
    %v2438 = vpack.c.b16 %v2142, %v2134
    %v2439 = vpack.c.b16 %v2151, %v2143
    %v2440 = vpack.c.b16 %v2152, %v2144
    %v2441 = vpack.c.b16 %v2153, %v2145
    %v2442 = vpack.c.b16 %v2154, %v2146
    %v2443 = vpack.c.b16 %v2155, %v2147
    %v2444 = vpack.c.b16 %v2156, %v2148
    %v2445 = vpack.c.b16 %v2157, %v2149
    %v2446 = vpack.c.b16 %v2158, %v2150
    %v2447 = vpack.c.b16 %v2167, %v2159
    %v2448 = vpack.c.b16 %v2168, %v2160
    %v2449 = vpack.c.b16 %v2169, %v2161
    %v2450 = vpack.c.b16 %v2170, %v2162
    %v2451 = vpack.c.b16 %v2171, %v2163
    %v2452 = vpack.c.b16 %v2172, %v2164
    %v2453 = vpack.c.b16 %v2173, %v2165
    %v2454 = vpack.c.b16 %v2174, %v2166
    %v2455 = vpack.c.b16 %v2183, %v2175
    %v2456 = vpack.c.b16 %v2184, %v2176
    %v2457 = vpack.c.b16 %v2185, %v2177
    %v2458 = vpack.c.b16 %v2186, %v2178
    %v2459 = vpack.c.b16 %v2187, %v2179
    %v2460 = vpack.c.b16 %v2188, %v2180
    %v2461 = vpack.c.b16 %v2189, %v2181
    %v2462 = vpack.c.b16 %v2190, %v2182
    %v2463 = vpack.c.b16 %v2199, %v2191
    %v2464 = vpack.c.b16 %v2200, %v2192
    %v2465 = vpack.c.b16 %v2201, %v2193
    %v2466 = vpack.c.b16 %v2202, %v2194
    %v2467 = vpack.c.b16 %v2203, %v2195
    %v2468 = vpack.c.b16 %v2204, %v2196
    %v2469 = vpack.c.b16 %v2205, %v2197
    %v2470 = vpack.c.b16 %v2206, %v2198
    %v2471 = vpack.c.b16 %v2215, %v2207
    %v2472 = vpack.c.b16 %v2216, %v2208
    %v2473 = vpack.c.b16 %v2217, %v2209
    %v2474 = vpack.c.b16 %v2218, %v2210
    %v2475 = vpack.c.b16 %v2219, %v2211
    %v2476 = vpack.c.b16 %v2220, %v2212
    %v2477 = vpack.c.b16 %v2221, %v2213
    %v2478 = vpack.c.b16 %v2222, %v2214
    %2735 = vmatprep.subr.bf16.mxu0 %v2224
    %2736 = vmatpush1.bf16.msra.mxu0 %v2223
    %2737 = vmatprep.subr.bf16.mxu0 %v2232
    %2738 = vmatpush1.bf16.msra.mxu0 %v2231
    %2739 = vmatprep.subr.bf16.mxu0 %v2240
    %2740 = vmatpush1.bf16.msra.mxu0 %v2239
    %2741 = vmatprep.subr.bf16.mxu0 %v2248
    %2742 = vmatpush1.bf16.msra.mxu0 %v2247
    %2743 = vmatprep.subr.bf16.mxu0 %v2256
    %2744 = vmatpush1.bf16.msra.mxu0 %v2255
    %2745 = vmatprep.subr.bf16.mxu0 %v2264
    %2746 = vmatpush1.bf16.msra.mxu0 %v2263
    %2747 = vmatprep.subr.bf16.mxu0 %v2272
    %2748 = vmatpush1.bf16.msra.mxu0 %v2271
    %2749 = vmatprep.subr.bf16.mxu0 %v2280
    %2750 = vmatpush1.bf16.msra.mxu0 %v2279
    %2751 = vmatprep.subr.bf16.mxu0 %v2288
    %2752 = vmatpush1.bf16.msra.mxu0 %v2287
    %2753 = vmatprep.subr.bf16.mxu0 %v2296
    %2754 = vmatpush1.bf16.msra.mxu0 %v2295
    %2755 = vmatprep.subr.bf16.mxu0 %v2304
    %2756 = vmatpush1.bf16.msra.mxu0 %v2303
    %2757 = vmatprep.subr.bf16.mxu0 %v2312
    %2758 = vmatpush1.bf16.msra.mxu0 %v2311
    %2759 = vmatprep.subr.bf16.mxu0 %v2320
    %2760 = vmatpush1.bf16.msra.mxu0 %v2319
    %2761 = vmatprep.subr.bf16.mxu0 %v2328
    %2762 = vmatpush1.bf16.msra.mxu0 %v2327
    %2763 = vmatprep.subr.bf16.mxu0 %v2336
    %2764 = vmatpush1.bf16.msra.mxu0 %v2335
    %2765 = vmatprep.subr.bf16.mxu0 %v2344
    %2766 = vmatpush1.bf16.msra.mxu0 %v2343
    %2767 = vmatprep.mubr.bf16.mxu0 %v1154
    %2768 = vmatmul.mubr.bf16.gmra.mrb[0].mxu0 %v1153
    %v2769 = vpop.f32.mrb[0].mxu0
    %v2770 = vadd.f32 %v1418, %v2769
    %v2771 = vpop.f32.mrb[0].mxu0
    %v2772 = vadd.f32 %v1422, %v2771
    %v2773 = vpop.f32.mrb[0].mxu0
    %v2774 = vpop.f32.mrb[0].mxu0
    %2775 = vdwg.mxu0
    %2776 = vmatprep.subr.bf16.mxu0 %v2352
    %2777 = vmatpush1.bf16.msra.mxu0 %v2351
    %2778 = vmatprep.subr.bf16.mxu0 %v2360
    %2779 = vmatpush1.bf16.msra.mxu0 %v2359
    %2780 = vmatprep.subr.bf16.mxu0 %v2368
    %2781 = vmatpush1.bf16.msra.mxu0 %v2367
    %2782 = vmatprep.subr.bf16.mxu0 %v2376
    %2783 = vmatpush1.bf16.msra.mxu0 %v2375
    %2784 = vmatprep.subr.bf16.mxu0 %v2384
    %2785 = vmatpush1.bf16.msra.mxu0 %v2383
    %2786 = vmatprep.subr.bf16.mxu0 %v2392
    %2787 = vmatpush1.bf16.msra.mxu0 %v2391
    %2788 = vmatprep.subr.bf16.mxu0 %v2400
    %2789 = vmatpush1.bf16.msra.mxu0 %v2399
    %2790 = vmatprep.subr.bf16.mxu0 %v2408
    %2791 = vmatpush1.bf16.msra.mxu0 %v2407
    %2792 = vmatprep.subr.bf16.mxu0 %v2416
    %2793 = vmatpush1.bf16.msra.mxu0 %v2415
    %2794 = vmatprep.subr.bf16.mxu0 %v2424
    %2795 = vmatpush1.bf16.msra.mxu0 %v2423
    %2796 = vmatprep.subr.bf16.mxu0 %v2432
    %2797 = vmatpush1.bf16.msra.mxu0 %v2431
    %2798 = vmatprep.subr.bf16.mxu0 %v2440
    %2799 = vmatpush1.bf16.msra.mxu0 %v2439
    %2800 = vmatprep.subr.bf16.mxu0 %v2448
    %2801 = vmatpush1.bf16.msra.mxu0 %v2447
    %2802 = vmatprep.subr.bf16.mxu0 %v2456
    %2803 = vmatpush1.bf16.msra.mxu0 %v2455
    %2804 = vmatprep.subr.bf16.mxu0 %v2464
    %2805 = vmatpush1.bf16.msra.mxu0 %v2463
    %2806 = vmatprep.subr.bf16.mxu0 %v2472
    %2807 = vmatpush1.bf16.msra.mxu0 %v2471
    %2808 = vmatprep.mubr.bf16.mxu0 %v1156
    %2809 = vmatmul.mubr.bf16.gmra.mrb[0].mxu0 %v1155
    %v2810 = vpop.f32.mrb[0].mxu0
    %v2811 = vadd.f32 %v2770, %v2810
    %v2812 = vpop.f32.mrb[0].mxu0
    %v2813 = vadd.f32 %v2772, %v2812
    %v2814 = vpop.f32.mrb[0].mxu0
    %v2815 = vpop.f32.mrb[0].mxu0
    %2816 = vdwg.mxu0
    %2817 = vmatprep.subr.bf16.mxu0 %v2226
    %2818 = vmatpush1.bf16.msra.mxu0 %v2225
    %2819 = vmatprep.subr.bf16.mxu0 %v2234
    %2820 = vmatpush1.bf16.msra.mxu0 %v2233
    %2821 = vmatprep.subr.bf16.mxu0 %v2242
    %2822 = vmatpush1.bf16.msra.mxu0 %v2241
    %2823 = vmatprep.subr.bf16.mxu0 %v2250
    %2824 = vmatpush1.bf16.msra.mxu0 %v2249
    %2825 = vmatprep.subr.bf16.mxu0 %v2258
    %2826 = vmatpush1.bf16.msra.mxu0 %v2257
    %2827 = vmatprep.subr.bf16.mxu0 %v2266
    %2828 = vmatpush1.bf16.msra.mxu0 %v2265
    %2829 = vmatprep.subr.bf16.mxu0 %v2274
    %2830 = vmatpush1.bf16.msra.mxu0 %v2273
    %2831 = vmatprep.subr.bf16.mxu0 %v2282
    %2832 = vmatpush1.bf16.msra.mxu0 %v2281
    %2833 = vmatprep.subr.bf16.mxu0 %v2290
    %2834 = vmatpush1.bf16.msra.mxu0 %v2289
    %2835 = vmatprep.subr.bf16.mxu0 %v2298
    %2836 = vmatpush1.bf16.msra.mxu0 %v2297
    %2837 = vmatprep.subr.bf16.mxu0 %v2306
    %2838 = vmatpush1.bf16.msra.mxu0 %v2305
    %2839 = vmatprep.subr.bf16.mxu0 %v2314
    %2840 = vmatpush1.bf16.msra.mxu0 %v2313
    %2841 = vmatprep.subr.bf16.mxu0 %v2322
    %2842 = vmatpush1.bf16.msra.mxu0 %v2321
    %2843 = vmatprep.subr.bf16.mxu0 %v2330
    %2844 = vmatpush1.bf16.msra.mxu0 %v2329
    %2845 = vmatprep.subr.bf16.mxu0 %v2338
    %2846 = vmatpush1.bf16.msra.mxu0 %v2337
    %2847 = vmatprep.subr.bf16.mxu0 %v2346
    %2848 = vmatpush1.bf16.msra.mxu0 %v2345
    %2849 = vmatprep.mubr.bf16.mxu0 %v1154
    %2850 = vmatmul.mubr.bf16.gmra.mrb[0].mxu0 %v1153
    %v2851 = vpop.f32.mrb[0].mxu0
    %v2852 = vadd.f32 %v1426, %v2851
    %v2853 = vpop.f32.mrb[0].mxu0
    %v2854 = vadd.f32 %v1430, %v2853
    %v2855 = vpop.f32.mrb[0].mxu0
    %v2856 = vpop.f32.mrb[0].mxu0
    %2857 = vdwg.mxu0
    %2858 = vmatprep.subr.bf16.mxu0 %v2354
    %2859 = vmatpush1.bf16.msra.mxu0 %v2353
    %2860 = vmatprep.subr.bf16.mxu0 %v2362
    %2861 = vmatpush1.bf16.msra.mxu0 %v2361
    %2862 = vmatprep.subr.bf16.mxu0 %v2370
    %2863 = vmatpush1.bf16.msra.mxu0 %v2369
    %2864 = vmatprep.subr.bf16.mxu0 %v2378
    %2865 = vmatpush1.bf16.msra.mxu0 %v2377
    %2866 = vmatprep.subr.bf16.mxu0 %v2386
    %2867 = vmatpush1.bf16.msra.mxu0 %v2385
    %2868 = vmatprep.subr.bf16.mxu0 %v2394
    %2869 = vmatpush1.bf16.msra.mxu0 %v2393
    %2870 = vmatprep.subr.bf16.mxu0 %v2402
    %2871 = vmatpush1.bf16.msra.mxu0 %v2401
    %2872 = vmatprep.subr.bf16.mxu0 %v2410
    %2873 = vmatpush1.bf16.msra.mxu0 %v2409
    %2874 = vmatprep.subr.bf16.mxu0 %v2418
    %2875 = vmatpush1.bf16.msra.mxu0 %v2417
    %2876 = vmatprep.subr.bf16.mxu0 %v2426
    %2877 = vmatpush1.bf16.msra.mxu0 %v2425
    %2878 = vmatprep.subr.bf16.mxu0 %v2434
    %2879 = vmatpush1.bf16.msra.mxu0 %v2433
    %2880 = vmatprep.subr.bf16.mxu0 %v2442
    %2881 = vmatpush1.bf16.msra.mxu0 %v2441
    %2882 = vmatprep.subr.bf16.mxu0 %v2450
    %2883 = vmatpush1.bf16.msra.mxu0 %v2449
    %2884 = vmatprep.subr.bf16.mxu0 %v2458
    %2885 = vmatpush1.bf16.msra.mxu0 %v2457
    %2886 = vmatprep.subr.bf16.mxu0 %v2466
    %2887 = vmatpush1.bf16.msra.mxu0 %v2465
    %2888 = vmatprep.subr.bf16.mxu0 %v2474
    %2889 = vmatpush1.bf16.msra.mxu0 %v2473
    %2890 = vmatprep.mubr.bf16.mxu0 %v1156
    %2891 = vmatmul.mubr.bf16.gmra.mrb[0].mxu0 %v1155
    %v2892 = vpop.f32.mrb[0].mxu0
    %v2893 = vadd.f32 %v2852, %v2892
    %v2894 = vpop.f32.mrb[0].mxu0
    %v2895 = vadd.f32 %v2854, %v2894
    %v2896 = vpop.f32.mrb[0].mxu0
    %v2897 = vpop.f32.mrb[0].mxu0
    %2898 = vdwg.mxu0
    %2899 = vmatprep.subr.bf16.mxu0 %v2228
    %2900 = vmatpush1.bf16.msra.mxu0 %v2227
    %2901 = vmatprep.subr.bf16.mxu0 %v2236
    %2902 = vmatpush1.bf16.msra.mxu0 %v2235
    %2903 = vmatprep.subr.bf16.mxu0 %v2244
    %2904 = vmatpush1.bf16.msra.mxu0 %v2243
    %2905 = vmatprep.subr.bf16.mxu0 %v2252
    %2906 = vmatpush1.bf16.msra.mxu0 %v2251
    %2907 = vmatprep.subr.bf16.mxu0 %v2260
    %2908 = vmatpush1.bf16.msra.mxu0 %v2259
    %2909 = vmatprep.subr.bf16.mxu0 %v2268
    %2910 = vmatpush1.bf16.msra.mxu0 %v2267
    %2911 = vmatprep.subr.bf16.mxu0 %v2276
    %2912 = vmatpush1.bf16.msra.mxu0 %v2275
    %2913 = vmatprep.subr.bf16.mxu0 %v2284
    %2914 = vmatpush1.bf16.msra.mxu0 %v2283
    %2915 = vmatprep.subr.bf16.mxu0 %v2292
    %2916 = vmatpush1.bf16.msra.mxu0 %v2291
    %2917 = vmatprep.subr.bf16.mxu0 %v2300
    %2918 = vmatpush1.bf16.msra.mxu0 %v2299
    %2919 = vmatprep.subr.bf16.mxu0 %v2308
    %2920 = vmatpush1.bf16.msra.mxu0 %v2307
    %2921 = vmatprep.subr.bf16.mxu0 %v2316
    %2922 = vmatpush1.bf16.msra.mxu0 %v2315
    %2923 = vmatprep.subr.bf16.mxu0 %v2324
    %2924 = vmatpush1.bf16.msra.mxu0 %v2323
    %2925 = vmatprep.subr.bf16.mxu0 %v2332
    %2926 = vmatpush1.bf16.msra.mxu0 %v2331
    %2927 = vmatprep.subr.bf16.mxu0 %v2340
    %2928 = vmatpush1.bf16.msra.mxu0 %v2339
    %2929 = vmatprep.subr.bf16.mxu0 %v2348
    %2930 = vmatpush1.bf16.msra.mxu0 %v2347
    %2931 = vmatprep.mubr.bf16.mxu0 %v1154
    %2932 = vmatmul.mubr.bf16.gmra.mrb[0].mxu0 %v1153
    %v2933 = vpop.f32.mrb[0].mxu0
    %v2934 = vadd.f32 %v1434, %v2933
    %v2935 = vpop.f32.mrb[0].mxu0
    %v2936 = vadd.f32 %v1438, %v2935
    %v2937 = vpop.f32.mrb[0].mxu0
    %v2938 = vpop.f32.mrb[0].mxu0
    %2939 = vdwg.mxu0
    %2940 = vmatprep.subr.bf16.mxu0 %v2356
    %2941 = vmatpush1.bf16.msra.mxu0 %v2355
    %2942 = vmatprep.subr.bf16.mxu0 %v2364
    %2943 = vmatpush1.bf16.msra.mxu0 %v2363
    %2944 = vmatprep.subr.bf16.mxu0 %v2372
    %2945 = vmatpush1.bf16.msra.mxu0 %v2371
    %2946 = vmatprep.subr.bf16.mxu0 %v2380
    %2947 = vmatpush1.bf16.msra.mxu0 %v2379
    %2948 = vmatprep.subr.bf16.mxu0 %v2388
    %2949 = vmatpush1.bf16.msra.mxu0 %v2387
    %2950 = vmatprep.subr.bf16.mxu0 %v2396
    %2951 = vmatpush1.bf16.msra.mxu0 %v2395
    %2952 = vmatprep.subr.bf16.mxu0 %v2404
    %2953 = vmatpush1.bf16.msra.mxu0 %v2403
    %2954 = vmatprep.subr.bf16.mxu0 %v2412
    %2955 = vmatpush1.bf16.msra.mxu0 %v2411
    %2956 = vmatprep.subr.bf16.mxu0 %v2420
    %2957 = vmatpush1.bf16.msra.mxu0 %v2419
    %2958 = vmatprep.subr.bf16.mxu0 %v2428
    %2959 = vmatpush1.bf16.msra.mxu0 %v2427
    %2960 = vmatprep.subr.bf16.mxu0 %v2436
    %2961 = vmatpush1.bf16.msra.mxu0 %v2435
    %2962 = vmatprep.subr.bf16.mxu0 %v2444
    %2963 = vmatpush1.bf16.msra.mxu0 %v2443
    %2964 = vmatprep.subr.bf16.mxu0 %v2452
    %2965 = vmatpush1.bf16.msra.mxu0 %v2451
    %2966 = vmatprep.subr.bf16.mxu0 %v2460
    %2967 = vmatpush1.bf16.msra.mxu0 %v2459
    %2968 = vmatprep.subr.bf16.mxu0 %v2468
    %2969 = vmatpush1.bf16.msra.mxu0 %v2467
    %2970 = vmatprep.subr.bf16.mxu0 %v2476
    %2971 = vmatpush1.bf16.msra.mxu0 %v2475
    %2972 = vmatprep.mubr.bf16.mxu0 %v1156
    %2973 = vmatmul.mubr.bf16.gmra.mrb[0].mxu0 %v1155
    %v2974 = vpop.f32.mrb[0].mxu0
    %v2975 = vadd.f32 %v2934, %v2974
    %v2976 = vpop.f32.mrb[0].mxu0
    %v2977 = vadd.f32 %v2936, %v2976
    %v2978 = vpop.f32.mrb[0].mxu0
    %v2979 = vpop.f32.mrb[0].mxu0
    %2980 = vdwg.mxu0
    %2981 = vmatprep.subr.bf16.mxu0 %v2230
    %2982 = vmatpush1.bf16.msra.mxu0 %v2229
    %2983 = vmatprep.subr.bf16.mxu0 %v2238
    %2984 = vmatpush1.bf16.msra.mxu0 %v2237
    %2985 = vmatprep.subr.bf16.mxu0 %v2246
    %2986 = vmatpush1.bf16.msra.mxu0 %v2245
    %2987 = vmatprep.subr.bf16.mxu0 %v2254
    %2988 = vmatpush1.bf16.msra.mxu0 %v2253
    %2989 = vmatprep.subr.bf16.mxu0 %v2262
    %2990 = vmatpush1.bf16.msra.mxu0 %v2261
    %2991 = vmatprep.subr.bf16.mxu0 %v2270
    %2992 = vmatpush1.bf16.msra.mxu0 %v2269
    %2993 = vmatprep.subr.bf16.mxu0 %v2278
    %2994 = vmatpush1.bf16.msra.mxu0 %v2277
    %2995 = vmatprep.subr.bf16.mxu0 %v2286
    %2996 = vmatpush1.bf16.msra.mxu0 %v2285
    %2997 = vmatprep.subr.bf16.mxu0 %v2294
    %2998 = vmatpush1.bf16.msra.mxu0 %v2293
    %2999 = vmatprep.subr.bf16.mxu0 %v2302
    %3000 = vmatpush1.bf16.msra.mxu0 %v2301
    %3001 = vmatprep.subr.bf16.mxu0 %v2310
    %3002 = vmatpush1.bf16.msra.mxu0 %v2309
    %3003 = vmatprep.subr.bf16.mxu0 %v2318
    %3004 = vmatpush1.bf16.msra.mxu0 %v2317
    %3005 = vmatprep.subr.bf16.mxu0 %v2326
    %3006 = vmatpush1.bf16.msra.mxu0 %v2325
    %3007 = vmatprep.subr.bf16.mxu0 %v2334
    %3008 = vmatpush1.bf16.msra.mxu0 %v2333
    %3009 = vmatprep.subr.bf16.mxu0 %v2342
    %3010 = vmatpush1.bf16.msra.mxu0 %v2341
    %3011 = vmatprep.subr.bf16.mxu0 %v2350
    %3012 = vmatpush1.bf16.msra.mxu0 %v2349
    %3013 = vmatprep.mubr.bf16.mxu0 %v1154
    %3014 = vmatmul.mubr.bf16.gmra.mrb[0].mxu0 %v1153
    %v3015 = vpop.f32.mrb[0].mxu0
    %v3016 = vadd.f32 %v1442, %v3015
    %v3017 = vpop.f32.mrb[0].mxu0
    %v3018 = vadd.f32 %v1446, %v3017
    %v3019 = vpop.f32.mrb[0].mxu0
    %v3020 = vpop.f32.mrb[0].mxu0
    %3021 = vdwg.mxu0
    %3022 = vmatprep.subr.bf16.mxu0 %v2358
    %3023 = vmatpush1.bf16.msra.mxu0 %v2357
    %3024 = vmatprep.subr.bf16.mxu0 %v2366
    %3025 = vmatpush1.bf16.msra.mxu0 %v2365
    %3026 = vmatprep.subr.bf16.mxu0 %v2374
    %3027 = vmatpush1.bf16.msra.mxu0 %v2373
    %3028 = vmatprep.subr.bf16.mxu0 %v2382
    %3029 = vmatpush1.bf16.msra.mxu0 %v2381
    %3030 = vmatprep.subr.bf16.mxu0 %v2390
    %3031 = vmatpush1.bf16.msra.mxu0 %v2389
    %3032 = vmatprep.subr.bf16.mxu0 %v2398
    %3033 = vmatpush1.bf16.msra.mxu0 %v2397
    %3034 = vmatprep.subr.bf16.mxu0 %v2406
    %3035 = vmatpush1.bf16.msra.mxu0 %v2405
    %3036 = vmatprep.subr.bf16.mxu0 %v2414
    %3037 = vmatpush1.bf16.msra.mxu0 %v2413
    %3038 = vmatprep.subr.bf16.mxu0 %v2422
    %3039 = vmatpush1.bf16.msra.mxu0 %v2421
    %3040 = vmatprep.subr.bf16.mxu0 %v2430
    %3041 = vmatpush1.bf16.msra.mxu0 %v2429
    %3042 = vmatprep.subr.bf16.mxu0 %v2438
    %3043 = vmatpush1.bf16.msra.mxu0 %v2437
    %3044 = vmatprep.subr.bf16.mxu0 %v2446
    %3045 = vmatpush1.bf16.msra.mxu0 %v2445
    %3046 = vmatprep.subr.bf16.mxu0 %v2454
    %3047 = vmatpush1.bf16.msra.mxu0 %v2453
    %3048 = vmatprep.subr.bf16.mxu0 %v2462
    %3049 = vmatpush1.bf16.msra.mxu0 %v2461
    %3050 = vmatprep.subr.bf16.mxu0 %v2470
    %3051 = vmatpush1.bf16.msra.mxu0 %v2469
    %3052 = vmatprep.subr.bf16.mxu0 %v2478
    %3053 = vmatpush1.bf16.msra.mxu0 %v2477
    %3054 = vmatprep.mubr.bf16.mxu0 %v1156
    %3055 = vmatmul.mubr.bf16.gmra.mrb[0].mxu0 %v1155
    %v3056 = vpop.f32.mrb[0].mxu0
    %v3057 = vadd.f32 %v3016, %v3056
    %v3058 = vpop.f32.mrb[0].mxu0
    %v3059 = vadd.f32 %v3018, %v3058
    %v3060 = vpop.f32.mrb[0].mxu0
    %v3061 = vpop.f32.mrb[0].mxu0
    %3062 = vdwg.mxu0
    %v3063 = vmax.f32 %v2811, 0.0
    %v3064 = vmax.f32 %v2813, 0.0
    %v3065 = vmax.f32 %v2893, 0.0
    %v3066 = vmax.f32 %v2895, 0.0
    %v3067 = vmax.f32 %v2975, 0.0
    %v3068 = vmax.f32 %v2977, 0.0
    %v3069 = vmax.f32 %v3057, 0.0
    %v3070 = vmax.f32 %v3059, 0.0
    %3071 = vst [vmem:[#allocation2] sm:$0x3] %v3063
    %3072 = vst [vmem:[#allocation2 + $0x8] sm:$0x3] %v3064
    %v3075 = vrot.slane %v3065, 6
    %v3076 = vrot.slane %v3066, 6
    %3079 = vst [vmem:[#allocation2] sm:$0xc] %v3075
    %3080 = vst [vmem:[#allocation2 + $0x8] sm:$0xc] %v3076
    %v3083 = vrot.slane %v3067, 4
    %v3084 = vrot.slane %v3068, 4
    %3087 = vst [vmem:[#allocation2] sm:$0x30] %v3083
    %3088 = vst [vmem:[#allocation2 + $0x8] sm:$0x30] %v3084
    %v3091 = vrot.slane %v3069, 2
    %v3092 = vrot.slane %v3070, 2
    %3095 = vst [vmem:[#allocation2] sm:$0xc0] %v3091
    %3096 = vst [vmem:[#allocation2 + $0x8] sm:$0xc0] %v3092
    %v3097 = vld [vmem:[#allocation2] sm:$0xff]
    %v3098 = vld [vmem:[#allocation2 + $0x8] sm:$0xff]
    %v3099 = vpack.c.bf16 %v3097, %v3097
    %v3100 = vpack.c.bf16 %v3098, %v3098
    %v3101 = vld [vmem:[#allocation12] sm:$0xff]
    %v3102 = vld [vmem:[#allocation12 + $0x8] sm:$0xff]
    %v3103 = vld [vmem:[#allocation12 + $0x10] sm:$0xff]
    %v3104 = vld [vmem:[#allocation12 + $0x18] sm:$0xff]
    %v3105 = vld [vmem:[#allocation12 + $0x20] sm:$0xff]
    %v3106 = vld [vmem:[#allocation12 + $0x28] sm:$0xff]
    %v3107 = vld [vmem:[#allocation12 + $0x30] sm:$0xff]
    %v3108 = vld [vmem:[#allocation12 + $0x38] sm:$0xff]
    %v3109 = vld [vmem:[#allocation12 + $0x40] sm:$0xff]
    %v3110 = vld [vmem:[#allocation12 + $0x48] sm:$0xff]
    %v3111 = vld [vmem:[#allocation12 + $0x50] sm:$0xff]
    %v3112 = vld [vmem:[#allocation12 + $0x58] sm:$0xff]
    %v3113 = vld [vmem:[#allocation12 + $0x60] sm:$0xff]
    %v3114 = vld [vmem:[#allocation12 + $0x68] sm:$0xff]
    %v3115 = vld [vmem:[#allocation12 + $0x70] sm:$0xff]
    %v3116 = vld [vmem:[#allocation12 + $0x78] sm:$0xff]
    %v3117 = vld [vmem:[#allocation12 + $0x80] sm:$0xff]
    %v3118 = vld [vmem:[#allocation12 + $0x88] sm:$0xff]
    %v3119 = vld [vmem:[#allocation12 + $0x90] sm:$0xff]
    %v3120 = vld [vmem:[#allocation12 + $0x98] sm:$0xff]
    %v3121 = vld [vmem:[#allocation12 + $0xa0] sm:$0xff]
    %v3122 = vld [vmem:[#allocation12 + $0xa8] sm:$0xff]
    %v3123 = vld [vmem:[#allocation12 + $0xb0] sm:$0xff]
    %v3124 = vld [vmem:[#allocation12 + $0xb8] sm:$0xff]
    %v3125 = vld [vmem:[#allocation12 + $0xc0] sm:$0xff]
    %v3126 = vld [vmem:[#allocation12 + $0xc8] sm:$0xff]
    %v3127 = vld [vmem:[#allocation12 + $0xd0] sm:$0xff]
    %v3128 = vld [vmem:[#allocation12 + $0xd8] sm:$0xff]
    %v3129 = vld [vmem:[#allocation12 + $0xe0] sm:$0xff]
    %v3130 = vld [vmem:[#allocation12 + $0xe8] sm:$0xff]
    %v3131 = vld [vmem:[#allocation12 + $0xf0] sm:$0xff]
    %v3132 = vld [vmem:[#allocation12 + $0xf8] sm:$0xff]
    %v3133 = vld [vmem:[#allocation12 + $0x100] sm:$0xff]
    %v3134 = vld [vmem:[#allocation12 + $0x108] sm:$0xff]
    %v3135 = vld [vmem:[#allocation12 + $0x110] sm:$0xff]
    %v3136 = vld [vmem:[#allocation12 + $0x118] sm:$0xff]
    %v3137 = vld [vmem:[#allocation12 + $0x120] sm:$0xff]
    %v3138 = vld [vmem:[#allocation12 + $0x128] sm:$0xff]
    %v3139 = vld [vmem:[#allocation12 + $0x130] sm:$0xff]
    %v3140 = vld [vmem:[#allocation12 + $0x138] sm:$0xff]
    %v3141 = vld [vmem:[#allocation12 + $0x140] sm:$0xff]
    %v3142 = vld [vmem:[#allocation12 + $0x148] sm:$0xff]
    %v3143 = vld [vmem:[#allocation12 + $0x150] sm:$0xff]
    %v3144 = vld [vmem:[#allocation12 + $0x158] sm:$0xff]
    %v3145 = vld [vmem:[#allocation12 + $0x160] sm:$0xff]
    %v3146 = vld [vmem:[#allocation12 + $0x168] sm:$0xff]
    %v3147 = vld [vmem:[#allocation12 + $0x170] sm:$0xff]
    %v3148 = vld [vmem:[#allocation12 + $0x178] sm:$0xff]
    %v3149 = vld [vmem:[#allocation12 + $0x180] sm:$0xff]
    %v3150 = vld [vmem:[#allocation12 + $0x188] sm:$0xff]
    %v3151 = vld [vmem:[#allocation12 + $0x190] sm:$0xff]
    %v3152 = vld [vmem:[#allocation12 + $0x198] sm:$0xff]
    %v3153 = vld [vmem:[#allocation12 + $0x1a0] sm:$0xff]
    %v3154 = vld [vmem:[#allocation12 + $0x1a8] sm:$0xff]
    %v3155 = vld [vmem:[#allocation12 + $0x1b0] sm:$0xff]
    %v3156 = vld [vmem:[#allocation12 + $0x1b8] sm:$0xff]
    %v3157 = vld [vmem:[#allocation12 + $0x1c0] sm:$0xff]
    %v3158 = vld [vmem:[#allocation12 + $0x1c8] sm:$0xff]
    %v3159 = vld [vmem:[#allocation12 + $0x1d0] sm:$0xff]
    %v3160 = vld [vmem:[#allocation12 + $0x1d8] sm:$0xff]
    %v3161 = vld [vmem:[#allocation12 + $0x1e0] sm:$0xff]
    %v3162 = vld [vmem:[#allocation12 + $0x1e8] sm:$0xff]
    %v3163 = vld [vmem:[#allocation12 + $0x1f0] sm:$0xff]
    %v3164 = vld [vmem:[#allocation12 + $0x1f8] sm:$0xff]
    %v3165 = vld [vmem:[#allocation13] sm:$0xf]
    %v3167 = vlaneseq
    %v3168 = vshrl.u32 %v3167, 7
    %v3169 = vsub.s32 0, %v3168
    %v3170 = vrot.slane %v3165, %v3169
    %v3171 = vlaneseq
    %v3172 = vshrl.u32 %v3171, 7
    %v3173 = vsub.s32 1, %v3172
    %v3174 = vrot.slane %v3165, %v3173
    %v3175 = vlaneseq
    %v3176 = vshrl.u32 %v3175, 7
    %v3177 = vsub.s32 2, %v3176
    %v3178 = vrot.slane %v3165, %v3177
    %v3179 = vlaneseq
    %v3180 = vshrl.u32 %v3179, 7
    %v3181 = vsub.s32 3, %v3180
    %v3182 = vrot.slane %v3165, %v3181
    %v3251 = vunpack.c.l.b16 %v3101
    %v3252 = vunpack.c.h.b16 %v3101
    %v3253 = vunpack.c.l.b16 %v3102
    %v3254 = vunpack.c.h.b16 %v3102
    %v3255 = vunpack.c.l.b16 %v3103
    %v3256 = vunpack.c.h.b16 %v3103
    %v3257 = vunpack.c.l.b16 %v3104
    %v3258 = vunpack.c.h.b16 %v3104
    %v3259 = vunpack.c.l.b16 %v3105
    %v3260 = vunpack.c.h.b16 %v3105
    %v3261 = vunpack.c.l.b16 %v3106
    %v3262 = vunpack.c.h.b16 %v3106
    %v3263 = vunpack.c.l.b16 %v3107
    %v3264 = vunpack.c.h.b16 %v3107
    %v3265 = vunpack.c.l.b16 %v3108
    %v3266 = vunpack.c.h.b16 %v3108
    %v3267 = vunpack.c.l.b16 %v3109
    %v3268 = vunpack.c.h.b16 %v3109
    %v3269 = vunpack.c.l.b16 %v3110
    %v3270 = vunpack.c.h.b16 %v3110
    %v3271 = vunpack.c.l.b16 %v3111
    %v3272 = vunpack.c.h.b16 %v3111
    %v3273 = vunpack.c.l.b16 %v3112
    %v3274 = vunpack.c.h.b16 %v3112
    %v3275 = vunpack.c.l.b16 %v3113
    %v3276 = vunpack.c.h.b16 %v3113
    %v3277 = vunpack.c.l.b16 %v3114
    %v3278 = vunpack.c.h.b16 %v3114
    %v3279 = vunpack.c.l.b16 %v3115
    %v3280 = vunpack.c.h.b16 %v3115
    %v3281 = vunpack.c.l.b16 %v3116
    %v3282 = vunpack.c.h.b16 %v3116
    %v3283 = vunpack.c.l.b16 %v3117
    %v3284 = vunpack.c.h.b16 %v3117
    %v3285 = vunpack.c.l.b16 %v3118
    %v3286 = vunpack.c.h.b16 %v3118
    %v3287 = vunpack.c.l.b16 %v3119
    %v3288 = vunpack.c.h.b16 %v3119
    %v3289 = vunpack.c.l.b16 %v3120
    %v3290 = vunpack.c.h.b16 %v3120
    %v3291 = vunpack.c.l.b16 %v3121
    %v3292 = vunpack.c.h.b16 %v3121
    %v3293 = vunpack.c.l.b16 %v3122
    %v3294 = vunpack.c.h.b16 %v3122
    %v3295 = vunpack.c.l.b16 %v3123
    %v3296 = vunpack.c.h.b16 %v3123
    %v3297 = vunpack.c.l.b16 %v3124
    %v3298 = vunpack.c.h.b16 %v3124
    %v3299 = vunpack.c.l.b16 %v3125
    %v3300 = vunpack.c.h.b16 %v3125
    %v3301 = vunpack.c.l.b16 %v3126
    %v3302 = vunpack.c.h.b16 %v3126
    %v3303 = vunpack.c.l.b16 %v3127
    %v3304 = vunpack.c.h.b16 %v3127
    %v3305 = vunpack.c.l.b16 %v3128
    %v3306 = vunpack.c.h.b16 %v3128
    %v3307 = vunpack.c.l.b16 %v3129
    %v3308 = vunpack.c.h.b16 %v3129
    %v3309 = vunpack.c.l.b16 %v3130
    %v3310 = vunpack.c.h.b16 %v3130
    %v3311 = vunpack.c.l.b16 %v3131
    %v3312 = vunpack.c.h.b16 %v3131
    %v3313 = vunpack.c.l.b16 %v3132
    %v3314 = vunpack.c.h.b16 %v3132
    %v3315 = vunpack.c.l.b16 %v3133
    %v3316 = vunpack.c.h.b16 %v3133
    %v3317 = vunpack.c.l.b16 %v3134
    %v3318 = vunpack.c.h.b16 %v3134
    %v3319 = vunpack.c.l.b16 %v3135
    %v3320 = vunpack.c.h.b16 %v3135
    %v3321 = vunpack.c.l.b16 %v3136
    %v3322 = vunpack.c.h.b16 %v3136
    %v3323 = vunpack.c.l.b16 %v3137
    %v3324 = vunpack.c.h.b16 %v3137
    %v3325 = vunpack.c.l.b16 %v3138
    %v3326 = vunpack.c.h.b16 %v3138
    %v3327 = vunpack.c.l.b16 %v3139
    %v3328 = vunpack.c.h.b16 %v3139
    %v3329 = vunpack.c.l.b16 %v3140
    %v3330 = vunpack.c.h.b16 %v3140
    %v3331 = vunpack.c.l.b16 %v3141
    %v3332 = vunpack.c.h.b16 %v3141
    %v3333 = vunpack.c.l.b16 %v3142
    %v3334 = vunpack.c.h.b16 %v3142
    %v3335 = vunpack.c.l.b16 %v3143
    %v3336 = vunpack.c.h.b16 %v3143
    %v3337 = vunpack.c.l.b16 %v3144
    %v3338 = vunpack.c.h.b16 %v3144
    %v3339 = vunpack.c.l.b16 %v3145
    %v3340 = vunpack.c.h.b16 %v3145
    %v3341 = vunpack.c.l.b16 %v3146
    %v3342 = vunpack.c.h.b16 %v3146
    %v3343 = vunpack.c.l.b16 %v3147
    %v3344 = vunpack.c.h.b16 %v3147
    %v3345 = vunpack.c.l.b16 %v3148
    %v3346 = vunpack.c.h.b16 %v3148
    %v3347 = vunpack.c.l.b16 %v3149
    %v3348 = vunpack.c.h.b16 %v3149
    %v3349 = vunpack.c.l.b16 %v3150
    %v3350 = vunpack.c.h.b16 %v3150
    %v3351 = vunpack.c.l.b16 %v3151
    %v3352 = vunpack.c.h.b16 %v3151
    %v3353 = vunpack.c.l.b16 %v3152
    %v3354 = vunpack.c.h.b16 %v3152
    %v3355 = vunpack.c.l.b16 %v3153
    %v3356 = vunpack.c.h.b16 %v3153
    %v3357 = vunpack.c.l.b16 %v3154
    %v3358 = vunpack.c.h.b16 %v3154
    %v3359 = vunpack.c.l.b16 %v3155
    %v3360 = vunpack.c.h.b16 %v3155
    %v3361 = vunpack.c.l.b16 %v3156
    %v3362 = vunpack.c.h.b16 %v3156
    %v3363 = vunpack.c.l.b16 %v3157
    %v3364 = vunpack.c.h.b16 %v3157
    %v3365 = vunpack.c.l.b16 %v3158
    %v3366 = vunpack.c.h.b16 %v3158
    %v3367 = vunpack.c.l.b16 %v3159
    %v3368 = vunpack.c.h.b16 %v3159
    %v3369 = vunpack.c.l.b16 %v3160
    %v3370 = vunpack.c.h.b16 %v3160
    %v3371 = vunpack.c.l.b16 %v3161
    %v3372 = vunpack.c.h.b16 %v3161
    %v3373 = vunpack.c.l.b16 %v3162
    %v3374 = vunpack.c.h.b16 %v3162
    %v3375 = vunpack.c.l.b16 %v3163
    %v3376 = vunpack.c.h.b16 %v3163
    %v3377 = vunpack.c.l.b16 %v3164
    %v3378 = vunpack.c.h.b16 %v3164
    %v3379 = vpack.c.b16 %v3255, %v3251
    %v3380 = vpack.c.b16 %v3256, %v3252
    %v3381 = vpack.c.b16 %v3257, %v3253
    %v3382 = vpack.c.b16 %v3258, %v3254
    %v3383 = vpack.c.b16 %v3263, %v3259
    %v3384 = vpack.c.b16 %v3264, %v3260
    %v3385 = vpack.c.b16 %v3265, %v3261
    %v3386 = vpack.c.b16 %v3266, %v3262
    %v3387 = vpack.c.b16 %v3271, %v3267
    %v3388 = vpack.c.b16 %v3272, %v3268
    %v3389 = vpack.c.b16 %v3273, %v3269
    %v3390 = vpack.c.b16 %v3274, %v3270
    %v3391 = vpack.c.b16 %v3279, %v3275
    %v3392 = vpack.c.b16 %v3280, %v3276
    %v3393 = vpack.c.b16 %v3281, %v3277
    %v3394 = vpack.c.b16 %v3282, %v3278
    %v3395 = vpack.c.b16 %v3287, %v3283
    %v3396 = vpack.c.b16 %v3288, %v3284
    %v3397 = vpack.c.b16 %v3289, %v3285
    %v3398 = vpack.c.b16 %v3290, %v3286
    %v3399 = vpack.c.b16 %v3295, %v3291
    %v3400 = vpack.c.b16 %v3296, %v3292
    %v3401 = vpack.c.b16 %v3297, %v3293
    %v3402 = vpack.c.b16 %v3298, %v3294
    %v3403 = vpack.c.b16 %v3303, %v3299
    %v3404 = vpack.c.b16 %v3304, %v3300
    %v3405 = vpack.c.b16 %v3305, %v3301
    %v3406 = vpack.c.b16 %v3306, %v3302
    %v3407 = vpack.c.b16 %v3311, %v3307
    %v3408 = vpack.c.b16 %v3312, %v3308
    %v3409 = vpack.c.b16 %v3313, %v3309
    %v3410 = vpack.c.b16 %v3314, %v3310
    %v3411 = vpack.c.b16 %v3319, %v3315
    %v3412 = vpack.c.b16 %v3320, %v3316
    %v3413 = vpack.c.b16 %v3321, %v3317
    %v3414 = vpack.c.b16 %v3322, %v3318
    %v3415 = vpack.c.b16 %v3327, %v3323
    %v3416 = vpack.c.b16 %v3328, %v3324
    %v3417 = vpack.c.b16 %v3329, %v3325
    %v3418 = vpack.c.b16 %v3330, %v3326
    %v3419 = vpack.c.b16 %v3335, %v3331
    %v3420 = vpack.c.b16 %v3336, %v3332
    %v3421 = vpack.c.b16 %v3337, %v3333
    %v3422 = vpack.c.b16 %v3338, %v3334
    %v3423 = vpack.c.b16 %v3343, %v3339
    %v3424 = vpack.c.b16 %v3344, %v3340
    %v3425 = vpack.c.b16 %v3345, %v3341
    %v3426 = vpack.c.b16 %v3346, %v3342
    %v3427 = vpack.c.b16 %v3351, %v3347
    %v3428 = vpack.c.b16 %v3352, %v3348
    %v3429 = vpack.c.b16 %v3353, %v3349
    %v3430 = vpack.c.b16 %v3354, %v3350
    %v3431 = vpack.c.b16 %v3359, %v3355
    %v3432 = vpack.c.b16 %v3360, %v3356
    %v3433 = vpack.c.b16 %v3361, %v3357
    %v3434 = vpack.c.b16 %v3362, %v3358
    %v3435 = vpack.c.b16 %v3367, %v3363
    %v3436 = vpack.c.b16 %v3368, %v3364
    %v3437 = vpack.c.b16 %v3369, %v3365
    %v3438 = vpack.c.b16 %v3370, %v3366
    %v3439 = vpack.c.b16 %v3375, %v3371
    %v3440 = vpack.c.b16 %v3376, %v3372
    %v3441 = vpack.c.b16 %v3377, %v3373
    %v3442 = vpack.c.b16 %v3378, %v3374
    %3507 = vmatprep.subr.bf16.mxu0 %v3380
    %3508 = vmatpush1.bf16.msra.mxu0 %v3379
    %3509 = vmatprep.subr.bf16.mxu0 %v3384
    %3510 = vmatpush1.bf16.msra.mxu0 %v3383
    %3511 = vmatprep.subr.bf16.mxu0 %v3388
    %3512 = vmatpush1.bf16.msra.mxu0 %v3387
    %3513 = vmatprep.subr.bf16.mxu0 %v3392
    %3514 = vmatpush1.bf16.msra.mxu0 %v3391
    %3515 = vmatprep.subr.bf16.mxu0 %v3396
    %3516 = vmatpush1.bf16.msra.mxu0 %v3395
    %3517 = vmatprep.subr.bf16.mxu0 %v3400
    %3518 = vmatpush1.bf16.msra.mxu0 %v3399
    %3519 = vmatprep.subr.bf16.mxu0 %v3404
    %3520 = vmatpush1.bf16.msra.mxu0 %v3403
    %3521 = vmatprep.subr.bf16.mxu0 %v3408
    %3522 = vmatpush1.bf16.msra.mxu0 %v3407
    %3523 = vmatprep.subr.bf16.mxu0 %v3412
    %3524 = vmatpush1.bf16.msra.mxu0 %v3411
    %3525 = vmatprep.subr.bf16.mxu0 %v3416
    %3526 = vmatpush1.bf16.msra.mxu0 %v3415
    %3527 = vmatprep.subr.bf16.mxu0 %v3420
    %3528 = vmatpush1.bf16.msra.mxu0 %v3419
    %3529 = vmatprep.subr.bf16.mxu0 %v3424
    %3530 = vmatpush1.bf16.msra.mxu0 %v3423
    %3531 = vmatprep.subr.bf16.mxu0 %v3428
    %3532 = vmatpush1.bf16.msra.mxu0 %v3427
    %3533 = vmatprep.subr.bf16.mxu0 %v3432
    %3534 = vmatpush1.bf16.msra.mxu0 %v3431
    %3535 = vmatprep.subr.bf16.mxu0 %v3436
    %3536 = vmatpush1.bf16.msra.mxu0 %v3435
    %3537 = vmatprep.subr.bf16.mxu0 %v3440
    %3538 = vmatpush1.bf16.msra.mxu0 %v3439
    %3539 = vmatprep.mubr.bf16.mxu0 %v3100
    %3540 = vmatmul.mubr.bf16.gmra.mrb[0].mxu0 %v3099
    %v3541 = vpop.f32.mrb[0].mxu0
    %v3542 = vadd.f32 %v3170, %v3541
    %v3543 = vpop.f32.mrb[0].mxu0
    %v3544 = vadd.f32 %v3174, %v3543
    %v3545 = vpop.f32.mrb[0].mxu0
    %v3546 = vpop.f32.mrb[0].mxu0
    %3547 = vdwg.mxu0
    %3548 = vmatprep.subr.bf16.mxu0 %v3382
    %3549 = vmatpush1.bf16.msra.mxu0 %v3381
    %3550 = vmatprep.subr.bf16.mxu0 %v3386
    %3551 = vmatpush1.bf16.msra.mxu0 %v3385
    %3552 = vmatprep.subr.bf16.mxu0 %v3390
    %3553 = vmatpush1.bf16.msra.mxu0 %v3389
    %3554 = vmatprep.subr.bf16.mxu0 %v3394
    %3555 = vmatpush1.bf16.msra.mxu0 %v3393
    %3556 = vmatprep.subr.bf16.mxu0 %v3398
    %3557 = vmatpush1.bf16.msra.mxu0 %v3397
    %3558 = vmatprep.subr.bf16.mxu0 %v3402
    %3559 = vmatpush1.bf16.msra.mxu0 %v3401
    %3560 = vmatprep.subr.bf16.mxu0 %v3406
    %3561 = vmatpush1.bf16.msra.mxu0 %v3405
    %3562 = vmatprep.subr.bf16.mxu0 %v3410
    %3563 = vmatpush1.bf16.msra.mxu0 %v3409
    %3564 = vmatprep.subr.bf16.mxu0 %v3414
    %3565 = vmatpush1.bf16.msra.mxu0 %v3413
    %3566 = vmatprep.subr.bf16.mxu0 %v3418
    %3567 = vmatpush1.bf16.msra.mxu0 %v3417
    %3568 = vmatprep.subr.bf16.mxu0 %v3422
    %3569 = vmatpush1.bf16.msra.mxu0 %v3421
    %3570 = vmatprep.subr.bf16.mxu0 %v3426
    %3571 = vmatpush1.bf16.msra.mxu0 %v3425
    %3572 = vmatprep.subr.bf16.mxu0 %v3430
    %3573 = vmatpush1.bf16.msra.mxu0 %v3429
    %3574 = vmatprep.subr.bf16.mxu0 %v3434
    %3575 = vmatpush1.bf16.msra.mxu0 %v3433
    %3576 = vmatprep.subr.bf16.mxu0 %v3438
    %3577 = vmatpush1.bf16.msra.mxu0 %v3437
    %3578 = vmatprep.subr.bf16.mxu0 %v3442
    %3579 = vmatpush1.bf16.msra.mxu0 %v3441
    %3580 = vmatprep.mubr.bf16.mxu0 %v3100
    %3581 = vmatmul.mubr.bf16.gmra.mrb[0].mxu0 %v3099
    %v3582 = vpop.f32.mrb[0].mxu0
    %v3583 = vadd.f32 %v3178, %v3582
    %v3584 = vpop.f32.mrb[0].mxu0
    %v3585 = vadd.f32 %v3182, %v3584
    %v3586 = vpop.f32.mrb[0].mxu0
    %v3587 = vpop.f32.mrb[0].mxu0
    %3588 = vdwg.mxu0
    %v3589 = vmax.f32 %v3542, 0.0
    %v3590 = vmax.f32 %v3544, 0.0
    %v3591 = vmax.f32 %v3583, 0.0
    %v3592 = vmax.f32 %v3585, 0.0
    %3593 = vst [vmem:[#allocation3] sm:$0xff] %v3589
    %3594 = vst [vmem:[#allocation3 + $0x8] sm:$0xff] %v3590
    %3595 = vst [vmem:[#allocation3 + $0x10] sm:$0xff] %v3591
    %3596 = vst [vmem:[#allocation3 + $0x18] sm:$0xff] %v3592
    %v3597 = vld [vmem:[#allocation3] sm:$0xff]
    %v3598 = vld [vmem:[#allocation3 + $0x8] sm:$0xff]
    %v3599 = vld [vmem:[#allocation3 + $0x10] sm:$0xff]
    %v3600 = vld [vmem:[#allocation3 + $0x18] sm:$0xff]
    %v3601 = vpack.c.bf16 %v3598, %v3597
    %v3602 = vpack.c.bf16 %v3600, %v3599
    %v3603 = vld [vmem:[#allocation15] sm:$0xff]
    %v3604 = vld [vmem:[#allocation15 + $0x8] sm:$0xff]
    %v3605 = vld [vmem:[#allocation15 + $0x10] sm:$0xff]
    %v3606 = vld [vmem:[#allocation15 + $0x18] sm:$0xff]
    %v3607 = vld [vmem:[#allocation15 + $0x20] sm:$0xff]
    %v3608 = vld [vmem:[#allocation15 + $0x28] sm:$0xff]
    %v3609 = vld [vmem:[#allocation15 + $0x30] sm:$0xff]
    %v3610 = vld [vmem:[#allocation15 + $0x38] sm:$0xff]
    %v3611 = vld [vmem:[#allocation15 + $0x40] sm:$0xff]
    %v3612 = vld [vmem:[#allocation15 + $0x48] sm:$0xff]
    %v3613 = vld [vmem:[#allocation15 + $0x50] sm:$0xff]
    %v3614 = vld [vmem:[#allocation15 + $0x58] sm:$0xff]
    %v3615 = vld [vmem:[#allocation15 + $0x60] sm:$0xff]
    %v3616 = vld [vmem:[#allocation15 + $0x68] sm:$0xff]
    %v3617 = vld [vmem:[#allocation15 + $0x70] sm:$0xff]
    %v3618 = vld [vmem:[#allocation15 + $0x78] sm:$0xff]
    %v3619 = vld [vmem:[#allocation15 + $0x80] sm:$0xff]
    %v3620 = vld [vmem:[#allocation15 + $0x88] sm:$0xff]
    %v3621 = vld [vmem:[#allocation15 + $0x90] sm:$0xff]
    %v3622 = vld [vmem:[#allocation15 + $0x98] sm:$0xff]
    %v3623 = vld [vmem:[#allocation15 + $0xa0] sm:$0xff]
    %v3624 = vld [vmem:[#allocation15 + $0xa8] sm:$0xff]
    %v3625 = vld [vmem:[#allocation15 + $0xb0] sm:$0xff]
    %v3626 = vld [vmem:[#allocation15 + $0xb8] sm:$0xff]
    %v3627 = vld [vmem:[#allocation15 + $0xc0] sm:$0xff]
    %v3628 = vld [vmem:[#allocation15 + $0xc8] sm:$0xff]
    %v3629 = vld [vmem:[#allocation15 + $0xd0] sm:$0xff]
    %v3630 = vld [vmem:[#allocation15 + $0xd8] sm:$0xff]
    %v3631 = vld [vmem:[#allocation15 + $0xe0] sm:$0xff]
    %v3632 = vld [vmem:[#allocation15 + $0xe8] sm:$0xff]
    %v3633 = vld [vmem:[#allocation15 + $0xf0] sm:$0xff]
    %v3634 = vld [vmem:[#allocation15 + $0xf8] sm:$0xff]
    %v3635 = vld [vmem:[#allocation15 + $0x100] sm:$0xff]
    %v3636 = vld [vmem:[#allocation15 + $0x108] sm:$0xff]
    %v3637 = vld [vmem:[#allocation15 + $0x110] sm:$0xff]
    %v3638 = vld [vmem:[#allocation15 + $0x118] sm:$0xff]
    %v3639 = vld [vmem:[#allocation15 + $0x120] sm:$0xff]
    %v3640 = vld [vmem:[#allocation15 + $0x128] sm:$0xff]
    %v3641 = vld [vmem:[#allocation15 + $0x130] sm:$0xff]
    %v3642 = vld [vmem:[#allocation15 + $0x138] sm:$0xff]
    %v3643 = vld [vmem:[#allocation15 + $0x140] sm:$0xff]
    %v3644 = vld [vmem:[#allocation15 + $0x148] sm:$0xff]
    %v3645 = vld [vmem:[#allocation15 + $0x150] sm:$0xff]
    %v3646 = vld [vmem:[#allocation15 + $0x158] sm:$0xff]
    %v3647 = vld [vmem:[#allocation15 + $0x160] sm:$0xff]
    %v3648 = vld [vmem:[#allocation15 + $0x168] sm:$0xff]
    %v3649 = vld [vmem:[#allocation15 + $0x170] sm:$0xff]
    %v3650 = vld [vmem:[#allocation15 + $0x178] sm:$0xff]
    %v3651 = vld [vmem:[#allocation15 + $0x180] sm:$0xff]
    %v3652 = vld [vmem:[#allocation15 + $0x188] sm:$0xff]
    %v3653 = vld [vmem:[#allocation15 + $0x190] sm:$0xff]
    %v3654 = vld [vmem:[#allocation15 + $0x198] sm:$0xff]
    %v3655 = vld [vmem:[#allocation15 + $0x1a0] sm:$0xff]
    %v3656 = vld [vmem:[#allocation15 + $0x1a8] sm:$0xff]
    %v3657 = vld [vmem:[#allocation15 + $0x1b0] sm:$0xff]
    %v3658 = vld [vmem:[#allocation15 + $0x1b8] sm:$0xff]
    %v3659 = vld [vmem:[#allocation15 + $0x1c0] sm:$0xff]
    %v3660 = vld [vmem:[#allocation15 + $0x1c8] sm:$0xff]
    %v3661 = vld [vmem:[#allocation15 + $0x1d0] sm:$0xff]
    %v3662 = vld [vmem:[#allocation15 + $0x1d8] sm:$0xff]
    %v3663 = vld [vmem:[#allocation15 + $0x1e0] sm:$0xff]
    %v3664 = vld [vmem:[#allocation15 + $0x1e8] sm:$0xff]
    %v3665 = vld [vmem:[#allocation15 + $0x1f0] sm:$0xff]
    %v3666 = vld [vmem:[#allocation15 + $0x1f8] sm:$0xff]
    %v3667 = vld [vmem:[#allocation15 + $0x200] sm:$0xff]
    %v3668 = vld [vmem:[#allocation15 + $0x208] sm:$0xff]
    %v3669 = vld [vmem:[#allocation15 + $0x210] sm:$0xff]
    %v3670 = vld [vmem:[#allocation15 + $0x218] sm:$0xff]
    %v3671 = vld [vmem:[#allocation15 + $0x220] sm:$0xff]
    %v3672 = vld [vmem:[#allocation15 + $0x228] sm:$0xff]
    %v3673 = vld [vmem:[#allocation15 + $0x230] sm:$0xff]
    %v3674 = vld [vmem:[#allocation15 + $0x238] sm:$0xff]
    %v3675 = vld [vmem:[#allocation15 + $0x240] sm:$0xff]
    %v3676 = vld [vmem:[#allocation15 + $0x248] sm:$0xff]
    %v3677 = vld [vmem:[#allocation15 + $0x250] sm:$0xff]
    %v3678 = vld [vmem:[#allocation15 + $0x258] sm:$0xff]
    %v3679 = vld [vmem:[#allocation15 + $0x260] sm:$0xff]
    %v3680 = vld [vmem:[#allocation15 + $0x268] sm:$0xff]
    %v3681 = vld [vmem:[#allocation15 + $0x270] sm:$0xff]
    %v3682 = vld [vmem:[#allocation15 + $0x278] sm:$0xff]
    %v3683 = vld [vmem:[#allocation15 + $0x280] sm:$0xff]
    %v3684 = vld [vmem:[#allocation15 + $0x288] sm:$0xff]
    %v3685 = vld [vmem:[#allocation15 + $0x290] sm:$0xff]
    %v3686 = vld [vmem:[#allocation15 + $0x298] sm:$0xff]
    %v3687 = vld [vmem:[#allocation15 + $0x2a0] sm:$0xff]
    %v3688 = vld [vmem:[#allocation15 + $0x2a8] sm:$0xff]
    %v3689 = vld [vmem:[#allocation15 + $0x2b0] sm:$0xff]
    %v3690 = vld [vmem:[#allocation15 + $0x2b8] sm:$0xff]
    %v3691 = vld [vmem:[#allocation15 + $0x2c0] sm:$0xff]
    %v3692 = vld [vmem:[#allocation15 + $0x2c8] sm:$0xff]
    %v3693 = vld [vmem:[#allocation15 + $0x2d0] sm:$0xff]
    %v3694 = vld [vmem:[#allocation15 + $0x2d8] sm:$0xff]
    %v3695 = vld [vmem:[#allocation15 + $0x2e0] sm:$0xff]
    %v3696 = vld [vmem:[#allocation15 + $0x2e8] sm:$0xff]
    %v3697 = vld [vmem:[#allocation15 + $0x2f0] sm:$0xff]
    %v3698 = vld [vmem:[#allocation15 + $0x2f8] sm:$0xff]
    %v3699 = vld [vmem:[#allocation15 + $0x300] sm:$0xff]
    %v3700 = vld [vmem:[#allocation15 + $0x308] sm:$0xff]
    %v3701 = vld [vmem:[#allocation15 + $0x310] sm:$0xff]
    %v3702 = vld [vmem:[#allocation15 + $0x318] sm:$0xff]
    %v3703 = vld [vmem:[#allocation15 + $0x320] sm:$0xff]
    %v3704 = vld [vmem:[#allocation15 + $0x328] sm:$0xff]
    %v3705 = vld [vmem:[#allocation15 + $0x330] sm:$0xff]
    %v3706 = vld [vmem:[#allocation15 + $0x338] sm:$0xff]
    %v3707 = vld [vmem:[#allocation15 + $0x340] sm:$0xff]
    %v3708 = vld [vmem:[#allocation15 + $0x348] sm:$0xff]
    %v3709 = vld [vmem:[#allocation15 + $0x350] sm:$0xff]
    %v3710 = vld [vmem:[#allocation15 + $0x358] sm:$0xff]
    %v3711 = vld [vmem:[#allocation15 + $0x360] sm:$0xff]
    %v3712 = vld [vmem:[#allocation15 + $0x368] sm:$0xff]
    %v3713 = vld [vmem:[#allocation15 + $0x370] sm:$0xff]
    %v3714 = vld [vmem:[#allocation15 + $0x378] sm:$0xff]
    %v3715 = vld [vmem:[#allocation15 + $0x380] sm:$0xff]
    %v3716 = vld [vmem:[#allocation15 + $0x388] sm:$0xff]
    %v3717 = vld [vmem:[#allocation15 + $0x390] sm:$0xff]
    %v3718 = vld [vmem:[#allocation15 + $0x398] sm:$0xff]
    %v3719 = vld [vmem:[#allocation15 + $0x3a0] sm:$0xff]
    %v3720 = vld [vmem:[#allocation15 + $0x3a8] sm:$0xff]
    %v3721 = vld [vmem:[#allocation15 + $0x3b0] sm:$0xff]
    %v3722 = vld [vmem:[#allocation15 + $0x3b8] sm:$0xff]
    %v3723 = vld [vmem:[#allocation15 + $0x3c0] sm:$0xff]
    %v3724 = vld [vmem:[#allocation15 + $0x3c8] sm:$0xff]
    %v3725 = vld [vmem:[#allocation15 + $0x3d0] sm:$0xff]
    %v3726 = vld [vmem:[#allocation15 + $0x3d8] sm:$0xff]
    %v3727 = vld [vmem:[#allocation15 + $0x3e0] sm:$0xff]
    %v3728 = vld [vmem:[#allocation15 + $0x3e8] sm:$0xff]
    %v3729 = vld [vmem:[#allocation15 + $0x3f0] sm:$0xff]
    %v3730 = vld [vmem:[#allocation15 + $0x3f8] sm:$0xff]
    %v3731 = vld [vmem:[#allocation16] sm:$0xff]
    %v3732 = vld [vmem:[#allocation16 + $0x8] sm:$0xff]
    %v3735 = vlaneseq
    %v3736 = vshrl.u32 %v3735, 7
    %v3737 = vsub.s32 0, %v3736
    %v3738 = vrot.slane %v3731, %v3737
    %v3739 = vlaneseq
    %v3740 = vshrl.u32 %v3739, 7
    %v3741 = vsub.s32 1, %v3740
    %v3742 = vrot.slane %v3731, %v3741
    %v3743 = vlaneseq
    %v3744 = vshrl.u32 %v3743, 7
    %v3745 = vsub.s32 2, %v3744
    %v3746 = vrot.slane %v3731, %v3745
    %v3747 = vlaneseq
    %v3748 = vshrl.u32 %v3747, 7
    %v3749 = vsub.s32 3, %v3748
    %v3750 = vrot.slane %v3731, %v3749
    %v3751 = vlaneseq
    %v3752 = vshrl.u32 %v3751, 7
    %v3753 = vsub.s32 4, %v3752
    %v3754 = vrot.slane %v3731, %v3753
    %v3755 = vlaneseq
    %v3756 = vshrl.u32 %v3755, 7
    %v3757 = vsub.s32 5, %v3756
    %v3758 = vrot.slane %v3731, %v3757
    %v3759 = vlaneseq
    %v3760 = vshrl.u32 %v3759, 7
    %v3761 = vsub.s32 6, %v3760
    %v3762 = vrot.slane %v3731, %v3761
    %v3763 = vlaneseq
    %v3764 = vshrl.u32 %v3763, 7
    %v3765 = vsub.s32 7, %v3764
    %v3766 = vrot.slane %v3731, %v3765
    %v3767 = vlaneseq
    %v3768 = vshrl.u32 %v3767, 7
    %v3769 = vsub.s32 0, %v3768
    %v3770 = vrot.slane %v3732, %v3769
    %v3771 = vlaneseq
    %v3772 = vshrl.u32 %v3771, 7
    %v3773 = vsub.s32 1, %v3772
    %v3774 = vrot.slane %v3732, %v3773
    %v3775 = vlaneseq
    %v3776 = vshrl.u32 %v3775, 7
    %v3777 = vsub.s32 2, %v3776
    %v3778 = vrot.slane %v3732, %v3777
    %v3779 = vlaneseq
    %v3780 = vshrl.u32 %v3779, 7
    %v3781 = vsub.s32 3, %v3780
    %v3782 = vrot.slane %v3732, %v3781
    %v3783 = vlaneseq
    %v3784 = vshrl.u32 %v3783, 7
    %v3785 = vsub.s32 4, %v3784
    %v3786 = vrot.slane %v3732, %v3785
    %v3787 = vlaneseq
    %v3788 = vshrl.u32 %v3787, 7
    %v3789 = vsub.s32 5, %v3788
    %v3790 = vrot.slane %v3732, %v3789
    %v3791 = vlaneseq
    %v3792 = vshrl.u32 %v3791, 7
    %v3793 = vsub.s32 6, %v3792
    %v3794 = vrot.slane %v3732, %v3793
    %v3795 = vlaneseq
    %v3796 = vshrl.u32 %v3795, 7
    %v3797 = vsub.s32 7, %v3796
    %v3798 = vrot.slane %v3732, %v3797
    %v3943 = vunpack.c.l.b16 %v3603
    %v3944 = vunpack.c.h.b16 %v3603
    %v3945 = vunpack.c.l.b16 %v3604
    %v3946 = vunpack.c.h.b16 %v3604
    %v3947 = vunpack.c.l.b16 %v3605
    %v3948 = vunpack.c.h.b16 %v3605
    %v3949 = vunpack.c.l.b16 %v3606
    %v3950 = vunpack.c.h.b16 %v3606
    %v3951 = vunpack.c.l.b16 %v3607
    %v3952 = vunpack.c.h.b16 %v3607
    %v3953 = vunpack.c.l.b16 %v3608
    %v3954 = vunpack.c.h.b16 %v3608
    %v3955 = vunpack.c.l.b16 %v3609
    %v3956 = vunpack.c.h.b16 %v3609
    %v3957 = vunpack.c.l.b16 %v3610
    %v3958 = vunpack.c.h.b16 %v3610
    %v3959 = vunpack.c.l.b16 %v3611
    %v3960 = vunpack.c.h.b16 %v3611
    %v3961 = vunpack.c.l.b16 %v3612
    %v3962 = vunpack.c.h.b16 %v3612
    %v3963 = vunpack.c.l.b16 %v3613
    %v3964 = vunpack.c.h.b16 %v3613
    %v3965 = vunpack.c.l.b16 %v3614
    %v3966 = vunpack.c.h.b16 %v3614
    %v3967 = vunpack.c.l.b16 %v3615
    %v3968 = vunpack.c.h.b16 %v3615
    %v3969 = vunpack.c.l.b16 %v3616
    %v3970 = vunpack.c.h.b16 %v3616
    %v3971 = vunpack.c.l.b16 %v3617
    %v3972 = vunpack.c.h.b16 %v3617
    %v3973 = vunpack.c.l.b16 %v3618
    %v3974 = vunpack.c.h.b16 %v3618
    %v3975 = vunpack.c.l.b16 %v3619
    %v3976 = vunpack.c.h.b16 %v3619
    %v3977 = vunpack.c.l.b16 %v3620
    %v3978 = vunpack.c.h.b16 %v3620
    %v3979 = vunpack.c.l.b16 %v3621
    %v3980 = vunpack.c.h.b16 %v3621
    %v3981 = vunpack.c.l.b16 %v3622
    %v3982 = vunpack.c.h.b16 %v3622
    %v3983 = vunpack.c.l.b16 %v3623
    %v3984 = vunpack.c.h.b16 %v3623
    %v3985 = vunpack.c.l.b16 %v3624
    %v3986 = vunpack.c.h.b16 %v3624
    %v3987 = vunpack.c.l.b16 %v3625
    %v3988 = vunpack.c.h.b16 %v3625
    %v3989 = vunpack.c.l.b16 %v3626
    %v3990 = vunpack.c.h.b16 %v3626
    %v3991 = vunpack.c.l.b16 %v3627
    %v3992 = vunpack.c.h.b16 %v3627
    %v3993 = vunpack.c.l.b16 %v3628
    %v3994 = vunpack.c.h.b16 %v3628
    %v3995 = vunpack.c.l.b16 %v3629
    %v3996 = vunpack.c.h.b16 %v3629
    %v3997 = vunpack.c.l.b16 %v3630
    %v3998 = vunpack.c.h.b16 %v3630
    %v3999 = vunpack.c.l.b16 %v3631
    %v4000 = vunpack.c.h.b16 %v3631
    %v4001 = vunpack.c.l.b16 %v3632
    %v4002 = vunpack.c.h.b16 %v3632
    %v4003 = vunpack.c.l.b16 %v3633
    %v4004 = vunpack.c.h.b16 %v3633
    %v4005 = vunpack.c.l.b16 %v3634
    %v4006 = vunpack.c.h.b16 %v3634
    %v4007 = vunpack.c.l.b16 %v3635
    %v4008 = vunpack.c.h.b16 %v3635
    %v4009 = vunpack.c.l.b16 %v3636
    %v4010 = vunpack.c.h.b16 %v3636
    %v4011 = vunpack.c.l.b16 %v3637
    %v4012 = vunpack.c.h.b16 %v3637
    %v4013 = vunpack.c.l.b16 %v3638
    %v4014 = vunpack.c.h.b16 %v3638
    %v4015 = vunpack.c.l.b16 %v3639
    %v4016 = vunpack.c.h.b16 %v3639
    %v4017 = vunpack.c.l.b16 %v3640
    %v4018 = vunpack.c.h.b16 %v3640
    %v4019 = vunpack.c.l.b16 %v3641
    %v4020 = vunpack.c.h.b16 %v3641
    %v4021 = vunpack.c.l.b16 %v3642
    %v4022 = vunpack.c.h.b16 %v3642
    %v4023 = vunpack.c.l.b16 %v3643
    %v4024 = vunpack.c.h.b16 %v3643
    %v4025 = vunpack.c.l.b16 %v3644
    %v4026 = vunpack.c.h.b16 %v3644
    %v4027 = vunpack.c.l.b16 %v3645
    %v4028 = vunpack.c.h.b16 %v3645
    %v4029 = vunpack.c.l.b16 %v3646
    %v4030 = vunpack.c.h.b16 %v3646
    %v4031 = vunpack.c.l.b16 %v3647
    %v4032 = vunpack.c.h.b16 %v3647
    %v4033 = vunpack.c.l.b16 %v3648
    %v4034 = vunpack.c.h.b16 %v3648
    %v4035 = vunpack.c.l.b16 %v3649
    %v4036 = vunpack.c.h.b16 %v3649
    %v4037 = vunpack.c.l.b16 %v3650
    %v4038 = vunpack.c.h.b16 %v3650
    %v4039 = vunpack.c.l.b16 %v3651
    %v4040 = vunpack.c.h.b16 %v3651
    %v4041 = vunpack.c.l.b16 %v3652
    %v4042 = vunpack.c.h.b16 %v3652
    %v4043 = vunpack.c.l.b16 %v3653
    %v4044 = vunpack.c.h.b16 %v3653
    %v4045 = vunpack.c.l.b16 %v3654
    %v4046 = vunpack.c.h.b16 %v3654
    %v4047 = vunpack.c.l.b16 %v3655
    %v4048 = vunpack.c.h.b16 %v3655
    %v4049 = vunpack.c.l.b16 %v3656
    %v4050 = vunpack.c.h.b16 %v3656
    %v4051 = vunpack.c.l.b16 %v3657
    %v4052 = vunpack.c.h.b16 %v3657
    %v4053 = vunpack.c.l.b16 %v3658
    %v4054 = vunpack.c.h.b16 %v3658
    %v4055 = vunpack.c.l.b16 %v3659
    %v4056 = vunpack.c.h.b16 %v3659
    %v4057 = vunpack.c.l.b16 %v3660
    %v4058 = vunpack.c.h.b16 %v3660
    %v4059 = vunpack.c.l.b16 %v3661
    %v4060 = vunpack.c.h.b16 %v3661
    %v4061 = vunpack.c.l.b16 %v3662
    %v4062 = vunpack.c.h.b16 %v3662
    %v4063 = vunpack.c.l.b16 %v3663
    %v4064 = vunpack.c.h.b16 %v3663
    %v4065 = vunpack.c.l.b16 %v3664
    %v4066 = vunpack.c.h.b16 %v3664
    %v4067 = vunpack.c.l.b16 %v3665
    %v4068 = vunpack.c.h.b16 %v3665
    %v4069 = vunpack.c.l.b16 %v3666
    %v4070 = vunpack.c.h.b16 %v3666
    %v4071 = vunpack.c.l.b16 %v3667
    %v4072 = vunpack.c.h.b16 %v3667
    %v4073 = vunpack.c.l.b16 %v3668
    %v4074 = vunpack.c.h.b16 %v3668
    %v4075 = vunpack.c.l.b16 %v3669
    %v4076 = vunpack.c.h.b16 %v3669
    %v4077 = vunpack.c.l.b16 %v3670
    %v4078 = vunpack.c.h.b16 %v3670
    %v4079 = vunpack.c.l.b16 %v3671
    %v4080 = vunpack.c.h.b16 %v3671
    %v4081 = vunpack.c.l.b16 %v3672
    %v4082 = vunpack.c.h.b16 %v3672
    %v4083 = vunpack.c.l.b16 %v3673
    %v4084 = vunpack.c.h.b16 %v3673
    %v4085 = vunpack.c.l.b16 %v3674
    %v4086 = vunpack.c.h.b16 %v3674
    %v4087 = vunpack.c.l.b16 %v3675
    %v4088 = vunpack.c.h.b16 %v3675
    %v4089 = vunpack.c.l.b16 %v3676
    %v4090 = vunpack.c.h.b16 %v3676
    %v4091 = vunpack.c.l.b16 %v3677
    %v4092 = vunpack.c.h.b16 %v3677
    %v4093 = vunpack.c.l.b16 %v3678
    %v4094 = vunpack.c.h.b16 %v3678
    %v4095 = vunpack.c.l.b16 %v3679
    %v4096 = vunpack.c.h.b16 %v3679
    %v4097 = vunpack.c.l.b16 %v3680
    %v4098 = vunpack.c.h.b16 %v3680
    %v4099 = vunpack.c.l.b16 %v3681
    %v4100 = vunpack.c.h.b16 %v3681
    %v4101 = vunpack.c.l.b16 %v3682
    %v4102 = vunpack.c.h.b16 %v3682
    %v4103 = vunpack.c.l.b16 %v3683
    %v4104 = vunpack.c.h.b16 %v3683
    %v4105 = vunpack.c.l.b16 %v3684
    %v4106 = vunpack.c.h.b16 %v3684
    %v4107 = vunpack.c.l.b16 %v3685
    %v4108 = vunpack.c.h.b16 %v3685
    %v4109 = vunpack.c.l.b16 %v3686
    %v4110 = vunpack.c.h.b16 %v3686
    %v4111 = vunpack.c.l.b16 %v3687
    %v4112 = vunpack.c.h.b16 %v3687
    %v4113 = vunpack.c.l.b16 %v3688
    %v4114 = vunpack.c.h.b16 %v3688
    %v4115 = vunpack.c.l.b16 %v3689
    %v4116 = vunpack.c.h.b16 %v3689
    %v4117 = vunpack.c.l.b16 %v3690
    %v4118 = vunpack.c.h.b16 %v3690
    %v4119 = vunpack.c.l.b16 %v3691
    %v4120 = vunpack.c.h.b16 %v3691
    %v4121 = vunpack.c.l.b16 %v3692
    %v4122 = vunpack.c.h.b16 %v3692
    %v4123 = vunpack.c.l.b16 %v3693
    %v4124 = vunpack.c.h.b16 %v3693
    %v4125 = vunpack.c.l.b16 %v3694
    %v4126 = vunpack.c.h.b16 %v3694
    %v4127 = vunpack.c.l.b16 %v3695
    %v4128 = vunpack.c.h.b16 %v3695
    %v4129 = vunpack.c.l.b16 %v3696
    %v4130 = vunpack.c.h.b16 %v3696
    %v4131 = vunpack.c.l.b16 %v3697
    %v4132 = vunpack.c.h.b16 %v3697
    %v4133 = vunpack.c.l.b16 %v3698
    %v4134 = vunpack.c.h.b16 %v3698
    %v4135 = vunpack.c.l.b16 %v3699
    %v4136 = vunpack.c.h.b16 %v3699
    %v4137 = vunpack.c.l.b16 %v3700
    %v4138 = vunpack.c.h.b16 %v3700
    %v4139 = vunpack.c.l.b16 %v3701
    %v4140 = vunpack.c.h.b16 %v3701
    %v4141 = vunpack.c.l.b16 %v3702
    %v4142 = vunpack.c.h.b16 %v3702
    %v4143 = vunpack.c.l.b16 %v3703
    %v4144 = vunpack.c.h.b16 %v3703
    %v4145 = vunpack.c.l.b16 %v3704
    %v4146 = vunpack.c.h.b16 %v3704
    %v4147 = vunpack.c.l.b16 %v3705
    %v4148 = vunpack.c.h.b16 %v3705
    %v4149 = vunpack.c.l.b16 %v3706
    %v4150 = vunpack.c.h.b16 %v3706
    %v4151 = vunpack.c.l.b16 %v3707
    %v4152 = vunpack.c.h.b16 %v3707
    %v4153 = vunpack.c.l.b16 %v3708
    %v4154 = vunpack.c.h.b16 %v3708
    %v4155 = vunpack.c.l.b16 %v3709
    %v4156 = vunpack.c.h.b16 %v3709
    %v4157 = vunpack.c.l.b16 %v3710
    %v4158 = vunpack.c.h.b16 %v3710
    %v4159 = vunpack.c.l.b16 %v3711
    %v4160 = vunpack.c.h.b16 %v3711
    %v4161 = vunpack.c.l.b16 %v3712
    %v4162 = vunpack.c.h.b16 %v3712
    %v4163 = vunpack.c.l.b16 %v3713
    %v4164 = vunpack.c.h.b16 %v3713
    %v4165 = vunpack.c.l.b16 %v3714
    %v4166 = vunpack.c.h.b16 %v3714
    %v4167 = vunpack.c.l.b16 %v3715
    %v4168 = vunpack.c.h.b16 %v3715
    %v4169 = vunpack.c.l.b16 %v3716
    %v4170 = vunpack.c.h.b16 %v3716
    %v4171 = vunpack.c.l.b16 %v3717
    %v4172 = vunpack.c.h.b16 %v3717
    %v4173 = vunpack.c.l.b16 %v3718
    %v4174 = vunpack.c.h.b16 %v3718
    %v4175 = vunpack.c.l.b16 %v3719
    %v4176 = vunpack.c.h.b16 %v3719
    %v4177 = vunpack.c.l.b16 %v3720
    %v4178 = vunpack.c.h.b16 %v3720
    %v4179 = vunpack.c.l.b16 %v3721
    %v4180 = vunpack.c.h.b16 %v3721
    %v4181 = vunpack.c.l.b16 %v3722
    %v4182 = vunpack.c.h.b16 %v3722
    %v4183 = vunpack.c.l.b16 %v3723
    %v4184 = vunpack.c.h.b16 %v3723
    %v4185 = vunpack.c.l.b16 %v3724
    %v4186 = vunpack.c.h.b16 %v3724
    %v4187 = vunpack.c.l.b16 %v3725
    %v4188 = vunpack.c.h.b16 %v3725
    %v4189 = vunpack.c.l.b16 %v3726
    %v4190 = vunpack.c.h.b16 %v3726
    %v4191 = vunpack.c.l.b16 %v3727
    %v4192 = vunpack.c.h.b16 %v3727
    %v4193 = vunpack.c.l.b16 %v3728
    %v4194 = vunpack.c.h.b16 %v3728
    %v4195 = vunpack.c.l.b16 %v3729
    %v4196 = vunpack.c.h.b16 %v3729
    %v4197 = vunpack.c.l.b16 %v3730
    %v4198 = vunpack.c.h.b16 %v3730
    %v4199 = vpack.c.b16 %v3959, %v3943
    %v4200 = vpack.c.b16 %v3960, %v3944
    %v4201 = vpack.c.b16 %v3961, %v3945
    %v4202 = vpack.c.b16 %v3962, %v3946
    %v4203 = vpack.c.b16 %v3963, %v3947
    %v4204 = vpack.c.b16 %v3964, %v3948
    %v4205 = vpack.c.b16 %v3965, %v3949
    %v4206 = vpack.c.b16 %v3966, %v3950
    %v4207 = vpack.c.b16 %v3967, %v3951
    %v4208 = vpack.c.b16 %v3968, %v3952
    %v4209 = vpack.c.b16 %v3969, %v3953
    %v4210 = vpack.c.b16 %v3970, %v3954
    %v4211 = vpack.c.b16 %v3971, %v3955
    %v4212 = vpack.c.b16 %v3972, %v3956
    %v4213 = vpack.c.b16 %v3973, %v3957
    %v4214 = vpack.c.b16 %v3974, %v3958
    %v4215 = vpack.c.b16 %v3991, %v3975
    %v4216 = vpack.c.b16 %v3992, %v3976
    %v4217 = vpack.c.b16 %v3993, %v3977
    %v4218 = vpack.c.b16 %v3994, %v3978
    %v4219 = vpack.c.b16 %v3995, %v3979
    %v4220 = vpack.c.b16 %v3996, %v3980
    %v4221 = vpack.c.b16 %v3997, %v3981
    %v4222 = vpack.c.b16 %v3998, %v3982
    %v4223 = vpack.c.b16 %v3999, %v3983
    %v4224 = vpack.c.b16 %v4000, %v3984
    %v4225 = vpack.c.b16 %v4001, %v3985
    %v4226 = vpack.c.b16 %v4002, %v3986
    %v4227 = vpack.c.b16 %v4003, %v3987
    %v4228 = vpack.c.b16 %v4004, %v3988
    %v4229 = vpack.c.b16 %v4005, %v3989
    %v4230 = vpack.c.b16 %v4006, %v3990
    %v4231 = vpack.c.b16 %v4023, %v4007
    %v4232 = vpack.c.b16 %v4024, %v4008
    %v4233 = vpack.c.b16 %v4025, %v4009
    %v4234 = vpack.c.b16 %v4026, %v4010
    %v4235 = vpack.c.b16 %v4027, %v4011
    %v4236 = vpack.c.b16 %v4028, %v4012
    %v4237 = vpack.c.b16 %v4029, %v4013
    %v4238 = vpack.c.b16 %v4030, %v4014
    %v4239 = vpack.c.b16 %v4031, %v4015
    %v4240 = vpack.c.b16 %v4032, %v4016
    %v4241 = vpack.c.b16 %v4033, %v4017
    %v4242 = vpack.c.b16 %v4034, %v4018
    %v4243 = vpack.c.b16 %v4035, %v4019
    %v4244 = vpack.c.b16 %v4036, %v4020
    %v4245 = vpack.c.b16 %v4037, %v4021
    %v4246 = vpack.c.b16 %v4038, %v4022
    %v4247 = vpack.c.b16 %v4055, %v4039
    %v4248 = vpack.c.b16 %v4056, %v4040
    %v4249 = vpack.c.b16 %v4057, %v4041
    %v4250 = vpack.c.b16 %v4058, %v4042
    %v4251 = vpack.c.b16 %v4059, %v4043
    %v4252 = vpack.c.b16 %v4060, %v4044
    %v4253 = vpack.c.b16 %v4061, %v4045
    %v4254 = vpack.c.b16 %v4062, %v4046
    %v4255 = vpack.c.b16 %v4063, %v4047
    %v4256 = vpack.c.b16 %v4064, %v4048
    %v4257 = vpack.c.b16 %v4065, %v4049
    %v4258 = vpack.c.b16 %v4066, %v4050
    %v4259 = vpack.c.b16 %v4067, %v4051
    %v4260 = vpack.c.b16 %v4068, %v4052
    %v4261 = vpack.c.b16 %v4069, %v4053
    %v4262 = vpack.c.b16 %v4070, %v4054
    %v4263 = vpack.c.b16 %v4087, %v4071
    %v4264 = vpack.c.b16 %v4088, %v4072
    %v4265 = vpack.c.b16 %v4089, %v4073
    %v4266 = vpack.c.b16 %v4090, %v4074
    %v4267 = vpack.c.b16 %v4091, %v4075
    %v4268 = vpack.c.b16 %v4092, %v4076
    %v4269 = vpack.c.b16 %v4093, %v4077
    %v4270 = vpack.c.b16 %v4094, %v4078
    %v4271 = vpack.c.b16 %v4095, %v4079
    %v4272 = vpack.c.b16 %v4096, %v4080
    %v4273 = vpack.c.b16 %v4097, %v4081
    %v4274 = vpack.c.b16 %v4098, %v4082
    %v4275 = vpack.c.b16 %v4099, %v4083
    %v4276 = vpack.c.b16 %v4100, %v4084
    %v4277 = vpack.c.b16 %v4101, %v4085
    %v4278 = vpack.c.b16 %v4102, %v4086
    %v4279 = vpack.c.b16 %v4119, %v4103
    %v4280 = vpack.c.b16 %v4120, %v4104
    %v4281 = vpack.c.b16 %v4121, %v4105
    %v4282 = vpack.c.b16 %v4122, %v4106
    %v4283 = vpack.c.b16 %v4123, %v4107
    %v4284 = vpack.c.b16 %v4124, %v4108
    %v4285 = vpack.c.b16 %v4125, %v4109
    %v4286 = vpack.c.b16 %v4126, %v4110
    %v4287 = vpack.c.b16 %v4127, %v4111
    %v4288 = vpack.c.b16 %v4128, %v4112
    %v4289 = vpack.c.b16 %v4129, %v4113
    %v4290 = vpack.c.b16 %v4130, %v4114
    %v4291 = vpack.c.b16 %v4131, %v4115
    %v4292 = vpack.c.b16 %v4132, %v4116
    %v4293 = vpack.c.b16 %v4133, %v4117
    %v4294 = vpack.c.b16 %v4134, %v4118
    %v4295 = vpack.c.b16 %v4151, %v4135
    %v4296 = vpack.c.b16 %v4152, %v4136
    %v4297 = vpack.c.b16 %v4153, %v4137
    %v4298 = vpack.c.b16 %v4154, %v4138
    %v4299 = vpack.c.b16 %v4155, %v4139
    %v4300 = vpack.c.b16 %v4156, %v4140
    %v4301 = vpack.c.b16 %v4157, %v4141
    %v4302 = vpack.c.b16 %v4158, %v4142
    %v4303 = vpack.c.b16 %v4159, %v4143
    %v4304 = vpack.c.b16 %v4160, %v4144
    %v4305 = vpack.c.b16 %v4161, %v4145
    %v4306 = vpack.c.b16 %v4162, %v4146
    %v4307 = vpack.c.b16 %v4163, %v4147
    %v4308 = vpack.c.b16 %v4164, %v4148
    %v4309 = vpack.c.b16 %v4165, %v4149
    %v4310 = vpack.c.b16 %v4166, %v4150
    %v4311 = vpack.c.b16 %v4183, %v4167
    %v4312 = vpack.c.b16 %v4184, %v4168
    %v4313 = vpack.c.b16 %v4185, %v4169
    %v4314 = vpack.c.b16 %v4186, %v4170
    %v4315 = vpack.c.b16 %v4187, %v4171
    %v4316 = vpack.c.b16 %v4188, %v4172
    %v4317 = vpack.c.b16 %v4189, %v4173
    %v4318 = vpack.c.b16 %v4190, %v4174
    %v4319 = vpack.c.b16 %v4191, %v4175
    %v4320 = vpack.c.b16 %v4192, %v4176
    %v4321 = vpack.c.b16 %v4193, %v4177
    %v4322 = vpack.c.b16 %v4194, %v4178
    %v4323 = vpack.c.b16 %v4195, %v4179
    %v4324 = vpack.c.b16 %v4196, %v4180
    %v4325 = vpack.c.b16 %v4197, %v4181
    %v4326 = vpack.c.b16 %v4198, %v4182
    %4455 = vmatprep.subr.bf16.mxu0 %v4200
    %4456 = vmatpush1.bf16.msra.mxu0 %v4199
    %4457 = vmatprep.subr.bf16.mxu0 %v4216
    %4458 = vmatpush1.bf16.msra.mxu0 %v4215
    %4459 = vmatprep.subr.bf16.mxu0 %v4232
    %4460 = vmatpush1.bf16.msra.mxu0 %v4231
    %4461 = vmatprep.subr.bf16.mxu0 %v4248
    %4462 = vmatpush1.bf16.msra.mxu0 %v4247
    %4463 = vmatprep.subr.bf16.mxu0 %v4264
    %4464 = vmatpush1.bf16.msra.mxu0 %v4263
    %4465 = vmatprep.subr.bf16.mxu0 %v4280
    %4466 = vmatpush1.bf16.msra.mxu0 %v4279
    %4467 = vmatprep.subr.bf16.mxu0 %v4296
    %4468 = vmatpush1.bf16.msra.mxu0 %v4295
    %4469 = vmatprep.subr.bf16.mxu0 %v4312
    %4470 = vmatpush1.bf16.msra.mxu0 %v4311
    %4471 = vmatprep.subr.bf16.mxu0 0
    %4472 = vmatpush1.bf16.msra.mxu0 0
    %4473 = vmatprep.subr.bf16.mxu0 0
    %4474 = vmatpush1.bf16.msra.mxu0 0
    %4475 = vmatprep.subr.bf16.mxu0 0
    %4476 = vmatpush1.bf16.msra.mxu0 0
    %4477 = vmatprep.subr.bf16.mxu0 0
    %4478 = vmatpush1.bf16.msra.mxu0 0
    %4479 = vmatprep.subr.bf16.mxu0 0
    %4480 = vmatpush1.bf16.msra.mxu0 0
    %4481 = vmatprep.subr.bf16.mxu0 0
    %4482 = vmatpush1.bf16.msra.mxu0 0
    %4483 = vmatprep.subr.bf16.mxu0 0
    %4484 = vmatpush1.bf16.msra.mxu0 0
    %4485 = vmatprep.subr.bf16.mxu0 0
    %4486 = vmatpush1.bf16.msra.mxu0 0
    %4487 = vmatprep.mubr.bf16.mxu0 0
    %4488 = vmatmul.mubr.bf16.gmra.mrb[0].mxu0 %v3601
    %v4489 = vpop.f32.mrb[0].mxu0
    %v4490 = vadd.f32 %v3738, %v4489
    %v4491 = vpop.f32.mrb[0].mxu0
    %v4492 = vadd.f32 %v3742, %v4491
    %v4493 = vpop.f32.mrb[0].mxu0
    %v4494 = vadd.f32 %v3738, %v4493
    %v4495 = vpop.f32.mrb[0].mxu0
    %v4496 = vadd.f32 %v3742, %v4495
    %4497 = vmatprep.mubr.bf16.mxu0 0
    %4498 = vmatmul.mubr.bf16.gmra.mrb[0].mxu0 %v3602
    %v4499 = vpop.f32.mrb[0].mxu0
    %v4500 = vadd.f32 %v3738, %v4499
    %v4501 = vpop.f32.mrb[0].mxu0
    %v4502 = vadd.f32 %v3742, %v4501
    %v4503 = vpop.f32.mrb[0].mxu0
    %v4504 = vadd.f32 %v3738, %v4503
    %v4505 = vpop.f32.mrb[0].mxu0
    %v4506 = vadd.f32 %v3742, %v4505
    %4507 = vdwg.mxu0
    %4508 = vmatprep.subr.bf16.mxu0 %v4202
    %4509 = vmatpush1.bf16.msra.mxu0 %v4201
    %4510 = vmatprep.subr.bf16.mxu0 %v4218
    %4511 = vmatpush1.bf16.msra.mxu0 %v4217
    %4512 = vmatprep.subr.bf16.mxu0 %v4234
    %4513 = vmatpush1.bf16.msra.mxu0 %v4233
    %4514 = vmatprep.subr.bf16.mxu0 %v4250
    %4515 = vmatpush1.bf16.msra.mxu0 %v4249
    %4516 = vmatprep.subr.bf16.mxu0 %v4266
    %4517 = vmatpush1.bf16.msra.mxu0 %v4265
    %4518 = vmatprep.subr.bf16.mxu0 %v4282
    %4519 = vmatpush1.bf16.msra.mxu0 %v4281
    %4520 = vmatprep.subr.bf16.mxu0 %v4298
    %4521 = vmatpush1.bf16.msra.mxu0 %v4297
    %4522 = vmatprep.subr.bf16.mxu0 %v4314
    %4523 = vmatpush1.bf16.msra.mxu0 %v4313
    %4524 = vmatprep.subr.bf16.mxu0 0
    %4525 = vmatpush1.bf16.msra.mxu0 0
    %4526 = vmatprep.subr.bf16.mxu0 0
    %4527 = vmatpush1.bf16.msra.mxu0 0
    %4528 = vmatprep.subr.bf16.mxu0 0
    %4529 = vmatpush1.bf16.msra.mxu0 0
    %4530 = vmatprep.subr.bf16.mxu0 0
    %4531 = vmatpush1.bf16.msra.mxu0 0
    %4532 = vmatprep.subr.bf16.mxu0 0
    %4533 = vmatpush1.bf16.msra.mxu0 0
    %4534 = vmatprep.subr.bf16.mxu0 0
    %4535 = vmatpush1.bf16.msra.mxu0 0
    %4536 = vmatprep.subr.bf16.mxu0 0
    %4537 = vmatpush1.bf16.msra.mxu0 0
    %4538 = vmatprep.subr.bf16.mxu0 0
    %4539 = vmatpush1.bf16.msra.mxu0 0
    %4540 = vmatprep.mubr.bf16.mxu0 0
    %4541 = vmatmul.mubr.bf16.gmra.mrb[0].mxu0 %v3601
    %v4542 = vpop.f32.mrb[0].mxu0
    %v4543 = vadd.f32 %v3746, %v4542
    %v4544 = vpop.f32.mrb[0].mxu0
    %v4545 = vadd.f32 %v3750, %v4544
    %v4546 = vpop.f32.mrb[0].mxu0
    %v4547 = vadd.f32 %v3746, %v4546
    %v4548 = vpop.f32.mrb[0].mxu0
    %v4549 = vadd.f32 %v3750, %v4548
    %4550 = vmatprep.mubr.bf16.mxu0 0
    %4551 = vmatmul.mubr.bf16.gmra.mrb[0].mxu0 %v3602
    %v4552 = vpop.f32.mrb[0].mxu0
    %v4553 = vadd.f32 %v3746, %v4552
    %v4554 = vpop.f32.mrb[0].mxu0
    %v4555 = vadd.f32 %v3750, %v4554
    %v4556 = vpop.f32.mrb[0].mxu0
    %v4557 = vadd.f32 %v3746, %v4556
    %v4558 = vpop.f32.mrb[0].mxu0
    %v4559 = vadd.f32 %v3750, %v4558
    %4560 = vdwg.mxu0
    %4561 = vmatprep.subr.bf16.mxu0 %v4204
    %4562 = vmatpush1.bf16.msra.mxu0 %v4203
    %4563 = vmatprep.subr.bf16.mxu0 %v4220
    %4564 = vmatpush1.bf16.msra.mxu0 %v4219
    %4565 = vmatprep.subr.bf16.mxu0 %v4236
    %4566 = vmatpush1.bf16.msra.mxu0 %v4235
    %4567 = vmatprep.subr.bf16.mxu0 %v4252
    %4568 = vmatpush1.bf16.msra.mxu0 %v4251
    %4569 = vmatprep.subr.bf16.mxu0 %v4268
    %4570 = vmatpush1.bf16.msra.mxu0 %v4267
    %4571 = vmatprep.subr.bf16.mxu0 %v4284
    %4572 = vmatpush1.bf16.msra.mxu0 %v4283
    %4573 = vmatprep.subr.bf16.mxu0 %v4300
    %4574 = vmatpush1.bf16.msra.mxu0 %v4299
    %4575 = vmatprep.subr.bf16.mxu0 %v4316
    %4576 = vmatpush1.bf16.msra.mxu0 %v4315
    %4577 = vmatprep.subr.bf16.mxu0 0
    %4578 = vmatpush1.bf16.msra.mxu0 0
    %4579 = vmatprep.subr.bf16.mxu0 0
    %4580 = vmatpush1.bf16.msra.mxu0 0
    %4581 = vmatprep.subr.bf16.mxu0 0
    %4582 = vmatpush1.bf16.msra.mxu0 0
    %4583 = vmatprep.subr.bf16.mxu0 0
    %4584 = vmatpush1.bf16.msra.mxu0 0
    %4585 = vmatprep.subr.bf16.mxu0 0
    %4586 = vmatpush1.bf16.msra.mxu0 0
    %4587 = vmatprep.subr.bf16.mxu0 0
    %4588 = vmatpush1.bf16.msra.mxu0 0
    %4589 = vmatprep.subr.bf16.mxu0 0
    %4590 = vmatpush1.bf16.msra.mxu0 0
    %4591 = vmatprep.subr.bf16.mxu0 0
    %4592 = vmatpush1.bf16.msra.mxu0 0
    %4593 = vmatprep.mubr.bf16.mxu0 0
    %4594 = vmatmul.mubr.bf16.gmra.mrb[0].mxu0 %v3601
    %v4595 = vpop.f32.mrb[0].mxu0
    %v4596 = vadd.f32 %v3754, %v4595
    %v4597 = vpop.f32.mrb[0].mxu0
    %v4598 = vadd.f32 %v3758, %v4597
    %v4599 = vpop.f32.mrb[0].mxu0
    %v4600 = vadd.f32 %v3754, %v4599
    %v4601 = vpop.f32.mrb[0].mxu0
    %v4602 = vadd.f32 %v3758, %v4601
    %4603 = vmatprep.mubr.bf16.mxu0 0
    %4604 = vmatmul.mubr.bf16.gmra.mrb[0].mxu0 %v3602
    %v4605 = vpop.f32.mrb[0].mxu0
    %v4606 = vadd.f32 %v3754, %v4605
    %v4607 = vpop.f32.mrb[0].mxu0
    %v4608 = vadd.f32 %v3758, %v4607
    %v4609 = vpop.f32.mrb[0].mxu0
    %v4610 = vadd.f32 %v3754, %v4609
    %v4611 = vpop.f32.mrb[0].mxu0
    %v4612 = vadd.f32 %v3758, %v4611
    %4613 = vdwg.mxu0
    %4614 = vmatprep.subr.bf16.mxu0 %v4206
    %4615 = vmatpush1.bf16.msra.mxu0 %v4205
    %4616 = vmatprep.subr.bf16.mxu0 %v4222
    %4617 = vmatpush1.bf16.msra.mxu0 %v4221
    %4618 = vmatprep.subr.bf16.mxu0 %v4238
    %4619 = vmatpush1.bf16.msra.mxu0 %v4237
    %4620 = vmatprep.subr.bf16.mxu0 %v4254
    %4621 = vmatpush1.bf16.msra.mxu0 %v4253
    %4622 = vmatprep.subr.bf16.mxu0 %v4270
    %4623 = vmatpush1.bf16.msra.mxu0 %v4269
    %4624 = vmatprep.subr.bf16.mxu0 %v4286
    %4625 = vmatpush1.bf16.msra.mxu0 %v4285
    %4626 = vmatprep.subr.bf16.mxu0 %v4302
    %4627 = vmatpush1.bf16.msra.mxu0 %v4301
    %4628 = vmatprep.subr.bf16.mxu0 %v4318
    %4629 = vmatpush1.bf16.msra.mxu0 %v4317
    %4630 = vmatprep.subr.bf16.mxu0 0
    %4631 = vmatpush1.bf16.msra.mxu0 0
    %4632 = vmatprep.subr.bf16.mxu0 0
    %4633 = vmatpush1.bf16.msra.mxu0 0
    %4634 = vmatprep.subr.bf16.mxu0 0
    %4635 = vmatpush1.bf16.msra.mxu0 0
    %4636 = vmatprep.subr.bf16.mxu0 0
    %4637 = vmatpush1.bf16.msra.mxu0 0
    %4638 = vmatprep.subr.bf16.mxu0 0
    %4639 = vmatpush1.bf16.msra.mxu0 0
    %4640 = vmatprep.subr.bf16.mxu0 0
    %4641 = vmatpush1.bf16.msra.mxu0 0
    %4642 = vmatprep.subr.bf16.mxu0 0
    %4643 = vmatpush1.bf16.msra.mxu0 0
    %4644 = vmatprep.subr.bf16.mxu0 0
    %4645 = vmatpush1.bf16.msra.mxu0 0
    %4646 = vmatprep.mubr.bf16.mxu0 0
    %4647 = vmatmul.mubr.bf16.gmra.mrb[0].mxu0 %v3601
    %v4648 = vpop.f32.mrb[0].mxu0
    %v4649 = vadd.f32 %v3762, %v4648
    %v4650 = vpop.f32.mrb[0].mxu0
    %v4651 = vadd.f32 %v3766, %v4650
    %v4652 = vpop.f32.mrb[0].mxu0
    %v4653 = vadd.f32 %v3762, %v4652
    %v4654 = vpop.f32.mrb[0].mxu0
    %v4655 = vadd.f32 %v3766, %v4654
    %4656 = vmatprep.mubr.bf16.mxu0 0
    %4657 = vmatmul.mubr.bf16.gmra.mrb[0].mxu0 %v3602
    %v4658 = vpop.f32.mrb[0].mxu0
    %v4659 = vadd.f32 %v3762, %v4658
    %v4660 = vpop.f32.mrb[0].mxu0
    %v4661 = vadd.f32 %v3766, %v4660
    %v4662 = vpop.f32.mrb[0].mxu0
    %v4663 = vadd.f32 %v3762, %v4662
    %v4664 = vpop.f32.mrb[0].mxu0
    %v4665 = vadd.f32 %v3766, %v4664
    %4666 = vdwg.mxu0
    %4667 = vmatprep.subr.bf16.mxu0 %v4208
    %4668 = vmatpush1.bf16.msra.mxu0 %v4207
    %4669 = vmatprep.subr.bf16.mxu0 %v4224
    %4670 = vmatpush1.bf16.msra.mxu0 %v4223
    %4671 = vmatprep.subr.bf16.mxu0 %v4240
    %4672 = vmatpush1.bf16.msra.mxu0 %v4239
    %4673 = vmatprep.subr.bf16.mxu0 %v4256
    %4674 = vmatpush1.bf16.msra.mxu0 %v4255
    %4675 = vmatprep.subr.bf16.mxu0 %v4272
    %4676 = vmatpush1.bf16.msra.mxu0 %v4271
    %4677 = vmatprep.subr.bf16.mxu0 %v4288
    %4678 = vmatpush1.bf16.msra.mxu0 %v4287
    %4679 = vmatprep.subr.bf16.mxu0 %v4304
    %4680 = vmatpush1.bf16.msra.mxu0 %v4303
    %4681 = vmatprep.subr.bf16.mxu0 %v4320
    %4682 = vmatpush1.bf16.msra.mxu0 %v4319
    %4683 = vmatprep.subr.bf16.mxu0 0
    %4684 = vmatpush1.bf16.msra.mxu0 0
    %4685 = vmatprep.subr.bf16.mxu0 0
    %4686 = vmatpush1.bf16.msra.mxu0 0
    %4687 = vmatprep.subr.bf16.mxu0 0
    %4688 = vmatpush1.bf16.msra.mxu0 0
    %4689 = vmatprep.subr.bf16.mxu0 0
    %4690 = vmatpush1.bf16.msra.mxu0 0
    %4691 = vmatprep.subr.bf16.mxu0 0
    %4692 = vmatpush1.bf16.msra.mxu0 0
    %4693 = vmatprep.subr.bf16.mxu0 0
    %4694 = vmatpush1.bf16.msra.mxu0 0
    %4695 = vmatprep.subr.bf16.mxu0 0
    %4696 = vmatpush1.bf16.msra.mxu0 0
    %4697 = vmatprep.subr.bf16.mxu0 0
    %4698 = vmatpush1.bf16.msra.mxu0 0
    %4699 = vmatprep.mubr.bf16.mxu0 0
    %4700 = vmatmul.mubr.bf16.gmra.mrb[0].mxu0 %v3601
    %v4701 = vpop.f32.mrb[0].mxu0
    %v4702 = vadd.f32 %v3770, %v4701
    %v4703 = vpop.f32.mrb[0].mxu0
    %v4704 = vadd.f32 %v3774, %v4703
    %v4705 = vpop.f32.mrb[0].mxu0
    %v4706 = vadd.f32 %v3770, %v4705
    %v4707 = vpop.f32.mrb[0].mxu0
    %v4708 = vadd.f32 %v3774, %v4707
    %4709 = vmatprep.mubr.bf16.mxu0 0
    %4710 = vmatmul.mubr.bf16.gmra.mrb[0].mxu0 %v3602
    %v4711 = vpop.f32.mrb[0].mxu0
    %v4712 = vadd.f32 %v3770, %v4711
    %v4713 = vpop.f32.mrb[0].mxu0
    %v4714 = vadd.f32 %v3774, %v4713
    %v4715 = vpop.f32.mrb[0].mxu0
    %v4716 = vadd.f32 %v3770, %v4715
    %v4717 = vpop.f32.mrb[0].mxu0
    %v4718 = vadd.f32 %v3774, %v4717
    %4719 = vdwg.mxu0
    %4720 = vmatprep.subr.bf16.mxu0 %v4210
    %4721 = vmatpush1.bf16.msra.mxu0 %v4209
    %4722 = vmatprep.subr.bf16.mxu0 %v4226
    %4723 = vmatpush1.bf16.msra.mxu0 %v4225
    %4724 = vmatprep.subr.bf16.mxu0 %v4242
    %4725 = vmatpush1.bf16.msra.mxu0 %v4241
    %4726 = vmatprep.subr.bf16.mxu0 %v4258
    %4727 = vmatpush1.bf16.msra.mxu0 %v4257
    %4728 = vmatprep.subr.bf16.mxu0 %v4274
    %4729 = vmatpush1.bf16.msra.mxu0 %v4273
    %4730 = vmatprep.subr.bf16.mxu0 %v4290
    %4731 = vmatpush1.bf16.msra.mxu0 %v4289
    %4732 = vmatprep.subr.bf16.mxu0 %v4306
    %4733 = vmatpush1.bf16.msra.mxu0 %v4305
    %4734 = vmatprep.subr.bf16.mxu0 %v4322
    %4735 = vmatpush1.bf16.msra.mxu0 %v4321
    %4736 = vmatprep.subr.bf16.mxu0 0
    %4737 = vmatpush1.bf16.msra.mxu0 0
    %4738 = vmatprep.subr.bf16.mxu0 0
    %4739 = vmatpush1.bf16.msra.mxu0 0
    %4740 = vmatprep.subr.bf16.mxu0 0
    %4741 = vmatpush1.bf16.msra.mxu0 0
    %4742 = vmatprep.subr.bf16.mxu0 0
    %4743 = vmatpush1.bf16.msra.mxu0 0
    %4744 = vmatprep.subr.bf16.mxu0 0
    %4745 = vmatpush1.bf16.msra.mxu0 0
    %4746 = vmatprep.subr.bf16.mxu0 0
    %4747 = vmatpush1.bf16.msra.mxu0 0
    %4748 = vmatprep.subr.bf16.mxu0 0
    %4749 = vmatpush1.bf16.msra.mxu0 0
    %4750 = vmatprep.subr.bf16.mxu0 0
    %4751 = vmatpush1.bf16.msra.mxu0 0
    %4752 = vmatprep.mubr.bf16.mxu0 0
    %4753 = vmatmul.mubr.bf16.gmra.mrb[0].mxu0 %v3601
    %v4754 = vpop.f32.mrb[0].mxu0
    %v4755 = vadd.f32 %v3778, %v4754
    %v4756 = vpop.f32.mrb[0].mxu0
    %v4757 = vadd.f32 %v3782, %v4756
    %v4758 = vpop.f32.mrb[0].mxu0
    %v4759 = vadd.f32 %v3778, %v4758
    %v4760 = vpop.f32.mrb[0].mxu0
    %v4761 = vadd.f32 %v3782, %v4760
    %4762 = vmatprep.mubr.bf16.mxu0 0
    %4763 = vmatmul.mubr.bf16.gmra.mrb[0].mxu0 %v3602
    %v4764 = vpop.f32.mrb[0].mxu0
    %v4765 = vadd.f32 %v3778, %v4764
    %v4766 = vpop.f32.mrb[0].mxu0
    %v4767 = vadd.f32 %v3782, %v4766
    %v4768 = vpop.f32.mrb[0].mxu0
    %v4769 = vadd.f32 %v3778, %v4768
    %v4770 = vpop.f32.mrb[0].mxu0
    %v4771 = vadd.f32 %v3782, %v4770
    %4772 = vdwg.mxu0
    %4773 = vmatprep.subr.bf16.mxu0 %v4212
    %4774 = vmatpush1.bf16.msra.mxu0 %v4211
    %4775 = vmatprep.subr.bf16.mxu0 %v4228
    %4776 = vmatpush1.bf16.msra.mxu0 %v4227
    %4777 = vmatprep.subr.bf16.mxu0 %v4244
    %4778 = vmatpush1.bf16.msra.mxu0 %v4243
    %4779 = vmatprep.subr.bf16.mxu0 %v4260
    %4780 = vmatpush1.bf16.msra.mxu0 %v4259
    %4781 = vmatprep.subr.bf16.mxu0 %v4276
    %4782 = vmatpush1.bf16.msra.mxu0 %v4275
    %4783 = vmatprep.subr.bf16.mxu0 %v4292
    %4784 = vmatpush1.bf16.msra.mxu0 %v4291
    %4785 = vmatprep.subr.bf16.mxu0 %v4308
    %4786 = vmatpush1.bf16.msra.mxu0 %v4307
    %4787 = vmatprep.subr.bf16.mxu0 %v4324
    %4788 = vmatpush1.bf16.msra.mxu0 %v4323
    %4789 = vmatprep.subr.bf16.mxu0 0
    %4790 = vmatpush1.bf16.msra.mxu0 0
    %4791 = vmatprep.subr.bf16.mxu0 0
    %4792 = vmatpush1.bf16.msra.mxu0 0
    %4793 = vmatprep.subr.bf16.mxu0 0
    %4794 = vmatpush1.bf16.msra.mxu0 0
    %4795 = vmatprep.subr.bf16.mxu0 0
    %4796 = vmatpush1.bf16.msra.mxu0 0
    %4797 = vmatprep.subr.bf16.mxu0 0
    %4798 = vmatpush1.bf16.msra.mxu0 0
    %4799 = vmatprep.subr.bf16.mxu0 0
    %4800 = vmatpush1.bf16.msra.mxu0 0
    %4801 = vmatprep.subr.bf16.mxu0 0
    %4802 = vmatpush1.bf16.msra.mxu0 0
    %4803 = vmatprep.subr.bf16.mxu0 0
    %4804 = vmatpush1.bf16.msra.mxu0 0
    %4805 = vmatprep.mubr.bf16.mxu0 0
    %4806 = vmatmul.mubr.bf16.gmra.mrb[0].mxu0 %v3601
    %v4807 = vpop.f32.mrb[0].mxu0
    %v4808 = vadd.f32 %v3786, %v4807
    %v4809 = vpop.f32.mrb[0].mxu0
    %v4810 = vadd.f32 %v3790, %v4809
    %v4811 = vpop.f32.mrb[0].mxu0
    %v4812 = vadd.f32 %v3786, %v4811
    %v4813 = vpop.f32.mrb[0].mxu0
    %v4814 = vadd.f32 %v3790, %v4813
    %4815 = vmatprep.mubr.bf16.mxu0 0
    %4816 = vmatmul.mubr.bf16.gmra.mrb[0].mxu0 %v3602
    %v4817 = vpop.f32.mrb[0].mxu0
    %v4818 = vadd.f32 %v3786, %v4817
    %v4819 = vpop.f32.mrb[0].mxu0
    %v4820 = vadd.f32 %v3790, %v4819
    %v4821 = vpop.f32.mrb[0].mxu0
    %v4822 = vadd.f32 %v3786, %v4821
    %v4823 = vpop.f32.mrb[0].mxu0
    %v4824 = vadd.f32 %v3790, %v4823
    %4825 = vdwg.mxu0
    %4826 = vmatprep.subr.bf16.mxu0 %v4214
    %4827 = vmatpush1.bf16.msra.mxu0 %v4213
    %4828 = vmatprep.subr.bf16.mxu0 %v4230
    %4829 = vmatpush1.bf16.msra.mxu0 %v4229
    %4830 = vmatprep.subr.bf16.mxu0 %v4246
    %4831 = vmatpush1.bf16.msra.mxu0 %v4245
    %4832 = vmatprep.subr.bf16.mxu0 %v4262
    %4833 = vmatpush1.bf16.msra.mxu0 %v4261
    %4834 = vmatprep.subr.bf16.mxu0 %v4278
    %4835 = vmatpush1.bf16.msra.mxu0 %v4277
    %4836 = vmatprep.subr.bf16.mxu0 %v4294
    %4837 = vmatpush1.bf16.msra.mxu0 %v4293
    %4838 = vmatprep.subr.bf16.mxu0 %v4310
    %4839 = vmatpush1.bf16.msra.mxu0 %v4309
    %4840 = vmatprep.subr.bf16.mxu0 %v4326
    %4841 = vmatpush1.bf16.msra.mxu0 %v4325
    %4842 = vmatprep.subr.bf16.mxu0 0
    %4843 = vmatpush1.bf16.msra.mxu0 0
    %4844 = vmatprep.subr.bf16.mxu0 0
    %4845 = vmatpush1.bf16.msra.mxu0 0
    %4846 = vmatprep.subr.bf16.mxu0 0
    %4847 = vmatpush1.bf16.msra.mxu0 0
    %4848 = vmatprep.subr.bf16.mxu0 0
    %4849 = vmatpush1.bf16.msra.mxu0 0
    %4850 = vmatprep.subr.bf16.mxu0 0
    %4851 = vmatpush1.bf16.msra.mxu0 0
    %4852 = vmatprep.subr.bf16.mxu0 0
    %4853 = vmatpush1.bf16.msra.mxu0 0
    %4854 = vmatprep.subr.bf16.mxu0 0
    %4855 = vmatpush1.bf16.msra.mxu0 0
    %4856 = vmatprep.subr.bf16.mxu0 0
    %4857 = vmatpush1.bf16.msra.mxu0 0
    %4858 = vmatprep.mubr.bf16.mxu0 0
    %4859 = vmatmul.mubr.bf16.gmra.mrb[0].mxu0 %v3601
    %v4860 = vpop.f32.mrb[0].mxu0
    %v4861 = vadd.f32 %v3794, %v4860
    %v4862 = vpop.f32.mrb[0].mxu0
    %v4863 = vadd.f32 %v3798, %v4862
    %v4864 = vpop.f32.mrb[0].mxu0
    %v4865 = vadd.f32 %v3794, %v4864
    %v4866 = vpop.f32.mrb[0].mxu0
    %v4867 = vadd.f32 %v3798, %v4866
    %4868 = vmatprep.mubr.bf16.mxu0 0
    %4869 = vmatmul.mubr.bf16.gmra.mrb[0].mxu0 %v3602
    %v4870 = vpop.f32.mrb[0].mxu0
    %v4871 = vadd.f32 %v3794, %v4870
    %v4872 = vpop.f32.mrb[0].mxu0
    %v4873 = vadd.f32 %v3798, %v4872
    %v4874 = vpop.f32.mrb[0].mxu0
    %v4875 = vadd.f32 %v3794, %v4874
    %v4876 = vpop.f32.mrb[0].mxu0
    %v4877 = vadd.f32 %v3798, %v4876
    %4878 = vdwg.mxu0
    %v4879 = vmax.f32 %v4490, 0.0
    %v4880 = vmax.f32 %v4492, 0.0
    %v4881 = vmax.f32 %v4543, 0.0
    %v4882 = vmax.f32 %v4545, 0.0
    %v4883 = vmax.f32 %v4596, 0.0
    %v4884 = vmax.f32 %v4598, 0.0
    %v4885 = vmax.f32 %v4649, 0.0
    %v4886 = vmax.f32 %v4651, 0.0
    %v4887 = vmax.f32 %v4702, 0.0
    %v4888 = vmax.f32 %v4704, 0.0
    %v4889 = vmax.f32 %v4755, 0.0
    %v4890 = vmax.f32 %v4757, 0.0
    %v4891 = vmax.f32 %v4808, 0.0
    %v4892 = vmax.f32 %v4810, 0.0
    %v4893 = vmax.f32 %v4861, 0.0
    %v4894 = vmax.f32 %v4863, 0.0
    %v4895 = vmax.f32 %v4494, 0.0
    %v4896 = vmax.f32 %v4496, 0.0
    %v4897 = vmax.f32 %v4547, 0.0
    %v4898 = vmax.f32 %v4549, 0.0
    %v4899 = vmax.f32 %v4600, 0.0
    %v4900 = vmax.f32 %v4602, 0.0
    %v4901 = vmax.f32 %v4653, 0.0
    %v4902 = vmax.f32 %v4655, 0.0
    %v4903 = vmax.f32 %v4706, 0.0
    %v4904 = vmax.f32 %v4708, 0.0
    %v4905 = vmax.f32 %v4759, 0.0
    %v4906 = vmax.f32 %v4761, 0.0
    %v4907 = vmax.f32 %v4812, 0.0
    %v4908 = vmax.f32 %v4814, 0.0
    %v4909 = vmax.f32 %v4865, 0.0
    %v4910 = vmax.f32 %v4867, 0.0
    %v4911 = vmax.f32 %v4500, 0.0
    %v4912 = vmax.f32 %v4502, 0.0
    %v4913 = vmax.f32 %v4553, 0.0
    %v4914 = vmax.f32 %v4555, 0.0
    %v4915 = vmax.f32 %v4606, 0.0
    %v4916 = vmax.f32 %v4608, 0.0
    %v4917 = vmax.f32 %v4659, 0.0
    %v4918 = vmax.f32 %v4661, 0.0
    %v4919 = vmax.f32 %v4712, 0.0
    %v4920 = vmax.f32 %v4714, 0.0
    %v4921 = vmax.f32 %v4765, 0.0
    %v4922 = vmax.f32 %v4767, 0.0
    %v4923 = vmax.f32 %v4818, 0.0
    %v4924 = vmax.f32 %v4820, 0.0
    %v4925 = vmax.f32 %v4871, 0.0
    %v4926 = vmax.f32 %v4873, 0.0
    %v4927 = vmax.f32 %v4504, 0.0
    %v4928 = vmax.f32 %v4506, 0.0
    %v4929 = vmax.f32 %v4557, 0.0
    %v4930 = vmax.f32 %v4559, 0.0
    %v4931 = vmax.f32 %v4610, 0.0
    %v4932 = vmax.f32 %v4612, 0.0
    %v4933 = vmax.f32 %v4663, 0.0
    %v4934 = vmax.f32 %v4665, 0.0
    %v4935 = vmax.f32 %v4716, 0.0
    %v4936 = vmax.f32 %v4718, 0.0
    %v4937 = vmax.f32 %v4769, 0.0
    %v4938 = vmax.f32 %v4771, 0.0
    %v4939 = vmax.f32 %v4822, 0.0
    %v4940 = vmax.f32 %v4824, 0.0
    %v4941 = vmax.f32 %v4875, 0.0
    %v4942 = vmax.f32 %v4877, 0.0
    %v4943 = vpack.c.bf16 %v4895, %v4879
    %v4944 = vpack.c.bf16 %v4927, %v4911
    %4945 = vst [vmem:[#allocation4] sm:$0xff] %v4943
    %4946 = vst [vmem:[#allocation4 + $0x8] sm:$0xff] %v4944
    %v4947 = vpack.c.bf16 %v4896, %v4880
    %v4948 = vpack.c.bf16 %v4928, %v4912
    %4949 = vst [vmem:[#allocation4 + $0x10] sm:$0xff] %v4947
    %4950 = vst [vmem:[#allocation4 + $0x18] sm:$0xff] %v4948
    %v4951 = vpack.c.bf16 %v4897, %v4881
    %v4952 = vpack.c.bf16 %v4929, %v4913
    %4953 = vst [vmem:[#allocation4 + $0x20] sm:$0xff] %v4951
    %4954 = vst [vmem:[#allocation4 + $0x28] sm:$0xff] %v4952
    %v4955 = vpack.c.bf16 %v4898, %v4882
    %v4956 = vpack.c.bf16 %v4930, %v4914
    %4957 = vst [vmem:[#allocation4 + $0x30] sm:$0xff] %v4955
    %4958 = vst [vmem:[#allocation4 + $0x38] sm:$0xff] %v4956
    %v4959 = vpack.c.bf16 %v4899, %v4883
    %v4960 = vpack.c.bf16 %v4931, %v4915
    %4961 = vst [vmem:[#allocation4 + $0x40] sm:$0xff] %v4959
    %4962 = vst [vmem:[#allocation4 + $0x48] sm:$0xff] %v4960
    %v4963 = vpack.c.bf16 %v4900, %v4884
    %v4964 = vpack.c.bf16 %v4932, %v4916
    %4965 = vst [vmem:[#allocation4 + $0x50] sm:$0xff] %v4963
    %4966 = vst [vmem:[#allocation4 + $0x58] sm:$0xff] %v4964
    %v4967 = vpack.c.bf16 %v4901, %v4885
    %v4968 = vpack.c.bf16 %v4933, %v4917
    %4969 = vst [vmem:[#allocation4 + $0x60] sm:$0xff] %v4967
    %4970 = vst [vmem:[#allocation4 + $0x68] sm:$0xff] %v4968
    %v4971 = vpack.c.bf16 %v4902, %v4886
    %v4972 = vpack.c.bf16 %v4934, %v4918
    %4973 = vst [vmem:[#allocation4 + $0x70] sm:$0xff] %v4971
    %4974 = vst [vmem:[#allocation4 + $0x78] sm:$0xff] %v4972
    %v4975 = vpack.c.bf16 %v4903, %v4887
    %v4976 = vpack.c.bf16 %v4935, %v4919
    %4977 = vst [vmem:[#allocation4 + $0x80] sm:$0xff] %v4975
    %4978 = vst [vmem:[#allocation4 + $0x88] sm:$0xff] %v4976
    %v4979 = vpack.c.bf16 %v4904, %v4888
    %v4980 = vpack.c.bf16 %v4936, %v4920
    %4981 = vst [vmem:[#allocation4 + $0x90] sm:$0xff] %v4979
    %4982 = vst [vmem:[#allocation4 + $0x98] sm:$0xff] %v4980
    %v4983 = vpack.c.bf16 %v4905, %v4889
    %v4984 = vpack.c.bf16 %v4937, %v4921
    %4985 = vst [vmem:[#allocation4 + $0xa0] sm:$0xff] %v4983
    %4986 = vst [vmem:[#allocation4 + $0xa8] sm:$0xff] %v4984
    %v4987 = vpack.c.bf16 %v4906, %v4890
    %v4988 = vpack.c.bf16 %v4938, %v4922
    %4989 = vst [vmem:[#allocation4 + $0xb0] sm:$0xff] %v4987
    %4990 = vst [vmem:[#allocation4 + $0xb8] sm:$0xff] %v4988
    %v4991 = vpack.c.bf16 %v4907, %v4891
    %v4992 = vpack.c.bf16 %v4939, %v4923
    %4993 = vst [vmem:[#allocation4 + $0xc0] sm:$0xff] %v4991
    %4994 = vst [vmem:[#allocation4 + $0xc8] sm:$0xff] %v4992
    %v4995 = vpack.c.bf16 %v4908, %v4892
    %v4996 = vpack.c.bf16 %v4940, %v4924
    %4997 = vst [vmem:[#allocation4 + $0xd0] sm:$0xff] %v4995
    %4998 = vst [vmem:[#allocation4 + $0xd8] sm:$0xff] %v4996
    %v4999 = vpack.c.bf16 %v4909, %v4893
    %v5000 = vpack.c.bf16 %v4941, %v4925
    %5001 = vst [vmem:[#allocation4 + $0xe0] sm:$0xff] %v4999
    %5002 = vst [vmem:[#allocation4 + $0xe8] sm:$0xff] %v5000
    %v5003 = vpack.c.bf16 %v4910, %v4894
    %v5004 = vpack.c.bf16 %v4942, %v4926
    %5005 = vst [vmem:[#allocation4 + $0xf0] sm:$0xff] %v5003
    %5006 = vst [vmem:[#allocation4 + $0xf8] sm:$0xff] %v5004
    %v5007 = vld [vmem:[#allocation4] sm:$0xff]
    %v5008 = vld [vmem:[#allocation4 + $0x8] sm:$0xff]
    %v5009 = vld [vmem:[#allocation4 + $0x10] sm:$0xff]
    %v5010 = vld [vmem:[#allocation4 + $0x18] sm:$0xff]
    %v5011 = vld [vmem:[#allocation4 + $0x20] sm:$0xff]
    %v5012 = vld [vmem:[#allocation4 + $0x28] sm:$0xff]
    %v5013 = vld [vmem:[#allocation4 + $0x30] sm:$0xff]
    %v5014 = vld [vmem:[#allocation4 + $0x38] sm:$0xff]
    %v5015 = vld [vmem:[#allocation4 + $0x40] sm:$0xff]
    %v5016 = vld [vmem:[#allocation4 + $0x48] sm:$0xff]
    %v5017 = vld [vmem:[#allocation4 + $0x50] sm:$0xff]
    %v5018 = vld [vmem:[#allocation4 + $0x58] sm:$0xff]
    %v5019 = vld [vmem:[#allocation4 + $0x60] sm:$0xff]
    %v5020 = vld [vmem:[#allocation4 + $0x68] sm:$0xff]
    %v5021 = vld [vmem:[#allocation4 + $0x70] sm:$0xff]
    %v5022 = vld [vmem:[#allocation4 + $0x78] sm:$0xff]
    %v5023 = vld [vmem:[#allocation4 + $0x80] sm:$0xff]
    %v5024 = vld [vmem:[#allocation4 + $0x88] sm:$0xff]
    %v5025 = vld [vmem:[#allocation4 + $0x90] sm:$0xff]
    %v5026 = vld [vmem:[#allocation4 + $0x98] sm:$0xff]
    %v5027 = vld [vmem:[#allocation4 + $0xa0] sm:$0xff]
    %v5028 = vld [vmem:[#allocation4 + $0xa8] sm:$0xff]
    %v5029 = vld [vmem:[#allocation4 + $0xb0] sm:$0xff]
    %v5030 = vld [vmem:[#allocation4 + $0xb8] sm:$0xff]
    %v5031 = vld [vmem:[#allocation4 + $0xc0] sm:$0xff]
    %v5032 = vld [vmem:[#allocation4 + $0xc8] sm:$0xff]
    %v5033 = vld [vmem:[#allocation4 + $0xd0] sm:$0xff]
    %v5034 = vld [vmem:[#allocation4 + $0xd8] sm:$0xff]
    %v5035 = vld [vmem:[#allocation4 + $0xe0] sm:$0xff]
    %v5036 = vld [vmem:[#allocation4 + $0xe8] sm:$0xff]
    %v5037 = vld [vmem:[#allocation4 + $0xf0] sm:$0xff]
    %v5038 = vld [vmem:[#allocation4 + $0xf8] sm:$0xff]
    %v5039 = vld [vmem:[#allocation18] sm:$0xf]
    %v5040 = vld [vmem:[#allocation18 + $0x4] sm:$0xf]
    %v5041 = vld [vmem:[#allocation18 + $0x8] sm:$0xf]
    %v5042 = vld [vmem:[#allocation18 + $0xc] sm:$0xf]
    %v5043 = vld [vmem:[#allocation18 + $0x10] sm:$0xf]
    %v5044 = vld [vmem:[#allocation18 + $0x14] sm:$0xf]
    %v5045 = vld [vmem:[#allocation18 + $0x18] sm:$0xf]
    %v5046 = vld [vmem:[#allocation18 + $0x1c] sm:$0xf]
    %v5047 = vld [vmem:[#allocation18 + $0x20] sm:$0xf]
    %v5048 = vld [vmem:[#allocation18 + $0x24] sm:$0xf]
    %v5049 = vld [vmem:[#allocation18 + $0x28] sm:$0xf]
    %v5050 = vld [vmem:[#allocation18 + $0x2c] sm:$0xf]
    %v5051 = vld [vmem:[#allocation18 + $0x30] sm:$0xf]
    %v5052 = vld [vmem:[#allocation18 + $0x34] sm:$0xf]
    %v5053 = vld [vmem:[#allocation18 + $0x38] sm:$0xf]
    %v5054 = vld [vmem:[#allocation18 + $0x3c] sm:$0xf]
    %v5055 = vld [vmem:[#allocation19] sm:$0x1]
    %v5057 = vlaneseq
    %v5058 = vshrl.u32 %v5057, 7
    %v5059 = vsub.s32 0, %v5058
    %v5060 = vrot.slane %v5055, %v5059
    %v5078 = vunpack.c.l.b16 %v5039
    %v5079 = vunpack.c.l.b16 %v5040
    %v5080 = vunpack.c.l.b16 %v5041
    %v5081 = vunpack.c.l.b16 %v5042
    %v5082 = vunpack.c.l.b16 %v5043
    %v5083 = vunpack.c.l.b16 %v5044
    %v5084 = vunpack.c.l.b16 %v5045
    %v5085 = vunpack.c.l.b16 %v5046
    %v5086 = vunpack.c.l.b16 %v5047
    %v5087 = vunpack.c.l.b16 %v5048
    %v5088 = vunpack.c.l.b16 %v5049
    %v5089 = vunpack.c.l.b16 %v5050
    %v5090 = vunpack.c.l.b16 %v5051
    %v5091 = vunpack.c.l.b16 %v5052
    %v5092 = vunpack.c.l.b16 %v5053
    %v5093 = vunpack.c.l.b16 %v5054
    %v5094 = vpack.c.b16 %v5079, %v5078
    %v5095 = vpack.c.b16 %v5081, %v5080
    %v5096 = vpack.c.b16 %v5083, %v5082
    %v5097 = vpack.c.b16 %v5085, %v5084
    %v5098 = vpack.c.b16 %v5087, %v5086
    %v5099 = vpack.c.b16 %v5089, %v5088
    %v5100 = vpack.c.b16 %v5091, %v5090
    %v5101 = vpack.c.b16 %v5093, %v5092
    %5110 = vmatprep.subr.bf16.mxu0 0
    %5111 = vmatpush1.bf16.msra.mxu0 %v5094
    %5112 = vmatprep.subr.bf16.mxu0 0
    %5113 = vmatpush1.bf16.msra.mxu0 %v5095
    %5114 = vmatprep.subr.bf16.mxu0 0
    %5115 = vmatpush1.bf16.msra.mxu0 %v5096
    %5116 = vmatprep.subr.bf16.mxu0 0
    %5117 = vmatpush1.bf16.msra.mxu0 %v5097
    %5118 = vmatprep.subr.bf16.mxu0 0
    %5119 = vmatpush1.bf16.msra.mxu0 %v5098
    %5120 = vmatprep.subr.bf16.mxu0 0
    %5121 = vmatpush1.bf16.msra.mxu0 %v5099
    %5122 = vmatprep.subr.bf16.mxu0 0
    %5123 = vmatpush1.bf16.msra.mxu0 %v5100
    %5124 = vmatprep.subr.bf16.mxu0 0
    %5125 = vmatpush1.bf16.msra.mxu0 %v5101
    %5126 = vmatprep.subr.bf16.mxu0 0
    %5127 = vmatpush1.bf16.msra.mxu0 0
    %5128 = vmatprep.subr.bf16.mxu0 0
    %5129 = vmatpush1.bf16.msra.mxu0 0
    %5130 = vmatprep.subr.bf16.mxu0 0
    %5131 = vmatpush1.bf16.msra.mxu0 0
    %5132 = vmatprep.subr.bf16.mxu0 0
    %5133 = vmatpush1.bf16.msra.mxu0 0
    %5134 = vmatprep.subr.bf16.mxu0 0
    %5135 = vmatpush1.bf16.msra.mxu0 0
    %5136 = vmatprep.subr.bf16.mxu0 0
    %5137 = vmatpush1.bf16.msra.mxu0 0
    %5138 = vmatprep.subr.bf16.mxu0 0
    %5139 = vmatpush1.bf16.msra.mxu0 0
    %5140 = vmatprep.subr.bf16.mxu0 0
    %5141 = vmatpush1.bf16.msra.mxu0 0
    %5142 = vmatprep.mubr.bf16.mxu0 0
    %5143 = vmatmul.mubr.bf16.gmra.mrb[0].mxu0 %v5007
    %v5144 = vpop.f32.mrb[0].mxu0
    %v5145 = vadd.f32 %v5060, %v5144
    %v5146 = vpop.f32.mrb[0].mxu0
    %v5147 = vpop.f32.mrb[0].mxu0
    %v5148 = vadd.f32 %v5060, %v5147
    %v5149 = vpop.f32.mrb[0].mxu0
    %5150 = vmatprep.mubr.bf16.mxu0 0
    %5151 = vmatmul.mubr.bf16.gmra.mrb[0].mxu0 %v5008
    %v5152 = vpop.f32.mrb[0].mxu0
    %v5153 = vadd.f32 %v5060, %v5152
    %v5154 = vpop.f32.mrb[0].mxu0
    %v5155 = vpop.f32.mrb[0].mxu0
    %v5156 = vadd.f32 %v5060, %v5155
    %v5157 = vpop.f32.mrb[0].mxu0
    %5158 = vmatprep.mubr.bf16.mxu0 0
    %5159 = vmatmul.mubr.bf16.gmra.mrb[0].mxu0 %v5009
    %v5160 = vpop.f32.mrb[0].mxu0
    %v5161 = vadd.f32 %v5060, %v5160
    %v5162 = vpop.f32.mrb[0].mxu0
    %v5163 = vpop.f32.mrb[0].mxu0
    %v5164 = vadd.f32 %v5060, %v5163
    %v5165 = vpop.f32.mrb[0].mxu0
    %5166 = vmatprep.mubr.bf16.mxu0 0
    %5167 = vmatmul.mubr.bf16.gmra.mrb[0].mxu0 %v5010
    %v5168 = vpop.f32.mrb[0].mxu0
    %v5169 = vadd.f32 %v5060, %v5168
    %v5170 = vpop.f32.mrb[0].mxu0
    %v5171 = vpop.f32.mrb[0].mxu0
    %v5172 = vadd.f32 %v5060, %v5171
    %v5173 = vpop.f32.mrb[0].mxu0
    %5174 = vmatprep.mubr.bf16.mxu0 0
    %5175 = vmatmul.mubr.bf16.gmra.mrb[0].mxu0 %v5011
    %v5176 = vpop.f32.mrb[0].mxu0
    %v5177 = vadd.f32 %v5060, %v5176
    %v5178 = vpop.f32.mrb[0].mxu0
    %v5179 = vpop.f32.mrb[0].mxu0
    %v5180 = vadd.f32 %v5060, %v5179
    %v5181 = vpop.f32.mrb[0].mxu0
    %5182 = vmatprep.mubr.bf16.mxu0 0
    %5183 = vmatmul.mubr.bf16.gmra.mrb[0].mxu0 %v5012
    %v5184 = vpop.f32.mrb[0].mxu0
    %v5185 = vadd.f32 %v5060, %v5184
    %v5186 = vpop.f32.mrb[0].mxu0
    %v5187 = vpop.f32.mrb[0].mxu0
    %v5188 = vadd.f32 %v5060, %v5187
    %v5189 = vpop.f32.mrb[0].mxu0
    %5190 = vmatprep.mubr.bf16.mxu0 0
    %5191 = vmatmul.mubr.bf16.gmra.mrb[0].mxu0 %v5013
    %v5192 = vpop.f32.mrb[0].mxu0
    %v5193 = vadd.f32 %v5060, %v5192
    %v5194 = vpop.f32.mrb[0].mxu0
    %v5195 = vpop.f32.mrb[0].mxu0
    %v5196 = vadd.f32 %v5060, %v5195
    %v5197 = vpop.f32.mrb[0].mxu0
    %5198 = vmatprep.mubr.bf16.mxu0 0
    %5199 = vmatmul.mubr.bf16.gmra.mrb[0].mxu0 %v5014
    %v5200 = vpop.f32.mrb[0].mxu0
    %v5201 = vadd.f32 %v5060, %v5200
    %v5202 = vpop.f32.mrb[0].mxu0
    %v5203 = vpop.f32.mrb[0].mxu0
    %v5204 = vadd.f32 %v5060, %v5203
    %v5205 = vpop.f32.mrb[0].mxu0
    %5206 = vmatprep.mubr.bf16.mxu0 0
    %5207 = vmatmul.mubr.bf16.gmra.mrb[0].mxu0 %v5015
    %v5208 = vpop.f32.mrb[0].mxu0
    %v5209 = vadd.f32 %v5060, %v5208
    %v5210 = vpop.f32.mrb[0].mxu0
    %v5211 = vpop.f32.mrb[0].mxu0
    %v5212 = vadd.f32 %v5060, %v5211
    %v5213 = vpop.f32.mrb[0].mxu0
    %5214 = vmatprep.mubr.bf16.mxu0 0
    %5215 = vmatmul.mubr.bf16.gmra.mrb[0].mxu0 %v5016
    %v5216 = vpop.f32.mrb[0].mxu0
    %v5217 = vadd.f32 %v5060, %v5216
    %v5218 = vpop.f32.mrb[0].mxu0
    %v5219 = vpop.f32.mrb[0].mxu0
    %v5220 = vadd.f32 %v5060, %v5219
    %v5221 = vpop.f32.mrb[0].mxu0
    %5222 = vmatprep.mubr.bf16.mxu0 0
    %5223 = vmatmul.mubr.bf16.gmra.mrb[0].mxu0 %v5017
    %v5224 = vpop.f32.mrb[0].mxu0
    %v5225 = vadd.f32 %v5060, %v5224
    %v5226 = vpop.f32.mrb[0].mxu0
    %v5227 = vpop.f32.mrb[0].mxu0
    %v5228 = vadd.f32 %v5060, %v5227
    %v5229 = vpop.f32.mrb[0].mxu0
    %5230 = vmatprep.mubr.bf16.mxu0 0
    %5231 = vmatmul.mubr.bf16.gmra.mrb[0].mxu0 %v5018
    %v5232 = vpop.f32.mrb[0].mxu0
    %v5233 = vadd.f32 %v5060, %v5232
    %v5234 = vpop.f32.mrb[0].mxu0
    %v5235 = vpop.f32.mrb[0].mxu0
    %v5236 = vadd.f32 %v5060, %v5235
    %v5237 = vpop.f32.mrb[0].mxu0
    %5238 = vmatprep.mubr.bf16.mxu0 0
    %5239 = vmatmul.mubr.bf16.gmra.mrb[0].mxu0 %v5019
    %v5240 = vpop.f32.mrb[0].mxu0
    %v5241 = vadd.f32 %v5060, %v5240
    %v5242 = vpop.f32.mrb[0].mxu0
    %v5243 = vpop.f32.mrb[0].mxu0
    %v5244 = vadd.f32 %v5060, %v5243
    %v5245 = vpop.f32.mrb[0].mxu0
    %5246 = vmatprep.mubr.bf16.mxu0 0
    %5247 = vmatmul.mubr.bf16.gmra.mrb[0].mxu0 %v5020
    %v5248 = vpop.f32.mrb[0].mxu0
    %v5249 = vadd.f32 %v5060, %v5248
    %v5250 = vpop.f32.mrb[0].mxu0
    %v5251 = vpop.f32.mrb[0].mxu0
    %v5252 = vadd.f32 %v5060, %v5251
    %v5253 = vpop.f32.mrb[0].mxu0
    %5254 = vmatprep.mubr.bf16.mxu0 0
    %5255 = vmatmul.mubr.bf16.gmra.mrb[0].mxu0 %v5021
    %v5256 = vpop.f32.mrb[0].mxu0
    %v5257 = vadd.f32 %v5060, %v5256
    %v5258 = vpop.f32.mrb[0].mxu0
    %v5259 = vpop.f32.mrb[0].mxu0
    %v5260 = vadd.f32 %v5060, %v5259
    %v5261 = vpop.f32.mrb[0].mxu0
    %5262 = vmatprep.mubr.bf16.mxu0 0
    %5263 = vmatmul.mubr.bf16.gmra.mrb[0].mxu0 %v5022
    %v5264 = vpop.f32.mrb[0].mxu0
    %v5265 = vadd.f32 %v5060, %v5264
    %v5266 = vpop.f32.mrb[0].mxu0
    %v5267 = vpop.f32.mrb[0].mxu0
    %v5268 = vadd.f32 %v5060, %v5267
    %v5269 = vpop.f32.mrb[0].mxu0
    %5270 = vmatprep.mubr.bf16.mxu0 0
    %5271 = vmatmul.mubr.bf16.gmra.mrb[0].mxu0 %v5023
    %v5272 = vpop.f32.mrb[0].mxu0
    %v5273 = vadd.f32 %v5060, %v5272
    %v5274 = vpop.f32.mrb[0].mxu0
    %v5275 = vpop.f32.mrb[0].mxu0
    %v5276 = vadd.f32 %v5060, %v5275
    %v5277 = vpop.f32.mrb[0].mxu0
    %5278 = vmatprep.mubr.bf16.mxu0 0
    %5279 = vmatmul.mubr.bf16.gmra.mrb[0].mxu0 %v5024
    %v5280 = vpop.f32.mrb[0].mxu0
    %v5281 = vadd.f32 %v5060, %v5280
    %v5282 = vpop.f32.mrb[0].mxu0
    %v5283 = vpop.f32.mrb[0].mxu0
    %v5284 = vadd.f32 %v5060, %v5283
    %v5285 = vpop.f32.mrb[0].mxu0
    %5286 = vmatprep.mubr.bf16.mxu0 0
    %5287 = vmatmul.mubr.bf16.gmra.mrb[0].mxu0 %v5025
    %v5288 = vpop.f32.mrb[0].mxu0
    %v5289 = vadd.f32 %v5060, %v5288
    %v5290 = vpop.f32.mrb[0].mxu0
    %v5291 = vpop.f32.mrb[0].mxu0
    %v5292 = vadd.f32 %v5060, %v5291
    %v5293 = vpop.f32.mrb[0].mxu0
    %5294 = vmatprep.mubr.bf16.mxu0 0
    %5295 = vmatmul.mubr.bf16.gmra.mrb[0].mxu0 %v5026
    %v5296 = vpop.f32.mrb[0].mxu0
    %v5297 = vadd.f32 %v5060, %v5296
    %v5298 = vpop.f32.mrb[0].mxu0
    %v5299 = vpop.f32.mrb[0].mxu0
    %v5300 = vadd.f32 %v5060, %v5299
    %v5301 = vpop.f32.mrb[0].mxu0
    %5302 = vmatprep.mubr.bf16.mxu0 0
    %5303 = vmatmul.mubr.bf16.gmra.mrb[0].mxu0 %v5027
    %v5304 = vpop.f32.mrb[0].mxu0
    %v5305 = vadd.f32 %v5060, %v5304
    %v5306 = vpop.f32.mrb[0].mxu0
    %v5307 = vpop.f32.mrb[0].mxu0
    %v5308 = vadd.f32 %v5060, %v5307
    %v5309 = vpop.f32.mrb[0].mxu0
    %5310 = vmatprep.mubr.bf16.mxu0 0
    %5311 = vmatmul.mubr.bf16.gmra.mrb[0].mxu0 %v5028
    %v5312 = vpop.f32.mrb[0].mxu0
    %v5313 = vadd.f32 %v5060, %v5312
    %v5314 = vpop.f32.mrb[0].mxu0
    %v5315 = vpop.f32.mrb[0].mxu0
    %v5316 = vadd.f32 %v5060, %v5315
    %v5317 = vpop.f32.mrb[0].mxu0
    %5318 = vmatprep.mubr.bf16.mxu0 0
    %5319 = vmatmul.mubr.bf16.gmra.mrb[0].mxu0 %v5029
    %v5320 = vpop.f32.mrb[0].mxu0
    %v5321 = vadd.f32 %v5060, %v5320
    %v5322 = vpop.f32.mrb[0].mxu0
    %v5323 = vpop.f32.mrb[0].mxu0
    %v5324 = vadd.f32 %v5060, %v5323
    %v5325 = vpop.f32.mrb[0].mxu0
    %5326 = vmatprep.mubr.bf16.mxu0 0
    %5327 = vmatmul.mubr.bf16.gmra.mrb[0].mxu0 %v5030
    %v5328 = vpop.f32.mrb[0].mxu0
    %v5329 = vadd.f32 %v5060, %v5328
    %v5330 = vpop.f32.mrb[0].mxu0
    %v5331 = vpop.f32.mrb[0].mxu0
    %v5332 = vadd.f32 %v5060, %v5331
    %v5333 = vpop.f32.mrb[0].mxu0
    %5334 = vmatprep.mubr.bf16.mxu0 0
    %5335 = vmatmul.mubr.bf16.gmra.mrb[0].mxu0 %v5031
    %v5336 = vpop.f32.mrb[0].mxu0
    %v5337 = vadd.f32 %v5060, %v5336
    %v5338 = vpop.f32.mrb[0].mxu0
    %v5339 = vpop.f32.mrb[0].mxu0
    %v5340 = vadd.f32 %v5060, %v5339
    %v5341 = vpop.f32.mrb[0].mxu0
    %5342 = vmatprep.mubr.bf16.mxu0 0
    %5343 = vmatmul.mubr.bf16.gmra.mrb[0].mxu0 %v5032
    %v5344 = vpop.f32.mrb[0].mxu0
    %v5345 = vadd.f32 %v5060, %v5344
    %v5346 = vpop.f32.mrb[0].mxu0
    %v5347 = vpop.f32.mrb[0].mxu0
    %v5348 = vadd.f32 %v5060, %v5347
    %v5349 = vpop.f32.mrb[0].mxu0
    %5350 = vmatprep.mubr.bf16.mxu0 0
    %5351 = vmatmul.mubr.bf16.gmra.mrb[0].mxu0 %v5033
    %v5352 = vpop.f32.mrb[0].mxu0
    %v5353 = vadd.f32 %v5060, %v5352
    %v5354 = vpop.f32.mrb[0].mxu0
    %v5355 = vpop.f32.mrb[0].mxu0
    %v5356 = vadd.f32 %v5060, %v5355
    %v5357 = vpop.f32.mrb[0].mxu0
    %5358 = vmatprep.mubr.bf16.mxu0 0
    %5359 = vmatmul.mubr.bf16.gmra.mrb[0].mxu0 %v5034
    %v5360 = vpop.f32.mrb[0].mxu0
    %v5361 = vadd.f32 %v5060, %v5360
    %v5362 = vpop.f32.mrb[0].mxu0
    %v5363 = vpop.f32.mrb[0].mxu0
    %v5364 = vadd.f32 %v5060, %v5363
    %v5365 = vpop.f32.mrb[0].mxu0
    %5366 = vmatprep.mubr.bf16.mxu0 0
    %5367 = vmatmul.mubr.bf16.gmra.mrb[0].mxu0 %v5035
    %v5368 = vpop.f32.mrb[0].mxu0
    %v5369 = vadd.f32 %v5060, %v5368
    %v5370 = vpop.f32.mrb[0].mxu0
    %v5371 = vpop.f32.mrb[0].mxu0
    %v5372 = vadd.f32 %v5060, %v5371
    %v5373 = vpop.f32.mrb[0].mxu0
    %5374 = vmatprep.mubr.bf16.mxu0 0
    %5375 = vmatmul.mubr.bf16.gmra.mrb[0].mxu0 %v5036
    %v5376 = vpop.f32.mrb[0].mxu0
    %v5377 = vadd.f32 %v5060, %v5376
    %v5378 = vpop.f32.mrb[0].mxu0
    %v5379 = vpop.f32.mrb[0].mxu0
    %v5380 = vadd.f32 %v5060, %v5379
    %v5381 = vpop.f32.mrb[0].mxu0
    %5382 = vmatprep.mubr.bf16.mxu0 0
    %5383 = vmatmul.mubr.bf16.gmra.mrb[0].mxu0 %v5037
    %v5384 = vpop.f32.mrb[0].mxu0
    %v5385 = vadd.f32 %v5060, %v5384
    %v5386 = vpop.f32.mrb[0].mxu0
    %v5387 = vpop.f32.mrb[0].mxu0
    %v5388 = vadd.f32 %v5060, %v5387
    %v5389 = vpop.f32.mrb[0].mxu0
    %5390 = vmatprep.mubr.bf16.mxu0 0
    %5391 = vmatmul.mubr.bf16.gmra.mrb[0].mxu0 %v5038
    %v5392 = vpop.f32.mrb[0].mxu0
    %v5393 = vadd.f32 %v5060, %v5392
    %v5394 = vpop.f32.mrb[0].mxu0
    %v5395 = vpop.f32.mrb[0].mxu0
    %v5396 = vadd.f32 %v5060, %v5395
    %v5397 = vpop.f32.mrb[0].mxu0
    %5398 = vdwg.mxu0
    %v5399 = vmax.f32 %v5145, 0.0
    %v5400 = vmax.f32 %v5148, 0.0
    %v5401 = vmax.f32 %v5153, 0.0
    %v5402 = vmax.f32 %v5156, 0.0
    %v5403 = vmax.f32 %v5161, 0.0
    %v5404 = vmax.f32 %v5164, 0.0
    %v5405 = vmax.f32 %v5169, 0.0
    %v5406 = vmax.f32 %v5172, 0.0
    %v5407 = vmax.f32 %v5177, 0.0
    %v5408 = vmax.f32 %v5180, 0.0
    %v5409 = vmax.f32 %v5185, 0.0
    %v5410 = vmax.f32 %v5188, 0.0
    %v5411 = vmax.f32 %v5193, 0.0
    %v5412 = vmax.f32 %v5196, 0.0
    %v5413 = vmax.f32 %v5201, 0.0
    %v5414 = vmax.f32 %v5204, 0.0
    %v5415 = vmax.f32 %v5209, 0.0
    %v5416 = vmax.f32 %v5212, 0.0
    %v5417 = vmax.f32 %v5217, 0.0
    %v5418 = vmax.f32 %v5220, 0.0
    %v5419 = vmax.f32 %v5225, 0.0
    %v5420 = vmax.f32 %v5228, 0.0
    %v5421 = vmax.f32 %v5233, 0.0
    %v5422 = vmax.f32 %v5236, 0.0
    %v5423 = vmax.f32 %v5241, 0.0
    %v5424 = vmax.f32 %v5244, 0.0
    %v5425 = vmax.f32 %v5249, 0.0
    %v5426 = vmax.f32 %v5252, 0.0
    %v5427 = vmax.f32 %v5257, 0.0
    %v5428 = vmax.f32 %v5260, 0.0
    %v5429 = vmax.f32 %v5265, 0.0
    %v5430 = vmax.f32 %v5268, 0.0
    %v5431 = vmax.f32 %v5273, 0.0
    %v5432 = vmax.f32 %v5276, 0.0
    %v5433 = vmax.f32 %v5281, 0.0
    %v5434 = vmax.f32 %v5284, 0.0
    %v5435 = vmax.f32 %v5289, 0.0
    %v5436 = vmax.f32 %v5292, 0.0
    %v5437 = vmax.f32 %v5297, 0.0
    %v5438 = vmax.f32 %v5300, 0.0
    %v5439 = vmax.f32 %v5305, 0.0
    %v5440 = vmax.f32 %v5308, 0.0
    %v5441 = vmax.f32 %v5313, 0.0
    %v5442 = vmax.f32 %v5316, 0.0
    %v5443 = vmax.f32 %v5321, 0.0
    %v5444 = vmax.f32 %v5324, 0.0
    %v5445 = vmax.f32 %v5329, 0.0
    %v5446 = vmax.f32 %v5332, 0.0
    %v5447 = vmax.f32 %v5337, 0.0
    %v5448 = vmax.f32 %v5340, 0.0
    %v5449 = vmax.f32 %v5345, 0.0
    %v5450 = vmax.f32 %v5348, 0.0
    %v5451 = vmax.f32 %v5353, 0.0
    %v5452 = vmax.f32 %v5356, 0.0
    %v5453 = vmax.f32 %v5361, 0.0
    %v5454 = vmax.f32 %v5364, 0.0
    %v5455 = vmax.f32 %v5369, 0.0
    %v5456 = vmax.f32 %v5372, 0.0
    %v5457 = vmax.f32 %v5377, 0.0
    %v5458 = vmax.f32 %v5380, 0.0
    %v5459 = vmax.f32 %v5385, 0.0
    %v5460 = vmax.f32 %v5388, 0.0
    %v5461 = vmax.f32 %v5393, 0.0
    %v5462 = vmax.f32 %v5396, 0.0
    %v5463 = vpack.c.bf16 %v5400, %v5399
    %v5464 = vpack.c.bf16 %v5402, %v5401
    %v5465 = vpack.c.bf16 %v5404, %v5403
    %v5466 = vpack.c.bf16 %v5406, %v5405
    %v5467 = vpack.c.bf16 %v5408, %v5407
    %v5468 = vpack.c.bf16 %v5410, %v5409
    %v5469 = vpack.c.bf16 %v5412, %v5411
    %v5470 = vpack.c.bf16 %v5414, %v5413
    %v5471 = vpack.c.bf16 %v5416, %v5415
    %v5472 = vpack.c.bf16 %v5418, %v5417
    %v5473 = vpack.c.bf16 %v5420, %v5419
    %v5474 = vpack.c.bf16 %v5422, %v5421
    %v5475 = vpack.c.bf16 %v5424, %v5423
    %v5476 = vpack.c.bf16 %v5426, %v5425
    %v5477 = vpack.c.bf16 %v5428, %v5427
    %v5478 = vpack.c.bf16 %v5430, %v5429
    %v5479 = vpack.c.bf16 %v5432, %v5431
    %v5480 = vpack.c.bf16 %v5434, %v5433
    %v5481 = vpack.c.bf16 %v5436, %v5435
    %v5482 = vpack.c.bf16 %v5438, %v5437
    %v5483 = vpack.c.bf16 %v5440, %v5439
    %v5484 = vpack.c.bf16 %v5442, %v5441
    %v5485 = vpack.c.bf16 %v5444, %v5443
    %v5486 = vpack.c.bf16 %v5446, %v5445
    %v5487 = vpack.c.bf16 %v5448, %v5447
    %v5488 = vpack.c.bf16 %v5450, %v5449
    %v5489 = vpack.c.bf16 %v5452, %v5451
    %v5490 = vpack.c.bf16 %v5454, %v5453
    %v5491 = vpack.c.bf16 %v5456, %v5455
    %v5492 = vpack.c.bf16 %v5458, %v5457
    %v5493 = vpack.c.bf16 %v5460, %v5459
    %v5494 = vpack.c.bf16 %v5462, %v5461
    %v5527 = vunpack.c.l.b16 %v5463
    %v5528 = vunpack.c.h.b16 %v5463
    %v5529 = vunpack.c.l.b16 %v5464
    %v5530 = vunpack.c.h.b16 %v5464
    %v5531 = vunpack.c.l.b16 %v5465
    %v5532 = vunpack.c.h.b16 %v5465
    %v5533 = vunpack.c.l.b16 %v5466
    %v5534 = vunpack.c.h.b16 %v5466
    %v5535 = vunpack.c.l.b16 %v5467
    %v5536 = vunpack.c.h.b16 %v5467
    %v5537 = vunpack.c.l.b16 %v5468
    %v5538 = vunpack.c.h.b16 %v5468
    %v5539 = vunpack.c.l.b16 %v5469
    %v5540 = vunpack.c.h.b16 %v5469
    %v5541 = vunpack.c.l.b16 %v5470
    %v5542 = vunpack.c.h.b16 %v5470
    %v5543 = vunpack.c.l.b16 %v5471
    %v5544 = vunpack.c.h.b16 %v5471
    %v5545 = vunpack.c.l.b16 %v5472
    %v5546 = vunpack.c.h.b16 %v5472
    %v5547 = vunpack.c.l.b16 %v5473
    %v5548 = vunpack.c.h.b16 %v5473
    %v5549 = vunpack.c.l.b16 %v5474
    %v5550 = vunpack.c.h.b16 %v5474
    %v5551 = vunpack.c.l.b16 %v5475
    %v5552 = vunpack.c.h.b16 %v5475
    %v5553 = vunpack.c.l.b16 %v5476
    %v5554 = vunpack.c.h.b16 %v5476
    %v5555 = vunpack.c.l.b16 %v5477
    %v5556 = vunpack.c.h.b16 %v5477
    %v5557 = vunpack.c.l.b16 %v5478
    %v5558 = vunpack.c.h.b16 %v5478
    %v5559 = vunpack.c.l.b16 %v5479
    %v5560 = vunpack.c.h.b16 %v5479
    %v5561 = vunpack.c.l.b16 %v5480
    %v5562 = vunpack.c.h.b16 %v5480
    %v5563 = vunpack.c.l.b16 %v5481
    %v5564 = vunpack.c.h.b16 %v5481
    %v5565 = vunpack.c.l.b16 %v5482
    %v5566 = vunpack.c.h.b16 %v5482
    %v5567 = vunpack.c.l.b16 %v5483
    %v5568 = vunpack.c.h.b16 %v5483
    %v5569 = vunpack.c.l.b16 %v5484
    %v5570 = vunpack.c.h.b16 %v5484
    %v5571 = vunpack.c.l.b16 %v5485
    %v5572 = vunpack.c.h.b16 %v5485
    %v5573 = vunpack.c.l.b16 %v5486
    %v5574 = vunpack.c.h.b16 %v5486
    %v5575 = vunpack.c.l.b16 %v5487
    %v5576 = vunpack.c.h.b16 %v5487
    %v5577 = vunpack.c.l.b16 %v5488
    %v5578 = vunpack.c.h.b16 %v5488
    %v5579 = vunpack.c.l.b16 %v5489
    %v5580 = vunpack.c.h.b16 %v5489
    %v5581 = vunpack.c.l.b16 %v5490
    %v5582 = vunpack.c.h.b16 %v5490
    %v5583 = vunpack.c.l.b16 %v5491
    %v5584 = vunpack.c.h.b16 %v5491
    %v5585 = vunpack.c.l.b16 %v5492
    %v5586 = vunpack.c.h.b16 %v5492
    %v5587 = vunpack.c.l.b16 %v5493
    %v5588 = vunpack.c.h.b16 %v5493
    %v5589 = vunpack.c.l.b16 %v5494
    %v5590 = vunpack.c.h.b16 %v5494
    %v5591 = vpack.c.b16 %v5527, %v5527
    %v5592 = vpack.c.b16 %v5528, %v5528
    %v5593 = vpack.c.b16 %v5529, %v5529
    %v5594 = vpack.c.b16 %v5530, %v5530
    %v5595 = vpack.c.b16 %v5531, %v5531
    %v5596 = vpack.c.b16 %v5532, %v5532
    %v5597 = vpack.c.b16 %v5533, %v5533
    %v5598 = vpack.c.b16 %v5534, %v5534
    %v5599 = vpack.c.b16 %v5535, %v5535
    %v5600 = vpack.c.b16 %v5536, %v5536
    %v5601 = vpack.c.b16 %v5537, %v5537
    %v5602 = vpack.c.b16 %v5538, %v5538
    %v5603 = vpack.c.b16 %v5539, %v5539
    %v5604 = vpack.c.b16 %v5540, %v5540
    %v5605 = vpack.c.b16 %v5541, %v5541
    %v5606 = vpack.c.b16 %v5542, %v5542
    %v5607 = vpack.c.b16 %v5543, %v5543
    %v5608 = vpack.c.b16 %v5544, %v5544
    %v5609 = vpack.c.b16 %v5545, %v5545
    %v5610 = vpack.c.b16 %v5546, %v5546
    %v5611 = vpack.c.b16 %v5547, %v5547
    %v5612 = vpack.c.b16 %v5548, %v5548
    %v5613 = vpack.c.b16 %v5549, %v5549
    %v5614 = vpack.c.b16 %v5550, %v5550
    %v5615 = vpack.c.b16 %v5551, %v5551
    %v5616 = vpack.c.b16 %v5552, %v5552
    %v5617 = vpack.c.b16 %v5553, %v5553
    %v5618 = vpack.c.b16 %v5554, %v5554
    %v5619 = vpack.c.b16 %v5555, %v5555
    %v5620 = vpack.c.b16 %v5556, %v5556
    %v5621 = vpack.c.b16 %v5557, %v5557
    %v5622 = vpack.c.b16 %v5558, %v5558
    %v5623 = vpack.c.b16 %v5559, %v5559
    %v5624 = vpack.c.b16 %v5560, %v5560
    %v5625 = vpack.c.b16 %v5561, %v5561
    %v5626 = vpack.c.b16 %v5562, %v5562
    %v5627 = vpack.c.b16 %v5563, %v5563
    %v5628 = vpack.c.b16 %v5564, %v5564
    %v5629 = vpack.c.b16 %v5565, %v5565
    %v5630 = vpack.c.b16 %v5566, %v5566
    %v5631 = vpack.c.b16 %v5567, %v5567
    %v5632 = vpack.c.b16 %v5568, %v5568
    %v5633 = vpack.c.b16 %v5569, %v5569
    %v5634 = vpack.c.b16 %v5570, %v5570
    %v5635 = vpack.c.b16 %v5571, %v5571
    %v5636 = vpack.c.b16 %v5572, %v5572
    %v5637 = vpack.c.b16 %v5573, %v5573
    %v5638 = vpack.c.b16 %v5574, %v5574
    %v5639 = vpack.c.b16 %v5575, %v5575
    %v5640 = vpack.c.b16 %v5576, %v5576
    %v5641 = vpack.c.b16 %v5577, %v5577
    %v5642 = vpack.c.b16 %v5578, %v5578
    %v5643 = vpack.c.b16 %v5579, %v5579
    %v5644 = vpack.c.b16 %v5580, %v5580
    %v5645 = vpack.c.b16 %v5581, %v5581
    %v5646 = vpack.c.b16 %v5582, %v5582
    %v5647 = vpack.c.b16 %v5583, %v5583
    %v5648 = vpack.c.b16 %v5584, %v5584
    %v5649 = vpack.c.b16 %v5585, %v5585
    %v5650 = vpack.c.b16 %v5586, %v5586
    %v5651 = vpack.c.b16 %v5587, %v5587
    %v5652 = vpack.c.b16 %v5588, %v5588
    %v5653 = vpack.c.b16 %v5589, %v5589
    %v5654 = vpack.c.b16 %v5590, %v5590
    %5719 = vst [vmem:[%s11] sm:$0xf] %v5591
    %5720 = vst [vmem:[%s11 + $0x4] sm:$0xf] %v5592
    %5721 = vst [vmem:[%s11 + $0x8] sm:$0xf] %v5593
    %5722 = vst [vmem:[%s11 + $0xc] sm:$0xf] %v5594
    %5723 = vst [vmem:[%s11 + $0x10] sm:$0xf] %v5595
    %5724 = vst [vmem:[%s11 + $0x14] sm:$0xf] %v5596
    %5725 = vst [vmem:[%s11 + $0x18] sm:$0xf] %v5597
    %5726 = vst [vmem:[%s11 + $0x1c] sm:$0xf] %v5598
    %5727 = vst [vmem:[%s11 + $0x20] sm:$0xf] %v5599
    %5728 = vst [vmem:[%s11 + $0x24] sm:$0xf] %v5600
    %5729 = vst [vmem:[%s11 + $0x28] sm:$0xf] %v5601
    %5730 = vst [vmem:[%s11 + $0x2c] sm:$0xf] %v5602
    %5731 = vst [vmem:[%s11 + $0x30] sm:$0xf] %v5603
    %5732 = vst [vmem:[%s11 + $0x34] sm:$0xf] %v5604
    %5733 = vst [vmem:[%s11 + $0x38] sm:$0xf] %v5605
    %5734 = vst [vmem:[%s11 + $0x3c] sm:$0xf] %v5606
    %5735 = vst [vmem:[%s11 + $0x40] sm:$0xf] %v5607
    %5736 = vst [vmem:[%s11 + $0x44] sm:$0xf] %v5608
    %5737 = vst [vmem:[%s11 + $0x48] sm:$0xf] %v5609
    %5738 = vst [vmem:[%s11 + $0x4c] sm:$0xf] %v5610
    %5739 = vst [vmem:[%s11 + $0x50] sm:$0xf] %v5611
    %5740 = vst [vmem:[%s11 + $0x54] sm:$0xf] %v5612
    %5741 = vst [vmem:[%s11 + $0x58] sm:$0xf] %v5613
    %5742 = vst [vmem:[%s11 + $0x5c] sm:$0xf] %v5614
    %5743 = vst [vmem:[%s11 + $0x60] sm:$0xf] %v5615
    %5744 = vst [vmem:[%s11 + $0x64] sm:$0xf] %v5616
    %5745 = vst [vmem:[%s11 + $0x68] sm:$0xf] %v5617
    %5746 = vst [vmem:[%s11 + $0x6c] sm:$0xf] %v5618
    %5747 = vst [vmem:[%s11 + $0x70] sm:$0xf] %v5619
    %5748 = vst [vmem:[%s11 + $0x74] sm:$0xf] %v5620
    %5749 = vst [vmem:[%s11 + $0x78] sm:$0xf] %v5621
    %5750 = vst [vmem:[%s11 + $0x7c] sm:$0xf] %v5622
    %5751 = vst [vmem:[%s11 + $0x80] sm:$0xf] %v5623
    %5752 = vst [vmem:[%s11 + $0x84] sm:$0xf] %v5624
    %5753 = vst [vmem:[%s11 + $0x88] sm:$0xf] %v5625
    %5754 = vst [vmem:[%s11 + $0x8c] sm:$0xf] %v5626
    %5755 = vst [vmem:[%s11 + $0x90] sm:$0xf] %v5627
    %5756 = vst [vmem:[%s11 + $0x94] sm:$0xf] %v5628
    %5757 = vst [vmem:[%s11 + $0x98] sm:$0xf] %v5629
    %5758 = vst [vmem:[%s11 + $0x9c] sm:$0xf] %v5630
    %5759 = vst [vmem:[%s11 + $0xa0] sm:$0xf] %v5631
    %5760 = vst [vmem:[%s11 + $0xa4] sm:$0xf] %v5632
    %5761 = vst [vmem:[%s11 + $0xa8] sm:$0xf] %v5633
    %5762 = vst [vmem:[%s11 + $0xac] sm:$0xf] %v5634
    %5763 = vst [vmem:[%s11 + $0xb0] sm:$0xf] %v5635
    %5764 = vst [vmem:[%s11 + $0xb4] sm:$0xf] %v5636
    %5765 = vst [vmem:[%s11 + $0xb8] sm:$0xf] %v5637
    %5766 = vst [vmem:[%s11 + $0xbc] sm:$0xf] %v5638
    %5767 = vst [vmem:[%s11 + $0xc0] sm:$0xf] %v5639
    %5768 = vst [vmem:[%s11 + $0xc4] sm:$0xf] %v5640
    %5769 = vst [vmem:[%s11 + $0xc8] sm:$0xf] %v5641
    %5770 = vst [vmem:[%s11 + $0xcc] sm:$0xf] %v5642
    %5771 = vst [vmem:[%s11 + $0xd0] sm:$0xf] %v5643
    %5772 = vst [vmem:[%s11 + $0xd4] sm:$0xf] %v5644
    %5773 = vst [vmem:[%s11 + $0xd8] sm:$0xf] %v5645
    %5774 = vst [vmem:[%s11 + $0xdc] sm:$0xf] %v5646
    %5775 = vst [vmem:[%s11 + $0xe0] sm:$0xf] %v5647
    %5776 = vst [vmem:[%s11 + $0xe4] sm:$0xf] %v5648
    %5777 = vst [vmem:[%s11 + $0xe8] sm:$0xf] %v5649
    %5778 = vst [vmem:[%s11 + $0xec] sm:$0xf] %v5650
    %5779 = vst [vmem:[%s11 + $0xf0] sm:$0xf] %v5651
    %5780 = vst [vmem:[%s11 + $0xf4] sm:$0xf] %v5652
    %5781 = vst [vmem:[%s11 + $0xf8] sm:$0xf] %v5653
    %5782 = vst [vmem:[%s11 + $0xfc] sm:$0xf] %v5654
    // Predicated region
    $region86: #{generator_forward.1} parent=1 // pred_check
      _
    $region87: #{generator_forward.1} parent=1 // pred_check_branch
      %5784 = sbr.rel (0) target = $region89
    $region88: #{generator_forward.1} parent=1 // pred_region
      _
    $region89: #{generator_forward.1} parent=1 // pred_fallthru
      _
    // Predicated region
    $region90: #{generator_forward.1} parent=1 // pred_check
      _
    $region91: #{generator_forward.1} parent=1 // pred_check_branch
      %5786 = sbr.rel (0) target = $region93
    $region92: #{generator_forward.1} parent=1 // pred_region
      _
    $region93: #{generator_forward.1} parent=1 // pred_fallthru
      _
    %5787 = vsyncpa [#allocation6], 1
    %5788 = vsyncpa [#allocation8], 1
    %5789 = vsyncpa [#allocation11], 1
    %5790 = vsyncpa [#allocation14], 1
    %5791 = vsyncpa [#allocation17], 1
    %5792 = vsyncpa [#allocation20], 1

</llo_original>
